<compile_context>
chip_gen: v7x
topology: tpu7x:2x2x1
jax: 0.10.0
libtpu: 0.0.40
codegen_flags: <defaults>
</compile_context>

<pallas_src>
import functools

import jax
import jax.numpy as jnp
from jax import lax
from jax.experimental import pallas as pl
from jax.experimental.pallas import tpu as pltpu

D_IN, D_H1, D_H2, D_OUT = 512, 512, 256, 128
BN_EPS = 1e-5
NORM_EPS = 1e-12  # F.normalize clamp_min eps


def _head_kernel(x1_ref, x2_ref,
                 w1_ref, t1_ref,
                 w2_ref, t2_ref,
                 w3_ref, t3_ref,
                 o1_ref, o2_ref,
                 *, bf16_epilogue):
    """One batch tile of the `additional` head + L2 normalize, both branches.

    x*_ref : (TB, 512)  f32 facenet-embedding tiles (cast to bf16 in-kernel)
    w*     : (in, out)  bf16 linear weights with eval-mode BN scale folded in
    t*     : (1, out)   f32 folded (Linear bias + BatchNorm1d) shift
    o*_ref : (TB, 128)  f32 L2-normalized output tiles
    """
    if bf16_epilogue:
        t1 = t1_ref[...].astype(jnp.bfloat16)
        t2 = t2_ref[...].astype(jnp.bfloat16)
    else:
        t1 = t1_ref[...]
        t2 = t2_ref[...]
    t3 = t3_ref[...]

    def branch(x_ref, o_ref):
        x = x_ref[...].astype(jnp.bfloat16)

        # Linear(512,512) + BN + ReLU   (Dropout = identity in eval mode)
        h1 = jnp.dot(x, w1_ref[...], preferred_element_type=jnp.float32)
        if bf16_epilogue:
            h1 = jnp.maximum(h1.astype(jnp.bfloat16) + t1, 0)
        else:
            h1 = jnp.maximum(h1 + t1, 0.0).astype(jnp.bfloat16)

        # Linear(512,256) + BN + ReLU
        h2 = jnp.dot(h1, w2_ref[...], preferred_element_type=jnp.float32)
        if bf16_epilogue:
            h2 = jnp.maximum(h2.astype(jnp.bfloat16) + t2, 0)
        else:
            h2 = jnp.maximum(h2 + t2, 0.0).astype(jnp.bfloat16)

        # Linear(256,128) + BN   (kept in f32)
        h3 = jnp.dot(h2, w3_ref[...], preferred_element_type=jnp.float32) + t3

        # F.normalize(p=2, dim=1): x / max(||x||_2, eps) == x * rsqrt(max(ss, eps^2))
        sumsq = jnp.sum(h3 * h3, axis=-1, keepdims=True)
        inv = lax.rsqrt(jnp.maximum(sumsq, NORM_EPS * NORM_EPS))
        o_ref[...] = (h3 * inv).astype(o_ref.dtype)

    branch(x1_ref, o1_ref)
    branch(x2_ref, o2_ref)


def _fold_linear_bn(w, bias, gamma, beta, running_mean, running_var):
    """Fold eval-mode BatchNorm1d into the preceding Linear.

    Returns (w_folded [in,out] bf16, shift [1,out] f32) such that
      BN(x @ w + bias) == x @ w_folded + shift  (up to bf16 rounding of w).
    """
    scale = gamma / jnp.sqrt(running_var + BN_EPS)          # [out]
    w_folded = (w * scale[None, :]).astype(jnp.bfloat16)    # [in, out]
    shift = (scale * (bias - running_mean) + beta)[None, :].astype(jnp.float32)
    return w_folded, shift


def _device_kind():
    try:
        return jax.devices()[0].device_kind.lower()
    except Exception:
        return ""


def _num_tensorcores():
    """Best-effort TensorCores per chip: v7x has 2, v5e/v6e have 1."""
    return 2 if "v7" in _device_kind() else 1


def _has_bf16_valu():
    """bf16 VALU exists on v6e/v7x; v5e (and unknown) use the f32 epilogue."""
    kind = _device_kind()
    return ("v6" in kind) or ("v7" in kind)


def _choose_num_tiles(batch_rows, num_cores):
    """Fewest possible grid steps.

    One tile on single-TC chips (extra grid steps are a serial ~0.35us loop),
    `num_cores` parallel tiles on multi-TC chips (v7x megacore).  Split only
    when the rows divide into 16-aligned blocks so no wrapper-side padding is
    ever needed; very large batches split further to stay comfortably in VMEM.
    """
    n = max(1, num_cores)
    if n > 1 and batch_rows % (16 * n) != 0:
        n = 1
    while batch_rows // n > 2048 and batch_rows % (16 * n * 2) == 0:
        n *= 2
    return n


def siamese_forward(input1, input2, params):
    """SiameseNetwork.forward on precomputed facenet embeddings [B, 512] x2.

    Both branches share weights and are processed by a single pallas_call
    (weights loaded once, one launch); no concat / pad / cast in the wrapper.
    """
    B, d = input1.shape
    assert d == D_IN and input2.shape == input1.shape
    (w1, t1), (w2, t2), (w3, t3) = params

    n_tiles = _choose_num_tiles(B, _num_tensorcores())
    tile_b = B // n_tiles

    def weight_spec(shape):
        # Constant block: stays resident in VMEM across the (<=2-step) grid.
        return pl.BlockSpec(shape, lambda i: (0, 0))

    x_spec = pl.BlockSpec((tile_b, D_IN), lambda i: (i, 0))
    o_spec = pl.BlockSpec((tile_b, D_OUT), lambda i: (i, 0))

    # Advisory cost so XLA schedules/overlaps this tiny kernel sensibly.
    mm_flops = 2 * 2 * B * (D_IN * D_H1 + D_H1 * D_H2 + D_H2 * D_OUT)
    bytes_accessed = (2 * B * (D_IN + D_OUT) * 4                       # x, out (f32)
                      + 2 * (D_IN * D_H1 + D_H1 * D_H2 + D_H2 * D_OUT)  # bf16 weights
                      + 4 * (D_H1 + D_H2 + D_OUT))                      # f32 shifts
    cost = pl.CostEstimate(flops=mm_flops, transcendentals=2 * B,
                           bytes_accessed=bytes_accessed)

    kernel = functools.partial(_head_kernel, bf16_epilogue=_has_bf16_valu())

    out1, out2 = pl.pallas_call(
        kernel,
        out_shape=(jax.ShapeDtypeStruct((B, D_OUT), jnp.float32),
                   jax.ShapeDtypeStruct((B, D_OUT), jnp.float32)),
        grid=(n_tiles,),
        in_specs=[
            x_spec, x_spec,
            weight_spec((D_IN, D_H1)), weight_spec((1, D_H1)),
            weight_spec((D_H1, D_H2)), weight_spec((1, D_H2)),
            weight_spec((D_H2, D_OUT)), weight_spec((1, D_OUT)),
        ],
        out_specs=(o_spec, o_spec),
        compiler_params=pltpu.CompilerParams(
            dimension_semantics=("parallel",)),
        cost_estimate=cost,
    )(input1, input2, w1, t1, w2, t2, w3, t3)
    return out1, out2


def init_params(key):
    """Deterministic init of Linear + BatchNorm1d parameters (eval-mode stats),
    pre-folded for the kernel."""
    params = []
    dims = [(D_IN, D_H1), (D_H1, D_H2), (D_H2, D_OUT)]
    for (din, dout) in dims:
        key, kw, kb = jax.random.split(key, 3)
        bound = 1.0 / jnp.sqrt(jnp.float32(din))
        w = jax.random.uniform(kw, (din, dout), jnp.float32, -bound, bound)
        b = jax.random.uniform(kb, (dout,), jnp.float32, -bound, bound)
        gamma = jnp.ones((dout,), jnp.float32)
        beta = jnp.zeros((dout,), jnp.float32)
        running_mean = jnp.zeros((dout,), jnp.float32)
        running_var = jnp.ones((dout,), jnp.float32)
        params.append(_fold_linear_bn(w, b, gamma, beta, running_mean, running_var))
    return params


if __name__ == "__main__":
    key = jax.random.PRNGKey(0)
    kp, k1, k2 = jax.random.split(key, 3)
    params = init_params(kp)

    B = 64  # per-branch batch
    # input1/input2: facenet (InceptionResnetV1) 512-d embeddings per image
    input1 = jax.random.normal(k1, (B, D_IN), jnp.float32)
    input2 = jax.random.normal(k2, (B, D_IN), jnp.float32)

    out1, out2 = siamese_forward(input1, input2, params)
    jax.block_until_ready((out1, out2))

    # sanity: outputs are unit-norm rows of shape [B, 128]
    assert out1.shape == (B, D_OUT) and out2.shape == (B, D_OUT)
    norms = jnp.linalg.norm(out1, axis=1)
    assert bool(jnp.all(jnp.abs(norms - 1.0) < 1e-3))

    print("KERNEL_OK")
</pallas_src>

<mosaic_0001>
module attributes {stable_mosaic.version = 11 : i64} {
  func.func @_head_kernel(%arg0: i32, %arg1: memref<64x512xf32, #tpu.memory_space<vmem>>, %arg2: memref<64x512xf32, #tpu.memory_space<vmem>>, %arg3: memref<512x512xbf16, #tpu.memory_space<vmem>>, %arg4: memref<1x512xf32, #tpu.memory_space<vmem>>, %arg5: memref<512x256xbf16, #tpu.memory_space<vmem>>, %arg6: memref<1x256xf32, #tpu.memory_space<vmem>>, %arg7: memref<256x128xbf16, #tpu.memory_space<vmem>>, %arg8: memref<1x128xf32, #tpu.memory_space<vmem>>, %arg9: memref<64x128xf32, #tpu.memory_space<vmem>>, %arg10: memref<64x128xf32, #tpu.memory_space<vmem>>) attributes {dimension_semantics = [#tpu.dimension_semantics<parallel>], iteration_bounds = array<i64: 1>, scalar_prefetch = 0 : i64, scratch_operands = 0 : i64, tpu.core_type = #tpu.core_type<tc>, window_params = [{transform_indices = @transform_0, window_bounds = array<i64: 64, 512>}, {transform_indices = @transform_1, window_bounds = array<i64: 64, 512>}, {pipeline_mode = #tpu.pipeline_mode<synchronous>, transform_indices = @transform_2, window_bounds = array<i64: 512, 512>}, {pipeline_mode = #tpu.pipeline_mode<synchronous>, transform_indices = @transform_3, window_bounds = array<i64: 1, 512>}, {pipeline_mode = #tpu.pipeline_mode<synchronous>, transform_indices = @transform_4, window_bounds = array<i64: 512, 256>}, {pipeline_mode = #tpu.pipeline_mode<synchronous>, transform_indices = @transform_5, window_bounds = array<i64: 1, 256>}, {pipeline_mode = #tpu.pipeline_mode<synchronous>, transform_indices = @transform_6, window_bounds = array<i64: 256, 128>}, {pipeline_mode = #tpu.pipeline_mode<synchronous>, transform_indices = @transform_7, window_bounds = array<i64: 1, 128>}, {transform_indices = @transform_8, window_bounds = array<i64: 64, 128>}, {transform_indices = @transform_9, window_bounds = array<i64: 64, 128>}]} {
    %c0 = arith.constant 0 : index
    %c0_0 = arith.constant 0 : index
    %0 = vector.load %arg4[%c0, %c0_0] : memref<1x512xf32, #tpu.memory_space<vmem>>, vector<1x512xf32>
    %c0_1 = arith.constant 0 : index
    %c0_2 = arith.constant 0 : index
    %1 = vector.load %arg6[%c0_1, %c0_2] : memref<1x256xf32, #tpu.memory_space<vmem>>, vector<1x256xf32>
    %c0_3 = arith.constant 0 : index
    %c0_4 = arith.constant 0 : index
    %2 = vector.load %arg8[%c0_3, %c0_4] : memref<1x128xf32, #tpu.memory_space<vmem>>, vector<1x128xf32>
    %c0_5 = arith.constant 0 : index
    %c0_6 = arith.constant 0 : index
    %3 = vector.load %arg1[%c0_5, %c0_6] : memref<64x512xf32, #tpu.memory_space<vmem>>, vector<64x512xf32>
    %4 = arith.truncf %3 : vector<64x512xf32> to vector<64x512xbf16>
    %c0_7 = arith.constant 0 : index
    %c0_8 = arith.constant 0 : index
    %5 = vector.load %arg3[%c0_7, %c0_8] : memref<512x512xbf16, #tpu.memory_space<vmem>>, vector<512x512xbf16>
    %cst = arith.constant dense<0.000000e+00> : vector<64x512xf32>
    %6 = tpu.matmul %4, %5, %cst {dimension_numbers = #tpu.dot_dimension_numbers<[1], [0], [0], [1], [0, 0, 1, 1], [], []>} : vector<64x512xbf16>, vector<512x512xbf16>, vector<64x512xf32> -> vector<64x512xf32>
    %7 = vector.broadcast %0 : vector<1x512xf32> to vector<64x512xf32>
    %8 = arith.addf %6, %7 : vector<64x512xf32>
    %cst_9 = arith.constant 0.000000e+00 : f32
    %9 = vector.broadcast %cst_9 : f32 to vector<64x512xf32>
    %10 = arith.maximumf %8, %9 : vector<64x512xf32>
    %11 = arith.truncf %10 : vector<64x512xf32> to vector<64x512xbf16>
    %c0_10 = arith.constant 0 : index
    %c0_11 = arith.constant 0 : index
    %12 = vector.load %arg5[%c0_10, %c0_11] : memref<512x256xbf16, #tpu.memory_space<vmem>>, vector<512x256xbf16>
    %cst_12 = arith.constant dense<0.000000e+00> : vector<64x256xf32>
    %13 = tpu.matmul %11, %12, %cst_12 {dimension_numbers = #tpu.dot_dimension_numbers<[1], [0], [0], [1], [0, 0, 1, 1], [], []>} : vector<64x512xbf16>, vector<512x256xbf16>, vector<64x256xf32> -> vector<64x256xf32>
    %14 = vector.broadcast %1 : vector<1x256xf32> to vector<64x256xf32>
    %15 = arith.addf %13, %14 : vector<64x256xf32>
    %cst_13 = arith.constant 0.000000e+00 : f32
    %16 = vector.broadcast %cst_13 : f32 to vector<64x256xf32>
    %17 = arith.maximumf %15, %16 : vector<64x256xf32>
    %18 = arith.truncf %17 : vector<64x256xf32> to vector<64x256xbf16>
    %c0_14 = arith.constant 0 : index
    %c0_15 = arith.constant 0 : index
    %19 = vector.load %arg7[%c0_14, %c0_15] : memref<256x128xbf16, #tpu.memory_space<vmem>>, vector<256x128xbf16>
    %cst_16 = arith.constant dense<0.000000e+00> : vector<64x128xf32>
    %20 = tpu.matmul %18, %19, %cst_16 {dimension_numbers = #tpu.dot_dimension_numbers<[1], [0], [0], [1], [0, 0, 1, 1], [], []>} : vector<64x256xbf16>, vector<256x128xbf16>, vector<64x128xf32> -> vector<64x128xf32>
    %21 = vector.broadcast %2 : vector<1x128xf32> to vector<64x128xf32>
    %22 = arith.addf %20, %21 : vector<64x128xf32>
    %23 = arith.mulf %22, %22 : vector<64x128xf32>
    %cst_17 = arith.constant dense<0.000000e+00> : vector<64xf32>
    %24 = vector.multi_reduction <add>, %23, %cst_17 [1] : vector<64x128xf32> to vector<64xf32>
    %25 = vector.shape_cast %24 : vector<64xf32> to vector<64x1xf32>
    %cst_18 = arith.constant 1.000000e-24 : f32
    %26 = vector.broadcast %cst_18 : f32 to vector<64x1xf32>
    %27 = arith.maximumf %25, %26 : vector<64x1xf32>
    %28 = math.rsqrt %27 : vector<64x1xf32>
    %29 = vector.broadcast %28 : vector<64x1xf32> to vector<64x128xf32>
    %30 = arith.mulf %22, %29 : vector<64x128xf32>
    %c0_19 = arith.constant 0 : index
    %c0_20 = arith.constant 0 : index
    %31 = vector.load %arg9[%c0_19, %c0_20] : memref<64x128xf32, #tpu.memory_space<vmem>>, vector<64x128xf32>
    tpu.vector_store %arg9[%c0_19, %c0_20], %30 {strides = array<i32>} : memref<64x128xf32, #tpu.memory_space<vmem>>, vector<64x128xf32>,
    %c0_21 = arith.constant 0 : index
    %c0_22 = arith.constant 0 : index
    %32 = vector.load %arg2[%c0_21, %c0_22] : memref<64x512xf32, #tpu.memory_space<vmem>>, vector<64x512xf32>
    %33 = arith.truncf %32 : vector<64x512xf32> to vector<64x512xbf16>
    %c0_23 = arith.constant 0 : index
    %c0_24 = arith.constant 0 : index
    %34 = vector.load %arg3[%c0_23, %c0_24] : memref<512x512xbf16, #tpu.memory_space<vmem>>, vector<512x512xbf16>
    %cst_25 = arith.constant dense<0.000000e+00> : vector<64x512xf32>
    %35 = tpu.matmul %33, %34, %cst_25 {dimension_numbers = #tpu.dot_dimension_numbers<[1], [0], [0], [1], [0, 0, 1, 1], [], []>} : vector<64x512xbf16>, vector<512x512xbf16>, vector<64x512xf32> -> vector<64x512xf32>
    %36 = vector.broadcast %0 : vector<1x512xf32> to vector<64x512xf32>
    %37 = arith.addf %35, %36 : vector<64x512xf32>
    %cst_26 = arith.constant 0.000000e+00 : f32
    %38 = vector.broadcast %cst_26 : f32 to vector<64x512xf32>
    %39 = arith.maximumf %37, %38 : vector<64x512xf32>
    %40 = arith.truncf %39 : vector<64x512xf32> to vector<64x512xbf16>
    %c0_27 = arith.constant 0 : index
    %c0_28 = arith.constant 0 : index
    %41 = vector.load %arg5[%c0_27, %c0_28] : memref<512x256xbf16, #tpu.memory_space<vmem>>, vector<512x256xbf16>
    %cst_29 = arith.constant dense<0.000000e+00> : vector<64x256xf32>
    %42 = tpu.matmul %40, %41, %cst_29 {dimension_numbers = #tpu.dot_dimension_numbers<[1], [0], [0], [1], [0, 0, 1, 1], [], []>} : vector<64x512xbf16>, vector<512x256xbf16>, vector<64x256xf32> -> vector<64x256xf32>
    %43 = vector.broadcast %1 : vector<1x256xf32> to vector<64x256xf32>
    %44 = arith.addf %42, %43 : vector<64x256xf32>
    %cst_30 = arith.constant 0.000000e+00 : f32
    %45 = vector.broadcast %cst_30 : f32 to vector<64x256xf32>
    %46 = arith.maximumf %44, %45 : vector<64x256xf32>
    %47 = arith.truncf %46 : vector<64x256xf32> to vector<64x256xbf16>
    %c0_31 = arith.constant 0 : index
    %c0_32 = arith.constant 0 : index
    %48 = vector.load %arg7[%c0_31, %c0_32] : memref<256x128xbf16, #tpu.memory_space<vmem>>, vector<256x128xbf16>
    %cst_33 = arith.constant dense<0.000000e+00> : vector<64x128xf32>
    %49 = tpu.matmul %47, %48, %cst_33 {dimension_numbers = #tpu.dot_dimension_numbers<[1], [0], [0], [1], [0, 0, 1, 1], [], []>} : vector<64x256xbf16>, vector<256x128xbf16>, vector<64x128xf32> -> vector<64x128xf32>
    %50 = vector.broadcast %2 : vector<1x128xf32> to vector<64x128xf32>
    %51 = arith.addf %49, %50 : vector<64x128xf32>
    %52 = arith.mulf %51, %51 : vector<64x128xf32>
    %cst_34 = arith.constant dense<0.000000e+00> : vector<64xf32>
    %53 = vector.multi_reduction <add>, %52, %cst_34 [1] : vector<64x128xf32> to vector<64xf32>
    %54 = vector.shape_cast %53 : vector<64xf32> to vector<64x1xf32>
    %cst_35 = arith.constant 1.000000e-24 : f32
    %55 = vector.broadcast %cst_35 : f32 to vector<64x1xf32>
    %56 = arith.maximumf %54, %55 : vector<64x1xf32>
    %57 = math.rsqrt %56 : vector<64x1xf32>
    %58 = vector.broadcast %57 : vector<64x1xf32> to vector<64x128xf32>
    %59 = arith.mulf %51, %58 : vector<64x128xf32>
    %c0_36 = arith.constant 0 : index
    %c0_37 = arith.constant 0 : index
    %60 = vector.load %arg10[%c0_36, %c0_37] : memref<64x128xf32, #tpu.memory_space<vmem>>, vector<64x128xf32>
    tpu.vector_store %arg10[%c0_36, %c0_37], %59 {strides = array<i32>} : memref<64x128xf32, #tpu.memory_space<vmem>>, vector<64x128xf32>,
    return
  }
  func.func @transform_0(%arg0: i32) -> (i32, i32) {
    %c0_i32 = arith.constant 0 : i32
    %c0_i32_0 = arith.constant 0 : i32
    return %arg0, %c0_i32 : i32, i32
  }
  func.func @transform_1(%arg0: i32) -> (i32, i32) {
    %c0_i32 = arith.constant 0 : i32
    %c0_i32_0 = arith.constant 0 : i32
    return %arg0, %c0_i32 : i32, i32
  }
  func.func @transform_2(%arg0: i32) -> (i32, i32) {
    %c0_i32 = arith.constant 0 : i32
    %c0_i32_0 = arith.constant 0 : i32
    %c0_i32_1 = arith.constant 0 : i32
    return %c0_i32, %c0_i32_0 : i32, i32
  }
  func.func @transform_3(%arg0: i32) -> (i32, i32) {
    %c0_i32 = arith.constant 0 : i32
    %c0_i32_0 = arith.constant 0 : i32
    %c0_i32_1 = arith.constant 0 : i32
    return %c0_i32, %c0_i32_0 : i32, i32
  }
  func.func @transform_4(%arg0: i32) -> (i32, i32) {
    %c0_i32 = arith.constant 0 : i32
    %c0_i32_0 = arith.constant 0 : i32
    %c0_i32_1 = arith.constant 0 : i32
    return %c0_i32, %c0_i32_0 : i32, i32
  }
  func.func @transform_5(%arg0: i32) -> (i32, i32) {
    %c0_i32 = arith.constant 0 : i32
    %c0_i32_0 = arith.constant 0 : i32
    %c0_i32_1 = arith.constant 0 : i32
    return %c0_i32, %c0_i32_0 : i32, i32
  }
  func.func @transform_6(%arg0: i32) -> (i32, i32) {
    %c0_i32 = arith.constant 0 : i32
    %c0_i32_0 = arith.constant 0 : i32
    %c0_i32_1 = arith.constant 0 : i32
    return %c0_i32, %c0_i32_0 : i32, i32
  }
  func.func @transform_7(%arg0: i32) -> (i32, i32) {
    %c0_i32 = arith.constant 0 : i32
    %c0_i32_0 = arith.constant 0 : i32
    %c0_i32_1 = arith.constant 0 : i32
    return %c0_i32, %c0_i32_0 : i32, i32
  }
  func.func @transform_8(%arg0: i32) -> (i32, i32) {
    %c0_i32 = arith.constant 0 : i32
    %c0_i32_0 = arith.constant 0 : i32
    return %arg0, %c0_i32 : i32, i32
  }
  func.func @transform_9(%arg0: i32) -> (i32, i32) {
    %c0_i32 = arith.constant 0 : i32
    %c0_i32_0 = arith.constant 0 : i32
    return %arg0, %c0_i32 : i32, i32
  }
}

</mosaic_0001>

<llo_original>
// kernel: tpu_custom_call.1
$region0: #{tpu_custom_call.1}
  #allocation0 [shape = 'u32[]', space=smem, size = 0x4, offset = 0x4, fixed_abs, tag = 'smem constant byte address 0x4 - core index']
  #allocation1 [shape = 'u32[144,128]{1,0:T(1,128)}', space=vmem, size = 0x12000, scoped, tag = 'internal scratch']
  %s0 = inlined_call_operand.hbm [shape: f32[64,512], index: 0, kind: input, shape index: {}]
  %s1 = inlined_call_operand.hbm [shape: f32[64,512], index: 1, kind: input, shape index: {}]
  %s2 = inlined_call_operand.hbm [shape: bf16[512,512], index: 2, kind: input, shape index: {}]
  %s3 = inlined_call_operand.vmem [shape: f32[1,512], index: 3, kind: input, shape index: {}]
  %s4 = inlined_call_operand.hbm [shape: bf16[512,256], index: 4, kind: input, shape index: {}]
  %s5 = inlined_call_operand.vmem [shape: f32[1,256], index: 5, kind: input, shape index: {}]
  %s6 = inlined_call_operand.hbm [shape: bf16[256,128], index: 6, kind: input, shape index: {}]
  %s7 = inlined_call_operand.vmem [shape: f32[1,128], index: 7, kind: input, shape index: {}]
  %s8 = inlined_call_operand.hbm [shape: f32[64,128], index: 8, kind: output, shape index: {0}]
  %s9 = inlined_call_operand.hbm [shape: f32[64,128], index: 9, kind: output, shape index: {1}]
  %10 = xla_tuple %s8, %s9
  %s11 = sld [smem:[#allocation0]]
  $region70: #{tpu_custom_call.1} parent=0
    _
  %s13 = ssub.s32 1, %s11
  %s14 = scalar_select 0, %s13, %s11
  $region1: #{tpu_custom_call.1} parent=0
    #allocation2 [shape = 'u8[131072]{0}', space=vmem, size = 0x20000, scoped, tag = 'input window, operand 0, single buffered']
    #allocation3 [shape = 's32[1]{0}', space=sflag, size = 0x4, scoped, tag = 'scoped memory for tpu_custom_call.1']
    #allocation4 [shape = 's32[1]{0}', space=sflag, size = 0x4, scoped, tag = 'scoped memory for tpu_custom_call.1']
    #allocation5 [shape = 'u8[131072]{0}', space=vmem, size = 0x20000, scoped, tag = 'input window, operand 1, single buffered']
    #allocation6 [shape = 's32[1]{0}', space=sflag, size = 0x4, scoped, tag = 'scoped memory for tpu_custom_call.1']
    #allocation7 [shape = 'u8[524288]{0}', space=vmem, size = 0x80000, scoped, tag = 'input window, operand 2, single buffered']
    #allocation8 [shape = 'u8[262144]{0}', space=vmem, size = 0x40000, scoped, tag = 'input window, operand 4, single buffered']
    #allocation9 [shape = 's32[1]{0}', space=sflag, size = 0x4, scoped, tag = 'scoped memory for tpu_custom_call.1']
    #allocation10 [shape = 'u8[65536]{0}', space=vmem, size = 0x10000, scoped, tag = 'input window, operand 6, single buffered']
    #allocation11 [shape = 'u8[32768]{0}', space=vmem, size = 0x8000, scoped, tag = 'output window, operand 0, single buffered']
    #allocation12 [shape = 'u8[32768]{0}', space=vmem, size = 0x8000, scoped, tag = 'output window, operand 1, single buffered']
    #allocation13 [shape = 's32[1]{0}', space=sflag, size = 0x4, scoped, tag = 'scoped memory for tpu_custom_call.1']
    %15 = vsyncpa [#allocation3], 0
    %16 = vsyncpa [#allocation6], 0
    %17 = vsyncpa [#allocation9], 0
    %18 = vsyncpa [#allocation4], 0
    %19 = vsyncpa [#allocation13], 0
    // Predicated region
    $region2: #{tpu_custom_call.1} parent=1 // pred_check
      _
    $region3: #{tpu_custom_call.1} parent=1 // pred_check_branch
      %21 = sbr.rel (0) target = $region5
    $region4: #{tpu_custom_call.1} parent=1 // pred_region
      %s23 = ssub.s32 4096, 4096
      %24 = vsyncadd [#allocation3], %s23
      %s25 = sshll.u32 [#allocation2], 4
      %s26 = int_to_ptr.vmem [resolvable:$true] %s25
      %31 = dma.hbm_to_vmem [thread:$0]  %s0, 4096, %s26, [#allocation3], 512, 512, 32
    $region5: #{tpu_custom_call.1} parent=1 // pred_fallthru
      _
    // Predicated region
    $region6: #{tpu_custom_call.1} parent=1 // pred_check
      _
    $region7: #{tpu_custom_call.1} parent=1 // pred_check_branch
      %33 = sbr.rel (0) target = $region9
    $region8: #{tpu_custom_call.1} parent=1 // pred_region
      %s35 = ssub.s32 4096, 4096
      %36 = vsyncadd [#allocation6], %s35
      %s37 = sshll.u32 [#allocation5], 4
      %s38 = int_to_ptr.vmem [resolvable:$true] %s37
      %43 = dma.hbm_to_vmem [thread:$0]  %s1, 4096, %s38, [#allocation6], 512, 512, 32
    $region9: #{tpu_custom_call.1} parent=1 // pred_fallthru
      _
    // Predicated region
    $region10: #{tpu_custom_call.1} parent=1 // pred_check
      _
    $region11: #{tpu_custom_call.1} parent=1 // pred_check_branch
      %45 = sbr.rel (0) target = $region13
    $region12: #{tpu_custom_call.1} parent=1 // pred_region
      %s47 = ssub.s32 16384, 16384
      %48 = vsyncadd [#allocation6], %s47
      %s49 = sshll.u32 [#allocation7], 4
      %s50 = int_to_ptr.vmem [resolvable:$true] %s49
      %55 = dma.hbm_to_vmem [thread:$0]  %s2, 16384, %s50, [#allocation6], 256, 256, 16
    $region13: #{tpu_custom_call.1} parent=1 // pred_fallthru
      _
    // Predicated region
    $region14: #{tpu_custom_call.1} parent=1 // pred_check
      _
    $region15: #{tpu_custom_call.1} parent=1 // pred_check_branch
      %57 = sbr.rel (0) target = $region17
    $region16: #{tpu_custom_call.1} parent=1 // pred_region
      _
    $region17: #{tpu_custom_call.1} parent=1 // pred_fallthru
      _
    // Predicated region
    $region18: #{tpu_custom_call.1} parent=1 // pred_check
      _
    $region19: #{tpu_custom_call.1} parent=1 // pred_check_branch
      %59 = sbr.rel (0) target = $region21
    $region20: #{tpu_custom_call.1} parent=1 // pred_region
      %s61 = ssub.s32 8192, 8192
      %62 = vsyncadd [#allocation9], %s61
      %s63 = sshll.u32 [#allocation8], 4
      %s64 = int_to_ptr.vmem [resolvable:$true] %s63
      %69 = dma.hbm_to_vmem [thread:$0]  %s4, 8192, %s64, [#allocation9], 128, 128, 8
    $region21: #{tpu_custom_call.1} parent=1 // pred_fallthru
      _
    // Predicated region
    $region22: #{tpu_custom_call.1} parent=1 // pred_check
      _
    $region23: #{tpu_custom_call.1} parent=1 // pred_check_branch
      %71 = sbr.rel (0) target = $region25
    $region24: #{tpu_custom_call.1} parent=1 // pred_region
      _
    $region25: #{tpu_custom_call.1} parent=1 // pred_fallthru
      _
    // Predicated region
    $region26: #{tpu_custom_call.1} parent=1 // pred_check
      _
    $region27: #{tpu_custom_call.1} parent=1 // pred_check_branch
      %73 = sbr.rel (0) target = $region29
    $region28: #{tpu_custom_call.1} parent=1 // pred_region
      %s75 = ssub.s32 2048, 2048
      %76 = vsyncadd [#allocation9], %s75
      %s77 = sshll.u32 [#allocation10], 4
      %s78 = int_to_ptr.vmem [resolvable:$true] %s77
      %83 = dma.hbm_to_vmem [thread:$0]  %s6, 2048, %s78, [#allocation9], 64, 64, 4
    $region29: #{tpu_custom_call.1} parent=1 // pred_fallthru
      _
    // Predicated region
    $region30: #{tpu_custom_call.1} parent=1 // pred_check
      _
    $region31: #{tpu_custom_call.1} parent=1 // pred_check_branch
      %85 = sbr.rel (0) target = $region33
    $region32: #{tpu_custom_call.1} parent=1 // pred_region
      _
    $region33: #{tpu_custom_call.1} parent=1 // pred_fallthru
      _
    // Predicated region
    $region34: #{tpu_custom_call.1} parent=1 // pred_check
      _
    $region35: #{tpu_custom_call.1} parent=1 // pred_check_branch
      %87 = sbr.rel (0) target = $region37
    $region36: #{tpu_custom_call.1} parent=1 // pred_region
      %88 = dma.done [#allocation3], 4096
    $region37: #{tpu_custom_call.1} parent=1 // pred_fallthru
      _
    // Predicated region
    $region38: #{tpu_custom_call.1} parent=1 // pred_check
      _
    $region39: #{tpu_custom_call.1} parent=1 // pred_check_branch
      %90 = sbr.rel (0) target = $region41
    $region40: #{tpu_custom_call.1} parent=1 // pred_region
      %91 = dma.done [#allocation6], 4096
    $region41: #{tpu_custom_call.1} parent=1 // pred_fallthru
      _
    // Predicated region
    $region42: #{tpu_custom_call.1} parent=1 // pred_check
      _
    $region43: #{tpu_custom_call.1} parent=1 // pred_check_branch
      %93 = sbr.rel (0) target = $region45
    $region44: #{tpu_custom_call.1} parent=1 // pred_region
      %94 = dma.done [#allocation6], 16384
    $region45: #{tpu_custom_call.1} parent=1 // pred_fallthru
      _
    // Predicated region
    $region46: #{tpu_custom_call.1} parent=1 // pred_check
      _
    $region47: #{tpu_custom_call.1} parent=1 // pred_check_branch
      %96 = sbr.rel (0) target = $region49
    $region48: #{tpu_custom_call.1} parent=1 // pred_region
      %97 = dma.done [#allocation9], 8192
    $region49: #{tpu_custom_call.1} parent=1 // pred_fallthru
      _
    // Predicated region
    $region50: #{tpu_custom_call.1} parent=1 // pred_check
      _
    $region51: #{tpu_custom_call.1} parent=1 // pred_check_branch
      %99 = sbr.rel (0) target = $region53
    $region52: #{tpu_custom_call.1} parent=1 // pred_region
      %100 = dma.done [#allocation9], 2048
    $region53: #{tpu_custom_call.1} parent=1 // pred_fallthru
      _
    %v102 = vld [vmem:[%s3] sm:$0xf]
    %v103 = vld [vmem:[%s5] sm:$0x3]
    %v104 = vld [vmem:[%s7] sm:$0x1]
    %v105 = vld [vmem:[#allocation2] sm:$0xff]
    %v106 = vld [vmem:[#allocation2 + $0x8] sm:$0xff]
    %v107 = vld [vmem:[#allocation2 + $0x10] sm:$0xff]
    %v108 = vld [vmem:[#allocation2 + $0x18] sm:$0xff]
    %v109 = vld [vmem:[#allocation2 + $0x20] sm:$0xff]
    %v110 = vld [vmem:[#allocation2 + $0x28] sm:$0xff]
    %v111 = vld [vmem:[#allocation2 + $0x30] sm:$0xff]
    %v112 = vld [vmem:[#allocation2 + $0x38] sm:$0xff]
    %v113 = vld [vmem:[#allocation2 + $0x40] sm:$0xff]
    %v114 = vld [vmem:[#allocation2 + $0x48] sm:$0xff]
    %v115 = vld [vmem:[#allocation2 + $0x50] sm:$0xff]
    %v116 = vld [vmem:[#allocation2 + $0x58] sm:$0xff]
    %v117 = vld [vmem:[#allocation2 + $0x60] sm:$0xff]
    %v118 = vld [vmem:[#allocation2 + $0x68] sm:$0xff]
    %v119 = vld [vmem:[#allocation2 + $0x70] sm:$0xff]
    %v120 = vld [vmem:[#allocation2 + $0x78] sm:$0xff]
    %v121 = vld [vmem:[#allocation2 + $0x80] sm:$0xff]
    %v122 = vld [vmem:[#allocation2 + $0x88] sm:$0xff]
    %v123 = vld [vmem:[#allocation2 + $0x90] sm:$0xff]
    %v124 = vld [vmem:[#allocation2 + $0x98] sm:$0xff]
    %v125 = vld [vmem:[#allocation2 + $0xa0] sm:$0xff]
    %v126 = vld [vmem:[#allocation2 + $0xa8] sm:$0xff]
    %v127 = vld [vmem:[#allocation2 + $0xb0] sm:$0xff]
    %v128 = vld [vmem:[#allocation2 + $0xb8] sm:$0xff]
    %v129 = vld [vmem:[#allocation2 + $0xc0] sm:$0xff]
    %v130 = vld [vmem:[#allocation2 + $0xc8] sm:$0xff]
    %v131 = vld [vmem:[#allocation2 + $0xd0] sm:$0xff]
    %v132 = vld [vmem:[#allocation2 + $0xd8] sm:$0xff]
    %v133 = vld [vmem:[#allocation2 + $0xe0] sm:$0xff]
    %v134 = vld [vmem:[#allocation2 + $0xe8] sm:$0xff]
    %v135 = vld [vmem:[#allocation2 + $0xf0] sm:$0xff]
    %v136 = vld [vmem:[#allocation2 + $0xf8] sm:$0xff]
    %v137 = vpack.c.bf16 %v109, %v105
    %v138 = vpack.c.bf16 %v110, %v106
    %v139 = vpack.c.bf16 %v111, %v107
    %v140 = vpack.c.bf16 %v112, %v108
    %v141 = vpack.c.bf16 %v117, %v113
    %v142 = vpack.c.bf16 %v118, %v114
    %v143 = vpack.c.bf16 %v119, %v115
    %v144 = vpack.c.bf16 %v120, %v116
    %v145 = vpack.c.bf16 %v125, %v121
    %v146 = vpack.c.bf16 %v126, %v122
    %v147 = vpack.c.bf16 %v127, %v123
    %v148 = vpack.c.bf16 %v128, %v124
    %v149 = vpack.c.bf16 %v133, %v129
    %v150 = vpack.c.bf16 %v134, %v130
    %v151 = vpack.c.bf16 %v135, %v131
    %v152 = vpack.c.bf16 %v136, %v132
    %v153 = vld [vmem:[#allocation7] sm:$0xff]
    %v154 = vld [vmem:[#allocation7 + $0x8] sm:$0xff]
    %v155 = vld [vmem:[#allocation7 + $0x10] sm:$0xff]
    %v156 = vld [vmem:[#allocation7 + $0x18] sm:$0xff]
    %v157 = vld [vmem:[#allocation7 + $0x20] sm:$0xff]
    %v158 = vld [vmem:[#allocation7 + $0x28] sm:$0xff]
    %v159 = vld [vmem:[#allocation7 + $0x30] sm:$0xff]
    %v160 = vld [vmem:[#allocation7 + $0x38] sm:$0xff]
    %v161 = vld [vmem:[#allocation7 + $0x40] sm:$0xff]
    %v162 = vld [vmem:[#allocation7 + $0x48] sm:$0xff]
    %v163 = vld [vmem:[#allocation7 + $0x50] sm:$0xff]
    %v164 = vld [vmem:[#allocation7 + $0x58] sm:$0xff]
    %v165 = vld [vmem:[#allocation7 + $0x60] sm:$0xff]
    %v166 = vld [vmem:[#allocation7 + $0x68] sm:$0xff]
    %v167 = vld [vmem:[#allocation7 + $0x70] sm:$0xff]
    %v168 = vld [vmem:[#allocation7 + $0x78] sm:$0xff]
    %v169 = vld [vmem:[#allocation7 + $0x80] sm:$0xff]
    %v170 = vld [vmem:[#allocation7 + $0x88] sm:$0xff]
    %v171 = vld [vmem:[#allocation7 + $0x90] sm:$0xff]
    %v172 = vld [vmem:[#allocation7 + $0x98] sm:$0xff]
    %v173 = vld [vmem:[#allocation7 + $0xa0] sm:$0xff]
    %v174 = vld [vmem:[#allocation7 + $0xa8] sm:$0xff]
    %v175 = vld [vmem:[#allocation7 + $0xb0] sm:$0xff]
    %v176 = vld [vmem:[#allocation7 + $0xb8] sm:$0xff]
    %v177 = vld [vmem:[#allocation7 + $0xc0] sm:$0xff]
    %v178 = vld [vmem:[#allocation7 + $0xc8] sm:$0xff]
    %v179 = vld [vmem:[#allocation7 + $0xd0] sm:$0xff]
    %v180 = vld [vmem:[#allocation7 + $0xd8] sm:$0xff]
    %v181 = vld [vmem:[#allocation7 + $0xe0] sm:$0xff]
    %v182 = vld [vmem:[#allocation7 + $0xe8] sm:$0xff]
    %v183 = vld [vmem:[#allocation7 + $0xf0] sm:$0xff]
    %v184 = vld [vmem:[#allocation7 + $0xf8] sm:$0xff]
    %v185 = vld [vmem:[#allocation7 + $0x100] sm:$0xff]
    %v186 = vld [vmem:[#allocation7 + $0x108] sm:$0xff]
    %v187 = vld [vmem:[#allocation7 + $0x110] sm:$0xff]
    %v188 = vld [vmem:[#allocation7 + $0x118] sm:$0xff]
    %v189 = vld [vmem:[#allocation7 + $0x120] sm:$0xff]
    %v190 = vld [vmem:[#allocation7 + $0x128] sm:$0xff]
    %v191 = vld [vmem:[#allocation7 + $0x130] sm:$0xff]
    %v192 = vld [vmem:[#allocation7 + $0x138] sm:$0xff]
    %v193 = vld [vmem:[#allocation7 + $0x140] sm:$0xff]
    %v194 = vld [vmem:[#allocation7 + $0x148] sm:$0xff]
    %v195 = vld [vmem:[#allocation7 + $0x150] sm:$0xff]
    %v196 = vld [vmem:[#allocation7 + $0x158] sm:$0xff]
    %v197 = vld [vmem:[#allocation7 + $0x160] sm:$0xff]
    %v198 = vld [vmem:[#allocation7 + $0x168] sm:$0xff]
    %v199 = vld [vmem:[#allocation7 + $0x170] sm:$0xff]
    %v200 = vld [vmem:[#allocation7 + $0x178] sm:$0xff]
    %v201 = vld [vmem:[#allocation7 + $0x180] sm:$0xff]
    %v202 = vld [vmem:[#allocation7 + $0x188] sm:$0xff]
    %v203 = vld [vmem:[#allocation7 + $0x190] sm:$0xff]
    %v204 = vld [vmem:[#allocation7 + $0x198] sm:$0xff]
    %v205 = vld [vmem:[#allocation7 + $0x1a0] sm:$0xff]
    %v206 = vld [vmem:[#allocation7 + $0x1a8] sm:$0xff]
    %v207 = vld [vmem:[#allocation7 + $0x1b0] sm:$0xff]
    %v208 = vld [vmem:[#allocation7 + $0x1b8] sm:$0xff]
    %v209 = vld [vmem:[#allocation7 + $0x1c0] sm:$0xff]
    %v210 = vld [vmem:[#allocation7 + $0x1c8] sm:$0xff]
    %v211 = vld [vmem:[#allocation7 + $0x1d0] sm:$0xff]
    %v212 = vld [vmem:[#allocation7 + $0x1d8] sm:$0xff]
    %v213 = vld [vmem:[#allocation7 + $0x1e0] sm:$0xff]
    %v214 = vld [vmem:[#allocation7 + $0x1e8] sm:$0xff]
    %v215 = vld [vmem:[#allocation7 + $0x1f0] sm:$0xff]
    %v216 = vld [vmem:[#allocation7 + $0x1f8] sm:$0xff]
    %v217 = vld [vmem:[#allocation7 + $0x200] sm:$0xff]
    %v218 = vld [vmem:[#allocation7 + $0x208] sm:$0xff]
    %v219 = vld [vmem:[#allocation7 + $0x210] sm:$0xff]
    %v220 = vld [vmem:[#allocation7 + $0x218] sm:$0xff]
    %v221 = vld [vmem:[#allocation7 + $0x220] sm:$0xff]
    %v222 = vld [vmem:[#allocation7 + $0x228] sm:$0xff]
    %v223 = vld [vmem:[#allocation7 + $0x230] sm:$0xff]
    %v224 = vld [vmem:[#allocation7 + $0x238] sm:$0xff]
    %v225 = vld [vmem:[#allocation7 + $0x240] sm:$0xff]
    %v226 = vld [vmem:[#allocation7 + $0x248] sm:$0xff]
    %v227 = vld [vmem:[#allocation7 + $0x250] sm:$0xff]
    %v228 = vld [vmem:[#allocation7 + $0x258] sm:$0xff]
    %v229 = vld [vmem:[#allocation7 + $0x260] sm:$0xff]
    %v230 = vld [vmem:[#allocation7 + $0x268] sm:$0xff]
    %v231 = vld [vmem:[#allocation7 + $0x270] sm:$0xff]
    %v232 = vld [vmem:[#allocation7 + $0x278] sm:$0xff]
    %v233 = vld [vmem:[#allocation7 + $0x280] sm:$0xff]
    %v234 = vld [vmem:[#allocation7 + $0x288] sm:$0xff]
    %v235 = vld [vmem:[#allocation7 + $0x290] sm:$0xff]
    %v236 = vld [vmem:[#allocation7 + $0x298] sm:$0xff]
    %v237 = vld [vmem:[#allocation7 + $0x2a0] sm:$0xff]
    %v238 = vld [vmem:[#allocation7 + $0x2a8] sm:$0xff]
    %v239 = vld [vmem:[#allocation7 + $0x2b0] sm:$0xff]
    %v240 = vld [vmem:[#allocation7 + $0x2b8] sm:$0xff]
    %v241 = vld [vmem:[#allocation7 + $0x2c0] sm:$0xff]
    %v242 = vld [vmem:[#allocation7 + $0x2c8] sm:$0xff]
    %v243 = vld [vmem:[#allocation7 + $0x2d0] sm:$0xff]
    %v244 = vld [vmem:[#allocation7 + $0x2d8] sm:$0xff]
    %v245 = vld [vmem:[#allocation7 + $0x2e0] sm:$0xff]
    %v246 = vld [vmem:[#allocation7 + $0x2e8] sm:$0xff]
    %v247 = vld [vmem:[#allocation7 + $0x2f0] sm:$0xff]
    %v248 = vld [vmem:[#allocation7 + $0x2f8] sm:$0xff]
    %v249 = vld [vmem:[#allocation7 + $0x300] sm:$0xff]
    %v250 = vld [vmem:[#allocation7 + $0x308] sm:$0xff]
    %v251 = vld [vmem:[#allocation7 + $0x310] sm:$0xff]
    %v252 = vld [vmem:[#allocation7 + $0x318] sm:$0xff]
    %v253 = vld [vmem:[#allocation7 + $0x320] sm:$0xff]
    %v254 = vld [vmem:[#allocation7 + $0x328] sm:$0xff]
    %v255 = vld [vmem:[#allocation7 + $0x330] sm:$0xff]
    %v256 = vld [vmem:[#allocation7 + $0x338] sm:$0xff]
    %v257 = vld [vmem:[#allocation7 + $0x340] sm:$0xff]
    %v258 = vld [vmem:[#allocation7 + $0x348] sm:$0xff]
    %v259 = vld [vmem:[#allocation7 + $0x350] sm:$0xff]
    %v260 = vld [vmem:[#allocation7 + $0x358] sm:$0xff]
    %v261 = vld [vmem:[#allocation7 + $0x360] sm:$0xff]
    %v262 = vld [vmem:[#allocation7 + $0x368] sm:$0xff]
    %v263 = vld [vmem:[#allocation7 + $0x370] sm:$0xff]
    %v264 = vld [vmem:[#allocation7 + $0x378] sm:$0xff]
    %v265 = vld [vmem:[#allocation7 + $0x380] sm:$0xff]
    %v266 = vld [vmem:[#allocation7 + $0x388] sm:$0xff]
    %v267 = vld [vmem:[#allocation7 + $0x390] sm:$0xff]
    %v268 = vld [vmem:[#allocation7 + $0x398] sm:$0xff]
    %v269 = vld [vmem:[#allocation7 + $0x3a0] sm:$0xff]
    %v270 = vld [vmem:[#allocation7 + $0x3a8] sm:$0xff]
    %v271 = vld [vmem:[#allocation7 + $0x3b0] sm:$0xff]
    %v272 = vld [vmem:[#allocation7 + $0x3b8] sm:$0xff]
    %v273 = vld [vmem:[#allocation7 + $0x3c0] sm:$0xff]
    %v274 = vld [vmem:[#allocation7 + $0x3c8] sm:$0xff]
    %v275 = vld [vmem:[#allocation7 + $0x3d0] sm:$0xff]
    %v276 = vld [vmem:[#allocation7 + $0x3d8] sm:$0xff]
    %v277 = vld [vmem:[#allocation7 + $0x3e0] sm:$0xff]
    %v278 = vld [vmem:[#allocation7 + $0x3e8] sm:$0xff]
    %v279 = vld [vmem:[#allocation7 + $0x3f0] sm:$0xff]
    %v280 = vld [vmem:[#allocation7 + $0x3f8] sm:$0xff]
    %v282 = vlaneseq
    %v283 = vshrl.u32 %v282, 7
    %v284 = vsub.s32 0, %v283
    %v285 = vrot.slane %v102, %v284
    %v286 = vlaneseq
    %v287 = vshrl.u32 %v286, 7
    %v288 = vsub.s32 1, %v287
    %v289 = vrot.slane %v102, %v288
    %v290 = vlaneseq
    %v291 = vshrl.u32 %v290, 7
    %v292 = vsub.s32 2, %v291
    %v293 = vrot.slane %v102, %v292
    %v294 = vlaneseq
    %v295 = vshrl.u32 %v294, 7
    %v296 = vsub.s32 3, %v295
    %v297 = vrot.slane %v102, %v296
    %v430 = vunpack.c.l.b16 %v153
    %v431 = vunpack.c.h.b16 %v153
    %v432 = vunpack.c.l.b16 %v154
    %v433 = vunpack.c.h.b16 %v154
    %v434 = vunpack.c.l.b16 %v155
    %v435 = vunpack.c.h.b16 %v155
    %v436 = vunpack.c.l.b16 %v156
    %v437 = vunpack.c.h.b16 %v156
    %v438 = vunpack.c.l.b16 %v157
    %v439 = vunpack.c.h.b16 %v157
    %v440 = vunpack.c.l.b16 %v158
    %v441 = vunpack.c.h.b16 %v158
    %v442 = vunpack.c.l.b16 %v159
    %v443 = vunpack.c.h.b16 %v159
    %v444 = vunpack.c.l.b16 %v160
    %v445 = vunpack.c.h.b16 %v160
    %v446 = vunpack.c.l.b16 %v161
    %v447 = vunpack.c.h.b16 %v161
    %v448 = vunpack.c.l.b16 %v162
    %v449 = vunpack.c.h.b16 %v162
    %v450 = vunpack.c.l.b16 %v163
    %v451 = vunpack.c.h.b16 %v163
    %v452 = vunpack.c.l.b16 %v164
    %v453 = vunpack.c.h.b16 %v164
    %v454 = vunpack.c.l.b16 %v165
    %v455 = vunpack.c.h.b16 %v165
    %v456 = vunpack.c.l.b16 %v166
    %v457 = vunpack.c.h.b16 %v166
    %v458 = vunpack.c.l.b16 %v167
    %v459 = vunpack.c.h.b16 %v167
    %v460 = vunpack.c.l.b16 %v168
    %v461 = vunpack.c.h.b16 %v168
    %v462 = vunpack.c.l.b16 %v169
    %v463 = vunpack.c.h.b16 %v169
    %v464 = vunpack.c.l.b16 %v170
    %v465 = vunpack.c.h.b16 %v170
    %v466 = vunpack.c.l.b16 %v171
    %v467 = vunpack.c.h.b16 %v171
    %v468 = vunpack.c.l.b16 %v172
    %v469 = vunpack.c.h.b16 %v172
    %v470 = vunpack.c.l.b16 %v173
    %v471 = vunpack.c.h.b16 %v173
    %v472 = vunpack.c.l.b16 %v174
    %v473 = vunpack.c.h.b16 %v174
    %v474 = vunpack.c.l.b16 %v175
    %v475 = vunpack.c.h.b16 %v175
    %v476 = vunpack.c.l.b16 %v176
    %v477 = vunpack.c.h.b16 %v176
    %v478 = vunpack.c.l.b16 %v177
    %v479 = vunpack.c.h.b16 %v177
    %v480 = vunpack.c.l.b16 %v178
    %v481 = vunpack.c.h.b16 %v178
    %v482 = vunpack.c.l.b16 %v179
    %v483 = vunpack.c.h.b16 %v179
    %v484 = vunpack.c.l.b16 %v180
    %v485 = vunpack.c.h.b16 %v180
    %v486 = vunpack.c.l.b16 %v181
    %v487 = vunpack.c.h.b16 %v181
    %v488 = vunpack.c.l.b16 %v182
    %v489 = vunpack.c.h.b16 %v182
    %v490 = vunpack.c.l.b16 %v183
    %v491 = vunpack.c.h.b16 %v183
    %v492 = vunpack.c.l.b16 %v184
    %v493 = vunpack.c.h.b16 %v184
    %v494 = vunpack.c.l.b16 %v185
    %v495 = vunpack.c.h.b16 %v185
    %v496 = vunpack.c.l.b16 %v186
    %v497 = vunpack.c.h.b16 %v186
    %v498 = vunpack.c.l.b16 %v187
    %v499 = vunpack.c.h.b16 %v187
    %v500 = vunpack.c.l.b16 %v188
    %v501 = vunpack.c.h.b16 %v188
    %v502 = vunpack.c.l.b16 %v189
    %v503 = vunpack.c.h.b16 %v189
    %v504 = vunpack.c.l.b16 %v190
    %v505 = vunpack.c.h.b16 %v190
    %v506 = vunpack.c.l.b16 %v191
    %v507 = vunpack.c.h.b16 %v191
    %v508 = vunpack.c.l.b16 %v192
    %v509 = vunpack.c.h.b16 %v192
    %v510 = vunpack.c.l.b16 %v193
    %v511 = vunpack.c.h.b16 %v193
    %v512 = vunpack.c.l.b16 %v194
    %v513 = vunpack.c.h.b16 %v194
    %v514 = vunpack.c.l.b16 %v195
    %v515 = vunpack.c.h.b16 %v195
    %v516 = vunpack.c.l.b16 %v196
    %v517 = vunpack.c.h.b16 %v196
    %v518 = vunpack.c.l.b16 %v197
    %v519 = vunpack.c.h.b16 %v197
    %v520 = vunpack.c.l.b16 %v198
    %v521 = vunpack.c.h.b16 %v198
    %v522 = vunpack.c.l.b16 %v199
    %v523 = vunpack.c.h.b16 %v199
    %v524 = vunpack.c.l.b16 %v200
    %v525 = vunpack.c.h.b16 %v200
    %v526 = vunpack.c.l.b16 %v201
    %v527 = vunpack.c.h.b16 %v201
    %v528 = vunpack.c.l.b16 %v202
    %v529 = vunpack.c.h.b16 %v202
    %v530 = vunpack.c.l.b16 %v203
    %v531 = vunpack.c.h.b16 %v203
    %v532 = vunpack.c.l.b16 %v204
    %v533 = vunpack.c.h.b16 %v204
    %v534 = vunpack.c.l.b16 %v205
    %v535 = vunpack.c.h.b16 %v205
    %v536 = vunpack.c.l.b16 %v206
    %v537 = vunpack.c.h.b16 %v206
    %v538 = vunpack.c.l.b16 %v207
    %v539 = vunpack.c.h.b16 %v207
    %v540 = vunpack.c.l.b16 %v208
    %v541 = vunpack.c.h.b16 %v208
    %v542 = vunpack.c.l.b16 %v209
    %v543 = vunpack.c.h.b16 %v209
    %v544 = vunpack.c.l.b16 %v210
    %v545 = vunpack.c.h.b16 %v210
    %v546 = vunpack.c.l.b16 %v211
    %v547 = vunpack.c.h.b16 %v211
    %v548 = vunpack.c.l.b16 %v212
    %v549 = vunpack.c.h.b16 %v212
    %v550 = vunpack.c.l.b16 %v213
    %v551 = vunpack.c.h.b16 %v213
    %v552 = vunpack.c.l.b16 %v214
    %v553 = vunpack.c.h.b16 %v214
    %v554 = vunpack.c.l.b16 %v215
    %v555 = vunpack.c.h.b16 %v215
    %v556 = vunpack.c.l.b16 %v216
    %v557 = vunpack.c.h.b16 %v216
    %v558 = vunpack.c.l.b16 %v217
    %v559 = vunpack.c.h.b16 %v217
    %v560 = vunpack.c.l.b16 %v218
    %v561 = vunpack.c.h.b16 %v218
    %v562 = vunpack.c.l.b16 %v219
    %v563 = vunpack.c.h.b16 %v219
    %v564 = vunpack.c.l.b16 %v220
    %v565 = vunpack.c.h.b16 %v220
    %v566 = vunpack.c.l.b16 %v221
    %v567 = vunpack.c.h.b16 %v221
    %v568 = vunpack.c.l.b16 %v222
    %v569 = vunpack.c.h.b16 %v222
    %v570 = vunpack.c.l.b16 %v223
    %v571 = vunpack.c.h.b16 %v223
    %v572 = vunpack.c.l.b16 %v224
    %v573 = vunpack.c.h.b16 %v224
    %v574 = vunpack.c.l.b16 %v225
    %v575 = vunpack.c.h.b16 %v225
    %v576 = vunpack.c.l.b16 %v226
    %v577 = vunpack.c.h.b16 %v226
    %v578 = vunpack.c.l.b16 %v227
    %v579 = vunpack.c.h.b16 %v227
    %v580 = vunpack.c.l.b16 %v228
    %v581 = vunpack.c.h.b16 %v228
    %v582 = vunpack.c.l.b16 %v229
    %v583 = vunpack.c.h.b16 %v229
    %v584 = vunpack.c.l.b16 %v230
    %v585 = vunpack.c.h.b16 %v230
    %v586 = vunpack.c.l.b16 %v231
    %v587 = vunpack.c.h.b16 %v231
    %v588 = vunpack.c.l.b16 %v232
    %v589 = vunpack.c.h.b16 %v232
    %v590 = vunpack.c.l.b16 %v233
    %v591 = vunpack.c.h.b16 %v233
    %v592 = vunpack.c.l.b16 %v234
    %v593 = vunpack.c.h.b16 %v234
    %v594 = vunpack.c.l.b16 %v235
    %v595 = vunpack.c.h.b16 %v235
    %v596 = vunpack.c.l.b16 %v236
    %v597 = vunpack.c.h.b16 %v236
    %v598 = vunpack.c.l.b16 %v237
    %v599 = vunpack.c.h.b16 %v237
    %v600 = vunpack.c.l.b16 %v238
    %v601 = vunpack.c.h.b16 %v238
    %v602 = vunpack.c.l.b16 %v239
    %v603 = vunpack.c.h.b16 %v239
    %v604 = vunpack.c.l.b16 %v240
    %v605 = vunpack.c.h.b16 %v240
    %v606 = vunpack.c.l.b16 %v241
    %v607 = vunpack.c.h.b16 %v241
    %v608 = vunpack.c.l.b16 %v242
    %v609 = vunpack.c.h.b16 %v242
    %v610 = vunpack.c.l.b16 %v243
    %v611 = vunpack.c.h.b16 %v243
    %v612 = vunpack.c.l.b16 %v244
    %v613 = vunpack.c.h.b16 %v244
    %v614 = vunpack.c.l.b16 %v245
    %v615 = vunpack.c.h.b16 %v245
    %v616 = vunpack.c.l.b16 %v246
    %v617 = vunpack.c.h.b16 %v246
    %v618 = vunpack.c.l.b16 %v247
    %v619 = vunpack.c.h.b16 %v247
    %v620 = vunpack.c.l.b16 %v248
    %v621 = vunpack.c.h.b16 %v248
    %v622 = vunpack.c.l.b16 %v249
    %v623 = vunpack.c.h.b16 %v249
    %v624 = vunpack.c.l.b16 %v250
    %v625 = vunpack.c.h.b16 %v250
    %v626 = vunpack.c.l.b16 %v251
    %v627 = vunpack.c.h.b16 %v251
    %v628 = vunpack.c.l.b16 %v252
    %v629 = vunpack.c.h.b16 %v252
    %v630 = vunpack.c.l.b16 %v253
    %v631 = vunpack.c.h.b16 %v253
    %v632 = vunpack.c.l.b16 %v254
    %v633 = vunpack.c.h.b16 %v254
    %v634 = vunpack.c.l.b16 %v255
    %v635 = vunpack.c.h.b16 %v255
    %v636 = vunpack.c.l.b16 %v256
    %v637 = vunpack.c.h.b16 %v256
    %v638 = vunpack.c.l.b16 %v257
    %v639 = vunpack.c.h.b16 %v257
    %v640 = vunpack.c.l.b16 %v258
    %v641 = vunpack.c.h.b16 %v258
    %v642 = vunpack.c.l.b16 %v259
    %v643 = vunpack.c.h.b16 %v259
    %v644 = vunpack.c.l.b16 %v260
    %v645 = vunpack.c.h.b16 %v260
    %v646 = vunpack.c.l.b16 %v261
    %v647 = vunpack.c.h.b16 %v261
    %v648 = vunpack.c.l.b16 %v262
    %v649 = vunpack.c.h.b16 %v262
    %v650 = vunpack.c.l.b16 %v263
    %v651 = vunpack.c.h.b16 %v263
    %v652 = vunpack.c.l.b16 %v264
    %v653 = vunpack.c.h.b16 %v264
    %v654 = vunpack.c.l.b16 %v265
    %v655 = vunpack.c.h.b16 %v265
    %v656 = vunpack.c.l.b16 %v266
    %v657 = vunpack.c.h.b16 %v266
    %v658 = vunpack.c.l.b16 %v267
    %v659 = vunpack.c.h.b16 %v267
    %v660 = vunpack.c.l.b16 %v268
    %v661 = vunpack.c.h.b16 %v268
    %v662 = vunpack.c.l.b16 %v269
    %v663 = vunpack.c.h.b16 %v269
    %v664 = vunpack.c.l.b16 %v270
    %v665 = vunpack.c.h.b16 %v270
    %v666 = vunpack.c.l.b16 %v271
    %v667 = vunpack.c.h.b16 %v271
    %v668 = vunpack.c.l.b16 %v272
    %v669 = vunpack.c.h.b16 %v272
    %v670 = vunpack.c.l.b16 %v273
    %v671 = vunpack.c.h.b16 %v273
    %v672 = vunpack.c.l.b16 %v274
    %v673 = vunpack.c.h.b16 %v274
    %v674 = vunpack.c.l.b16 %v275
    %v675 = vunpack.c.h.b16 %v275
    %v676 = vunpack.c.l.b16 %v276
    %v677 = vunpack.c.h.b16 %v276
    %v678 = vunpack.c.l.b16 %v277
    %v679 = vunpack.c.h.b16 %v277
    %v680 = vunpack.c.l.b16 %v278
    %v681 = vunpack.c.h.b16 %v278
    %v682 = vunpack.c.l.b16 %v279
    %v683 = vunpack.c.h.b16 %v279
    %v684 = vunpack.c.l.b16 %v280
    %v685 = vunpack.c.h.b16 %v280
    %v686 = vpack.c.b16 %v434, %v430
    %v687 = vpack.c.b16 %v435, %v431
    %v688 = vpack.c.b16 %v436, %v432
    %v689 = vpack.c.b16 %v437, %v433
    %v690 = vpack.c.b16 %v442, %v438
    %v691 = vpack.c.b16 %v443, %v439
    %v692 = vpack.c.b16 %v444, %v440
    %v693 = vpack.c.b16 %v445, %v441
    %v694 = vpack.c.b16 %v450, %v446
    %v695 = vpack.c.b16 %v451, %v447
    %v696 = vpack.c.b16 %v452, %v448
    %v697 = vpack.c.b16 %v453, %v449
    %v698 = vpack.c.b16 %v458, %v454
    %v699 = vpack.c.b16 %v459, %v455
    %v700 = vpack.c.b16 %v460, %v456
    %v701 = vpack.c.b16 %v461, %v457
    %v702 = vpack.c.b16 %v466, %v462
    %v703 = vpack.c.b16 %v467, %v463
    %v704 = vpack.c.b16 %v468, %v464
    %v705 = vpack.c.b16 %v469, %v465
    %v706 = vpack.c.b16 %v474, %v470
    %v707 = vpack.c.b16 %v475, %v471
    %v708 = vpack.c.b16 %v476, %v472
    %v709 = vpack.c.b16 %v477, %v473
    %v710 = vpack.c.b16 %v482, %v478
    %v711 = vpack.c.b16 %v483, %v479
    %v712 = vpack.c.b16 %v484, %v480
    %v713 = vpack.c.b16 %v485, %v481
    %v714 = vpack.c.b16 %v490, %v486
    %v715 = vpack.c.b16 %v491, %v487
    %v716 = vpack.c.b16 %v492, %v488
    %v717 = vpack.c.b16 %v493, %v489
    %v718 = vpack.c.b16 %v498, %v494
    %v719 = vpack.c.b16 %v499, %v495
    %v720 = vpack.c.b16 %v500, %v496
    %v721 = vpack.c.b16 %v501, %v497
    %v722 = vpack.c.b16 %v506, %v502
    %v723 = vpack.c.b16 %v507, %v503
    %v724 = vpack.c.b16 %v508, %v504
    %v725 = vpack.c.b16 %v509, %v505
    %v726 = vpack.c.b16 %v514, %v510
    %v727 = vpack.c.b16 %v515, %v511
    %v728 = vpack.c.b16 %v516, %v512
    %v729 = vpack.c.b16 %v517, %v513
    %v730 = vpack.c.b16 %v522, %v518
    %v731 = vpack.c.b16 %v523, %v519
    %v732 = vpack.c.b16 %v524, %v520
    %v733 = vpack.c.b16 %v525, %v521
    %v734 = vpack.c.b16 %v530, %v526
    %v735 = vpack.c.b16 %v531, %v527
    %v736 = vpack.c.b16 %v532, %v528
    %v737 = vpack.c.b16 %v533, %v529
    %v738 = vpack.c.b16 %v538, %v534
    %v739 = vpack.c.b16 %v539, %v535
    %v740 = vpack.c.b16 %v540, %v536
    %v741 = vpack.c.b16 %v541, %v537
    %v742 = vpack.c.b16 %v546, %v542
    %v743 = vpack.c.b16 %v547, %v543
    %v744 = vpack.c.b16 %v548, %v544
    %v745 = vpack.c.b16 %v549, %v545
    %v746 = vpack.c.b16 %v554, %v550
    %v747 = vpack.c.b16 %v555, %v551
    %v748 = vpack.c.b16 %v556, %v552
    %v749 = vpack.c.b16 %v557, %v553
    %v750 = vpack.c.b16 %v562, %v558
    %v751 = vpack.c.b16 %v563, %v559
    %v752 = vpack.c.b16 %v564, %v560
    %v753 = vpack.c.b16 %v565, %v561
    %v754 = vpack.c.b16 %v570, %v566
    %v755 = vpack.c.b16 %v571, %v567
    %v756 = vpack.c.b16 %v572, %v568
    %v757 = vpack.c.b16 %v573, %v569
    %v758 = vpack.c.b16 %v578, %v574
    %v759 = vpack.c.b16 %v579, %v575
    %v760 = vpack.c.b16 %v580, %v576
    %v761 = vpack.c.b16 %v581, %v577
    %v762 = vpack.c.b16 %v586, %v582
    %v763 = vpack.c.b16 %v587, %v583
    %v764 = vpack.c.b16 %v588, %v584
    %v765 = vpack.c.b16 %v589, %v585
    %v766 = vpack.c.b16 %v594, %v590
    %v767 = vpack.c.b16 %v595, %v591
    %v768 = vpack.c.b16 %v596, %v592
    %v769 = vpack.c.b16 %v597, %v593
    %v770 = vpack.c.b16 %v602, %v598
    %v771 = vpack.c.b16 %v603, %v599
    %v772 = vpack.c.b16 %v604, %v600
    %v773 = vpack.c.b16 %v605, %v601
    %v774 = vpack.c.b16 %v610, %v606
    %v775 = vpack.c.b16 %v611, %v607
    %v776 = vpack.c.b16 %v612, %v608
    %v777 = vpack.c.b16 %v613, %v609
    %v778 = vpack.c.b16 %v618, %v614
    %v779 = vpack.c.b16 %v619, %v615
    %v780 = vpack.c.b16 %v620, %v616
    %v781 = vpack.c.b16 %v621, %v617
    %v782 = vpack.c.b16 %v626, %v622
    %v783 = vpack.c.b16 %v627, %v623
    %v784 = vpack.c.b16 %v628, %v624
    %v785 = vpack.c.b16 %v629, %v625
    %v786 = vpack.c.b16 %v634, %v630
    %v787 = vpack.c.b16 %v635, %v631
    %v788 = vpack.c.b16 %v636, %v632
    %v789 = vpack.c.b16 %v637, %v633
    %v790 = vpack.c.b16 %v642, %v638
    %v791 = vpack.c.b16 %v643, %v639
    %v792 = vpack.c.b16 %v644, %v640
    %v793 = vpack.c.b16 %v645, %v641
    %v794 = vpack.c.b16 %v650, %v646
    %v795 = vpack.c.b16 %v651, %v647
    %v796 = vpack.c.b16 %v652, %v648
    %v797 = vpack.c.b16 %v653, %v649
    %v798 = vpack.c.b16 %v658, %v654
    %v799 = vpack.c.b16 %v659, %v655
    %v800 = vpack.c.b16 %v660, %v656
    %v801 = vpack.c.b16 %v661, %v657
    %v802 = vpack.c.b16 %v666, %v662
    %v803 = vpack.c.b16 %v667, %v663
    %v804 = vpack.c.b16 %v668, %v664
    %v805 = vpack.c.b16 %v669, %v665
    %v806 = vpack.c.b16 %v674, %v670
    %v807 = vpack.c.b16 %v675, %v671
    %v808 = vpack.c.b16 %v676, %v672
    %v809 = vpack.c.b16 %v677, %v673
    %v810 = vpack.c.b16 %v682, %v678
    %v811 = vpack.c.b16 %v683, %v679
    %v812 = vpack.c.b16 %v684, %v680
    %v813 = vpack.c.b16 %v685, %v681
    %942 = vmatprep.subr.bf16.mxu0 %v687
    %943 = vmatpush1.bf16.msra.mxu0 %v686
    %944 = vmatprep.subr.bf16.mxu0 %v691
    %945 = vmatpush1.bf16.msra.mxu0 %v690
    %946 = vmatprep.subr.bf16.mxu0 %v695
    %947 = vmatpush1.bf16.msra.mxu0 %v694
    %948 = vmatprep.subr.bf16.mxu0 %v699
    %949 = vmatpush1.bf16.msra.mxu0 %v698
    %950 = vmatprep.subr.bf16.mxu0 %v703
    %951 = vmatpush1.bf16.msra.mxu0 %v702
    %952 = vmatprep.subr.bf16.mxu0 %v707
    %953 = vmatpush1.bf16.msra.mxu0 %v706
    %954 = vmatprep.subr.bf16.mxu0 %v711
    %955 = vmatpush1.bf16.msra.mxu0 %v710
    %956 = vmatprep.subr.bf16.mxu0 %v715
    %957 = vmatpush1.bf16.msra.mxu0 %v714
    %958 = vmatprep.subr.bf16.mxu0 %v719
    %959 = vmatpush1.bf16.msra.mxu0 %v718
    %960 = vmatprep.subr.bf16.mxu0 %v723
    %961 = vmatpush1.bf16.msra.mxu0 %v722
    %962 = vmatprep.subr.bf16.mxu0 %v727
    %963 = vmatpush1.bf16.msra.mxu0 %v726
    %964 = vmatprep.subr.bf16.mxu0 %v731
    %965 = vmatpush1.bf16.msra.mxu0 %v730
    %966 = vmatprep.subr.bf16.mxu0 %v735
    %967 = vmatpush1.bf16.msra.mxu0 %v734
    %968 = vmatprep.subr.bf16.mxu0 %v739
    %969 = vmatpush1.bf16.msra.mxu0 %v738
    %970 = vmatprep.subr.bf16.mxu0 %v743
    %971 = vmatpush1.bf16.msra.mxu0 %v742
    %972 = vmatprep.subr.bf16.mxu0 %v747
    %973 = vmatpush1.bf16.msra.mxu0 %v746
    %974 = vmatprep.mubr.bf16.mxu0 %v138
    %975 = vmatmul.mubr.bf16.gmra.mrb[0].mxu0 %v137
    %v976 = vpop.f32.mrb[0].mxu0
    %v977 = vadd.f32 %v285, %v976
    %v978 = vpop.f32.mrb[0].mxu0
    %v979 = vadd.f32 %v289, %v978
    %v980 = vpop.f32.mrb[0].mxu0
    %v981 = vadd.f32 %v285, %v980
    %v982 = vpop.f32.mrb[0].mxu0
    %v983 = vadd.f32 %v289, %v982
    %984 = vmatprep.mubr.bf16.mxu0 %v142
    %985 = vmatmul.mubr.bf16.gmra.mrb[0].mxu0 %v141
    %v986 = vpop.f32.mrb[0].mxu0
    %v987 = vadd.f32 %v285, %v986
    %v988 = vpop.f32.mrb[0].mxu0
    %v989 = vadd.f32 %v289, %v988
    %v990 = vpop.f32.mrb[0].mxu0
    %v991 = vadd.f32 %v285, %v990
    %v992 = vpop.f32.mrb[0].mxu0
    %v993 = vadd.f32 %v289, %v992
    %994 = vmatprep.mubr.bf16.mxu0 %v146
    %995 = vmatmul.mubr.bf16.gmra.mrb[0].mxu0 %v145
    %v996 = vpop.f32.mrb[0].mxu0
    %v997 = vadd.f32 %v285, %v996
    %v998 = vpop.f32.mrb[0].mxu0
    %v999 = vadd.f32 %v289, %v998
    %v1000 = vpop.f32.mrb[0].mxu0
    %v1001 = vadd.f32 %v285, %v1000
    %v1002 = vpop.f32.mrb[0].mxu0
    %v1003 = vadd.f32 %v289, %v1002
    %1004 = vmatprep.mubr.bf16.mxu0 %v150
    %1005 = vmatmul.mubr.bf16.gmra.mrb[0].mxu0 %v149
    %v1006 = vpop.f32.mrb[0].mxu0
    %v1007 = vadd.f32 %v285, %v1006
    %v1008 = vpop.f32.mrb[0].mxu0
    %v1009 = vadd.f32 %v289, %v1008
    %v1010 = vpop.f32.mrb[0].mxu0
    %v1011 = vadd.f32 %v285, %v1010
    %v1012 = vpop.f32.mrb[0].mxu0
    %v1013 = vadd.f32 %v289, %v1012
    %1014 = vdwg.mxu0
    %1015 = vmatprep.subr.bf16.mxu0 %v751
    %1016 = vmatpush1.bf16.msra.mxu0 %v750
    %1017 = vmatprep.subr.bf16.mxu0 %v755
    %1018 = vmatpush1.bf16.msra.mxu0 %v754
    %1019 = vmatprep.subr.bf16.mxu0 %v759
    %1020 = vmatpush1.bf16.msra.mxu0 %v758
    %1021 = vmatprep.subr.bf16.mxu0 %v763
    %1022 = vmatpush1.bf16.msra.mxu0 %v762
    %1023 = vmatprep.subr.bf16.mxu0 %v767
    %1024 = vmatpush1.bf16.msra.mxu0 %v766
    %1025 = vmatprep.subr.bf16.mxu0 %v771
    %1026 = vmatpush1.bf16.msra.mxu0 %v770
    %1027 = vmatprep.subr.bf16.mxu0 %v775
    %1028 = vmatpush1.bf16.msra.mxu0 %v774
    %1029 = vmatprep.subr.bf16.mxu0 %v779
    %1030 = vmatpush1.bf16.msra.mxu0 %v778
    %1031 = vmatprep.subr.bf16.mxu0 %v783
    %1032 = vmatpush1.bf16.msra.mxu0 %v782
    %1033 = vmatprep.subr.bf16.mxu0 %v787
    %1034 = vmatpush1.bf16.msra.mxu0 %v786
    %1035 = vmatprep.subr.bf16.mxu0 %v791
    %1036 = vmatpush1.bf16.msra.mxu0 %v790
    %1037 = vmatprep.subr.bf16.mxu0 %v795
    %1038 = vmatpush1.bf16.msra.mxu0 %v794
    %1039 = vmatprep.subr.bf16.mxu0 %v799
    %1040 = vmatpush1.bf16.msra.mxu0 %v798
    %1041 = vmatprep.subr.bf16.mxu0 %v803
    %1042 = vmatpush1.bf16.msra.mxu0 %v802
    %1043 = vmatprep.subr.bf16.mxu0 %v807
    %1044 = vmatpush1.bf16.msra.mxu0 %v806
    %1045 = vmatprep.subr.bf16.mxu0 %v811
    %1046 = vmatpush1.bf16.msra.mxu0 %v810
    %1047 = vmatprep.mubr.bf16.mxu0 %v140
    %1048 = vmatmul.mubr.bf16.gmra.mrb[0].mxu0 %v139
    %v1049 = vpop.f32.mrb[0].mxu0
    %v1050 = vadd.f32 %v977, %v1049
    %v1051 = vpop.f32.mrb[0].mxu0
    %v1052 = vadd.f32 %v979, %v1051
    %v1053 = vpop.f32.mrb[0].mxu0
    %v1054 = vadd.f32 %v981, %v1053
    %v1055 = vpop.f32.mrb[0].mxu0
    %v1056 = vadd.f32 %v983, %v1055
    %1057 = vmatprep.mubr.bf16.mxu0 %v144
    %1058 = vmatmul.mubr.bf16.gmra.mrb[0].mxu0 %v143
    %v1059 = vpop.f32.mrb[0].mxu0
    %v1060 = vadd.f32 %v987, %v1059
    %v1061 = vpop.f32.mrb[0].mxu0
    %v1062 = vadd.f32 %v989, %v1061
    %v1063 = vpop.f32.mrb[0].mxu0
    %v1064 = vadd.f32 %v991, %v1063
    %v1065 = vpop.f32.mrb[0].mxu0
    %v1066 = vadd.f32 %v993, %v1065
    %1067 = vmatprep.mubr.bf16.mxu0 %v148
    %1068 = vmatmul.mubr.bf16.gmra.mrb[0].mxu0 %v147
    %v1069 = vpop.f32.mrb[0].mxu0
    %v1070 = vadd.f32 %v997, %v1069
    %v1071 = vpop.f32.mrb[0].mxu0
    %v1072 = vadd.f32 %v999, %v1071
    %v1073 = vpop.f32.mrb[0].mxu0
    %v1074 = vadd.f32 %v1001, %v1073
    %v1075 = vpop.f32.mrb[0].mxu0
    %v1076 = vadd.f32 %v1003, %v1075
    %1077 = vmatprep.mubr.bf16.mxu0 %v152
    %1078 = vmatmul.mubr.bf16.gmra.mrb[0].mxu0 %v151
    %v1079 = vpop.f32.mrb[0].mxu0
    %v1080 = vadd.f32 %v1007, %v1079
    %v1081 = vpop.f32.mrb[0].mxu0
    %v1082 = vadd.f32 %v1009, %v1081
    %v1083 = vpop.f32.mrb[0].mxu0
    %v1084 = vadd.f32 %v1011, %v1083
    %v1085 = vpop.f32.mrb[0].mxu0
    %v1086 = vadd.f32 %v1013, %v1085
    %1087 = vdwg.mxu0
    %1088 = vmatprep.subr.bf16.mxu0 %v689
    %1089 = vmatpush1.bf16.msra.mxu0 %v688
    %1090 = vmatprep.subr.bf16.mxu0 %v693
    %1091 = vmatpush1.bf16.msra.mxu0 %v692
    %1092 = vmatprep.subr.bf16.mxu0 %v697
    %1093 = vmatpush1.bf16.msra.mxu0 %v696
    %1094 = vmatprep.subr.bf16.mxu0 %v701
    %1095 = vmatpush1.bf16.msra.mxu0 %v700
    %1096 = vmatprep.subr.bf16.mxu0 %v705
    %1097 = vmatpush1.bf16.msra.mxu0 %v704
    %1098 = vmatprep.subr.bf16.mxu0 %v709
    %1099 = vmatpush1.bf16.msra.mxu0 %v708
    %1100 = vmatprep.subr.bf16.mxu0 %v713
    %1101 = vmatpush1.bf16.msra.mxu0 %v712
    %1102 = vmatprep.subr.bf16.mxu0 %v717
    %1103 = vmatpush1.bf16.msra.mxu0 %v716
    %1104 = vmatprep.subr.bf16.mxu0 %v721
    %1105 = vmatpush1.bf16.msra.mxu0 %v720
    %1106 = vmatprep.subr.bf16.mxu0 %v725
    %1107 = vmatpush1.bf16.msra.mxu0 %v724
    %1108 = vmatprep.subr.bf16.mxu0 %v729
    %1109 = vmatpush1.bf16.msra.mxu0 %v728
    %1110 = vmatprep.subr.bf16.mxu0 %v733
    %1111 = vmatpush1.bf16.msra.mxu0 %v732
    %1112 = vmatprep.subr.bf16.mxu0 %v737
    %1113 = vmatpush1.bf16.msra.mxu0 %v736
    %1114 = vmatprep.subr.bf16.mxu0 %v741
    %1115 = vmatpush1.bf16.msra.mxu0 %v740
    %1116 = vmatprep.subr.bf16.mxu0 %v745
    %1117 = vmatpush1.bf16.msra.mxu0 %v744
    %1118 = vmatprep.subr.bf16.mxu0 %v749
    %1119 = vmatpush1.bf16.msra.mxu0 %v748
    %1120 = vmatprep.mubr.bf16.mxu0 %v138
    %1121 = vmatmul.mubr.bf16.gmra.mrb[0].mxu0 %v137
    %v1122 = vpop.f32.mrb[0].mxu0
    %v1123 = vadd.f32 %v293, %v1122
    %v1124 = vpop.f32.mrb[0].mxu0
    %v1125 = vadd.f32 %v297, %v1124
    %v1126 = vpop.f32.mrb[0].mxu0
    %v1127 = vadd.f32 %v293, %v1126
    %v1128 = vpop.f32.mrb[0].mxu0
    %v1129 = vadd.f32 %v297, %v1128
    %1130 = vmatprep.mubr.bf16.mxu0 %v142
    %1131 = vmatmul.mubr.bf16.gmra.mrb[0].mxu0 %v141
    %v1132 = vpop.f32.mrb[0].mxu0
    %v1133 = vadd.f32 %v293, %v1132
    %v1134 = vpop.f32.mrb[0].mxu0
    %v1135 = vadd.f32 %v297, %v1134
    %v1136 = vpop.f32.mrb[0].mxu0
    %v1137 = vadd.f32 %v293, %v1136
    %v1138 = vpop.f32.mrb[0].mxu0
    %v1139 = vadd.f32 %v297, %v1138
    %1140 = vmatprep.mubr.bf16.mxu0 %v146
    %1141 = vmatmul.mubr.bf16.gmra.mrb[0].mxu0 %v145
    %v1142 = vpop.f32.mrb[0].mxu0
    %v1143 = vadd.f32 %v293, %v1142
    %v1144 = vpop.f32.mrb[0].mxu0
    %v1145 = vadd.f32 %v297, %v1144
    %v1146 = vpop.f32.mrb[0].mxu0
    %v1147 = vadd.f32 %v293, %v1146
    %v1148 = vpop.f32.mrb[0].mxu0
    %v1149 = vadd.f32 %v297, %v1148
    %1150 = vmatprep.mubr.bf16.mxu0 %v150
    %1151 = vmatmul.mubr.bf16.gmra.mrb[0].mxu0 %v149
    %v1152 = vpop.f32.mrb[0].mxu0
    %v1153 = vadd.f32 %v293, %v1152
    %v1154 = vpop.f32.mrb[0].mxu0
    %v1155 = vadd.f32 %v297, %v1154
    %v1156 = vpop.f32.mrb[0].mxu0
    %v1157 = vadd.f32 %v293, %v1156
    %v1158 = vpop.f32.mrb[0].mxu0
    %v1159 = vadd.f32 %v297, %v1158
    %1160 = vdwg.mxu0
    %1161 = vmatprep.subr.bf16.mxu0 %v753
    %1162 = vmatpush1.bf16.msra.mxu0 %v752
    %1163 = vmatprep.subr.bf16.mxu0 %v757
    %1164 = vmatpush1.bf16.msra.mxu0 %v756
    %1165 = vmatprep.subr.bf16.mxu0 %v761
    %1166 = vmatpush1.bf16.msra.mxu0 %v760
    %1167 = vmatprep.subr.bf16.mxu0 %v765
    %1168 = vmatpush1.bf16.msra.mxu0 %v764
    %1169 = vmatprep.subr.bf16.mxu0 %v769
    %1170 = vmatpush1.bf16.msra.mxu0 %v768
    %1171 = vmatprep.subr.bf16.mxu0 %v773
    %1172 = vmatpush1.bf16.msra.mxu0 %v772
    %1173 = vmatprep.subr.bf16.mxu0 %v777
    %1174 = vmatpush1.bf16.msra.mxu0 %v776
    %1175 = vmatprep.subr.bf16.mxu0 %v781
    %1176 = vmatpush1.bf16.msra.mxu0 %v780
    %1177 = vmatprep.subr.bf16.mxu0 %v785
    %1178 = vmatpush1.bf16.msra.mxu0 %v784
    %1179 = vmatprep.subr.bf16.mxu0 %v789
    %1180 = vmatpush1.bf16.msra.mxu0 %v788
    %1181 = vmatprep.subr.bf16.mxu0 %v793
    %1182 = vmatpush1.bf16.msra.mxu0 %v792
    %1183 = vmatprep.subr.bf16.mxu0 %v797
    %1184 = vmatpush1.bf16.msra.mxu0 %v796
    %1185 = vmatprep.subr.bf16.mxu0 %v801
    %1186 = vmatpush1.bf16.msra.mxu0 %v800
    %1187 = vmatprep.subr.bf16.mxu0 %v805
    %1188 = vmatpush1.bf16.msra.mxu0 %v804
    %1189 = vmatprep.subr.bf16.mxu0 %v809
    %1190 = vmatpush1.bf16.msra.mxu0 %v808
    %1191 = vmatprep.subr.bf16.mxu0 %v813
    %1192 = vmatpush1.bf16.msra.mxu0 %v812
    %1193 = vmatprep.mubr.bf16.mxu0 %v140
    %1194 = vmatmul.mubr.bf16.gmra.mrb[0].mxu0 %v139
    %v1195 = vpop.f32.mrb[0].mxu0
    %v1196 = vadd.f32 %v1123, %v1195
    %v1197 = vpop.f32.mrb[0].mxu0
    %v1198 = vadd.f32 %v1125, %v1197
    %v1199 = vpop.f32.mrb[0].mxu0
    %v1200 = vadd.f32 %v1127, %v1199
    %v1201 = vpop.f32.mrb[0].mxu0
    %v1202 = vadd.f32 %v1129, %v1201
    %1203 = vmatprep.mubr.bf16.mxu0 %v144
    %1204 = vmatmul.mubr.bf16.gmra.mrb[0].mxu0 %v143
    %v1205 = vpop.f32.mrb[0].mxu0
    %v1206 = vadd.f32 %v1133, %v1205
    %v1207 = vpop.f32.mrb[0].mxu0
    %v1208 = vadd.f32 %v1135, %v1207
    %v1209 = vpop.f32.mrb[0].mxu0
    %v1210 = vadd.f32 %v1137, %v1209
    %v1211 = vpop.f32.mrb[0].mxu0
    %v1212 = vadd.f32 %v1139, %v1211
    %1213 = vmatprep.mubr.bf16.mxu0 %v148
    %1214 = vmatmul.mubr.bf16.gmra.mrb[0].mxu0 %v147
    %v1215 = vpop.f32.mrb[0].mxu0
    %v1216 = vadd.f32 %v1143, %v1215
    %v1217 = vpop.f32.mrb[0].mxu0
    %v1218 = vadd.f32 %v1145, %v1217
    %v1219 = vpop.f32.mrb[0].mxu0
    %v1220 = vadd.f32 %v1147, %v1219
    %v1221 = vpop.f32.mrb[0].mxu0
    %v1222 = vadd.f32 %v1149, %v1221
    %1223 = vmatprep.mubr.bf16.mxu0 %v152
    %1224 = vmatmul.mubr.bf16.gmra.mrb[0].mxu0 %v151
    %v1225 = vpop.f32.mrb[0].mxu0
    %v1226 = vadd.f32 %v1153, %v1225
    %v1227 = vpop.f32.mrb[0].mxu0
    %v1228 = vadd.f32 %v1155, %v1227
    %v1229 = vpop.f32.mrb[0].mxu0
    %v1230 = vadd.f32 %v1157, %v1229
    %v1231 = vpop.f32.mrb[0].mxu0
    %v1232 = vadd.f32 %v1159, %v1231
    %1233 = vdwg.mxu0
    %v1234 = vmax.f32 %v1050, 0.0
    %v1235 = vmax.f32 %v1052, 0.0
    %v1236 = vmax.f32 %v1196, 0.0
    %v1237 = vmax.f32 %v1198, 0.0
    %v1238 = vmax.f32 %v1054, 0.0
    %v1239 = vmax.f32 %v1056, 0.0
    %v1240 = vmax.f32 %v1200, 0.0
    %v1241 = vmax.f32 %v1202, 0.0
    %v1242 = vmax.f32 %v1060, 0.0
    %v1243 = vmax.f32 %v1062, 0.0
    %v1244 = vmax.f32 %v1206, 0.0
    %v1245 = vmax.f32 %v1208, 0.0
    %v1246 = vmax.f32 %v1064, 0.0
    %v1247 = vmax.f32 %v1066, 0.0
    %v1248 = vmax.f32 %v1210, 0.0
    %v1249 = vmax.f32 %v1212, 0.0
    %v1250 = vmax.f32 %v1070, 0.0
    %v1251 = vmax.f32 %v1072, 0.0
    %v1252 = vmax.f32 %v1216, 0.0
    %v1253 = vmax.f32 %v1218, 0.0
    %v1254 = vmax.f32 %v1074, 0.0
    %v1255 = vmax.f32 %v1076, 0.0
    %v1256 = vmax.f32 %v1220, 0.0
    %v1257 = vmax.f32 %v1222, 0.0
    %v1258 = vmax.f32 %v1080, 0.0
    %v1259 = vmax.f32 %v1082, 0.0
    %v1260 = vmax.f32 %v1226, 0.0
    %v1261 = vmax.f32 %v1228, 0.0
    %v1262 = vmax.f32 %v1084, 0.0
    %v1263 = vmax.f32 %v1086, 0.0
    %v1264 = vmax.f32 %v1230, 0.0
    %v1265 = vmax.f32 %v1232, 0.0
    %v1266 = vpack.c.bf16 %v1238, %v1234
    %v1267 = vpack.c.bf16 %v1239, %v1235
    %v1268 = vpack.c.bf16 %v1240, %v1236
    %v1269 = vpack.c.bf16 %v1241, %v1237
    %v1270 = vpack.c.bf16 %v1246, %v1242
    %v1271 = vpack.c.bf16 %v1247, %v1243
    %v1272 = vpack.c.bf16 %v1248, %v1244
    %v1273 = vpack.c.bf16 %v1249, %v1245
    %v1274 = vpack.c.bf16 %v1254, %v1250
    %v1275 = vpack.c.bf16 %v1255, %v1251
    %v1276 = vpack.c.bf16 %v1256, %v1252
    %v1277 = vpack.c.bf16 %v1257, %v1253
    %v1278 = vpack.c.bf16 %v1262, %v1258
    %v1279 = vpack.c.bf16 %v1263, %v1259
    %v1280 = vpack.c.bf16 %v1264, %v1260
    %v1281 = vpack.c.bf16 %v1265, %v1261
    %v1282 = vld [vmem:[#allocation8] sm:$0xff]
    %v1283 = vld [vmem:[#allocation8 + $0x8] sm:$0xff]
    %v1284 = vld [vmem:[#allocation8 + $0x10] sm:$0xff]
    %v1285 = vld [vmem:[#allocation8 + $0x18] sm:$0xff]
    %v1286 = vld [vmem:[#allocation8 + $0x20] sm:$0xff]
    %v1287 = vld [vmem:[#allocation8 + $0x28] sm:$0xff]
    %v1288 = vld [vmem:[#allocation8 + $0x30] sm:$0xff]
    %v1289 = vld [vmem:[#allocation8 + $0x38] sm:$0xff]
    %v1290 = vld [vmem:[#allocation8 + $0x40] sm:$0xff]
    %v1291 = vld [vmem:[#allocation8 + $0x48] sm:$0xff]
    %v1292 = vld [vmem:[#allocation8 + $0x50] sm:$0xff]
    %v1293 = vld [vmem:[#allocation8 + $0x58] sm:$0xff]
    %v1294 = vld [vmem:[#allocation8 + $0x60] sm:$0xff]
    %v1295 = vld [vmem:[#allocation8 + $0x68] sm:$0xff]
    %v1296 = vld [vmem:[#allocation8 + $0x70] sm:$0xff]
    %v1297 = vld [vmem:[#allocation8 + $0x78] sm:$0xff]
    %v1298 = vld [vmem:[#allocation8 + $0x80] sm:$0xff]
    %v1299 = vld [vmem:[#allocation8 + $0x88] sm:$0xff]
    %v1300 = vld [vmem:[#allocation8 + $0x90] sm:$0xff]
    %v1301 = vld [vmem:[#allocation8 + $0x98] sm:$0xff]
    %v1302 = vld [vmem:[#allocation8 + $0xa0] sm:$0xff]
    %v1303 = vld [vmem:[#allocation8 + $0xa8] sm:$0xff]
    %v1304 = vld [vmem:[#allocation8 + $0xb0] sm:$0xff]
    %v1305 = vld [vmem:[#allocation8 + $0xb8] sm:$0xff]
    %v1306 = vld [vmem:[#allocation8 + $0xc0] sm:$0xff]
    %v1307 = vld [vmem:[#allocation8 + $0xc8] sm:$0xff]
    %v1308 = vld [vmem:[#allocation8 + $0xd0] sm:$0xff]
    %v1309 = vld [vmem:[#allocation8 + $0xd8] sm:$0xff]
    %v1310 = vld [vmem:[#allocation8 + $0xe0] sm:$0xff]
    %v1311 = vld [vmem:[#allocation8 + $0xe8] sm:$0xff]
    %v1312 = vld [vmem:[#allocation8 + $0xf0] sm:$0xff]
    %v1313 = vld [vmem:[#allocation8 + $0xf8] sm:$0xff]
    %v1314 = vld [vmem:[#allocation8 + $0x100] sm:$0xff]
    %v1315 = vld [vmem:[#allocation8 + $0x108] sm:$0xff]
    %v1316 = vld [vmem:[#allocation8 + $0x110] sm:$0xff]
    %v1317 = vld [vmem:[#allocation8 + $0x118] sm:$0xff]
    %v1318 = vld [vmem:[#allocation8 + $0x120] sm:$0xff]
    %v1319 = vld [vmem:[#allocation8 + $0x128] sm:$0xff]
    %v1320 = vld [vmem:[#allocation8 + $0x130] sm:$0xff]
    %v1321 = vld [vmem:[#allocation8 + $0x138] sm:$0xff]
    %v1322 = vld [vmem:[#allocation8 + $0x140] sm:$0xff]
    %v1323 = vld [vmem:[#allocation8 + $0x148] sm:$0xff]
    %v1324 = vld [vmem:[#allocation8 + $0x150] sm:$0xff]
    %v1325 = vld [vmem:[#allocation8 + $0x158] sm:$0xff]
    %v1326 = vld [vmem:[#allocation8 + $0x160] sm:$0xff]
    %v1327 = vld [vmem:[#allocation8 + $0x168] sm:$0xff]
    %v1328 = vld [vmem:[#allocation8 + $0x170] sm:$0xff]
    %v1329 = vld [vmem:[#allocation8 + $0x178] sm:$0xff]
    %v1330 = vld [vmem:[#allocation8 + $0x180] sm:$0xff]
    %v1331 = vld [vmem:[#allocation8 + $0x188] sm:$0xff]
    %v1332 = vld [vmem:[#allocation8 + $0x190] sm:$0xff]
    %v1333 = vld [vmem:[#allocation8 + $0x198] sm:$0xff]
    %v1334 = vld [vmem:[#allocation8 + $0x1a0] sm:$0xff]
    %v1335 = vld [vmem:[#allocation8 + $0x1a8] sm:$0xff]
    %v1336 = vld [vmem:[#allocation8 + $0x1b0] sm:$0xff]
    %v1337 = vld [vmem:[#allocation8 + $0x1b8] sm:$0xff]
    %v1338 = vld [vmem:[#allocation8 + $0x1c0] sm:$0xff]
    %v1339 = vld [vmem:[#allocation8 + $0x1c8] sm:$0xff]
    %v1340 = vld [vmem:[#allocation8 + $0x1d0] sm:$0xff]
    %v1341 = vld [vmem:[#allocation8 + $0x1d8] sm:$0xff]
    %v1342 = vld [vmem:[#allocation8 + $0x1e0] sm:$0xff]
    %v1343 = vld [vmem:[#allocation8 + $0x1e8] sm:$0xff]
    %v1344 = vld [vmem:[#allocation8 + $0x1f0] sm:$0xff]
    %v1345 = vld [vmem:[#allocation8 + $0x1f8] sm:$0xff]
    %v1347 = vlaneseq
    %v1348 = vshrl.u32 %v1347, 7
    %v1349 = vsub.s32 0, %v1348
    %v1350 = vrot.slane %v103, %v1349
    %v1351 = vlaneseq
    %v1352 = vshrl.u32 %v1351, 7
    %v1353 = vsub.s32 1, %v1352
    %v1354 = vrot.slane %v103, %v1353
    %v1421 = vunpack.c.l.b16 %v1282
    %v1422 = vunpack.c.h.b16 %v1282
    %v1423 = vunpack.c.l.b16 %v1283
    %v1424 = vunpack.c.h.b16 %v1283
    %v1425 = vunpack.c.l.b16 %v1284
    %v1426 = vunpack.c.h.b16 %v1284
    %v1427 = vunpack.c.l.b16 %v1285
    %v1428 = vunpack.c.h.b16 %v1285
    %v1429 = vunpack.c.l.b16 %v1286
    %v1430 = vunpack.c.h.b16 %v1286
    %v1431 = vunpack.c.l.b16 %v1287
    %v1432 = vunpack.c.h.b16 %v1287
    %v1433 = vunpack.c.l.b16 %v1288
    %v1434 = vunpack.c.h.b16 %v1288
    %v1435 = vunpack.c.l.b16 %v1289
    %v1436 = vunpack.c.h.b16 %v1289
    %v1437 = vunpack.c.l.b16 %v1290
    %v1438 = vunpack.c.h.b16 %v1290
    %v1439 = vunpack.c.l.b16 %v1291
    %v1440 = vunpack.c.h.b16 %v1291
    %v1441 = vunpack.c.l.b16 %v1292
    %v1442 = vunpack.c.h.b16 %v1292
    %v1443 = vunpack.c.l.b16 %v1293
    %v1444 = vunpack.c.h.b16 %v1293
    %v1445 = vunpack.c.l.b16 %v1294
    %v1446 = vunpack.c.h.b16 %v1294
    %v1447 = vunpack.c.l.b16 %v1295
    %v1448 = vunpack.c.h.b16 %v1295
    %v1449 = vunpack.c.l.b16 %v1296
    %v1450 = vunpack.c.h.b16 %v1296
    %v1451 = vunpack.c.l.b16 %v1297
    %v1452 = vunpack.c.h.b16 %v1297
    %v1453 = vunpack.c.l.b16 %v1298
    %v1454 = vunpack.c.h.b16 %v1298
    %v1455 = vunpack.c.l.b16 %v1299
    %v1456 = vunpack.c.h.b16 %v1299
    %v1457 = vunpack.c.l.b16 %v1300
    %v1458 = vunpack.c.h.b16 %v1300
    %v1459 = vunpack.c.l.b16 %v1301
    %v1460 = vunpack.c.h.b16 %v1301
    %v1461 = vunpack.c.l.b16 %v1302
    %v1462 = vunpack.c.h.b16 %v1302
    %v1463 = vunpack.c.l.b16 %v1303
    %v1464 = vunpack.c.h.b16 %v1303
    %v1465 = vunpack.c.l.b16 %v1304
    %v1466 = vunpack.c.h.b16 %v1304
    %v1467 = vunpack.c.l.b16 %v1305
    %v1468 = vunpack.c.h.b16 %v1305
    %v1469 = vunpack.c.l.b16 %v1306
    %v1470 = vunpack.c.h.b16 %v1306
    %v1471 = vunpack.c.l.b16 %v1307
    %v1472 = vunpack.c.h.b16 %v1307
    %v1473 = vunpack.c.l.b16 %v1308
    %v1474 = vunpack.c.h.b16 %v1308
    %v1475 = vunpack.c.l.b16 %v1309
    %v1476 = vunpack.c.h.b16 %v1309
    %v1477 = vunpack.c.l.b16 %v1310
    %v1478 = vunpack.c.h.b16 %v1310
    %v1479 = vunpack.c.l.b16 %v1311
    %v1480 = vunpack.c.h.b16 %v1311
    %v1481 = vunpack.c.l.b16 %v1312
    %v1482 = vunpack.c.h.b16 %v1312
    %v1483 = vunpack.c.l.b16 %v1313
    %v1484 = vunpack.c.h.b16 %v1313
    %v1485 = vunpack.c.l.b16 %v1314
    %v1486 = vunpack.c.h.b16 %v1314
    %v1487 = vunpack.c.l.b16 %v1315
    %v1488 = vunpack.c.h.b16 %v1315
    %v1489 = vunpack.c.l.b16 %v1316
    %v1490 = vunpack.c.h.b16 %v1316
    %v1491 = vunpack.c.l.b16 %v1317
    %v1492 = vunpack.c.h.b16 %v1317
    %v1493 = vunpack.c.l.b16 %v1318
    %v1494 = vunpack.c.h.b16 %v1318
    %v1495 = vunpack.c.l.b16 %v1319
    %v1496 = vunpack.c.h.b16 %v1319
    %v1497 = vunpack.c.l.b16 %v1320
    %v1498 = vunpack.c.h.b16 %v1320
    %v1499 = vunpack.c.l.b16 %v1321
    %v1500 = vunpack.c.h.b16 %v1321
    %v1501 = vunpack.c.l.b16 %v1322
    %v1502 = vunpack.c.h.b16 %v1322
    %v1503 = vunpack.c.l.b16 %v1323
    %v1504 = vunpack.c.h.b16 %v1323
    %v1505 = vunpack.c.l.b16 %v1324
    %v1506 = vunpack.c.h.b16 %v1324
    %v1507 = vunpack.c.l.b16 %v1325
    %v1508 = vunpack.c.h.b16 %v1325
    %v1509 = vunpack.c.l.b16 %v1326
    %v1510 = vunpack.c.h.b16 %v1326
    %v1511 = vunpack.c.l.b16 %v1327
    %v1512 = vunpack.c.h.b16 %v1327
    %v1513 = vunpack.c.l.b16 %v1328
    %v1514 = vunpack.c.h.b16 %v1328
    %v1515 = vunpack.c.l.b16 %v1329
    %v1516 = vunpack.c.h.b16 %v1329
    %v1517 = vunpack.c.l.b16 %v1330
    %v1518 = vunpack.c.h.b16 %v1330
    %v1519 = vunpack.c.l.b16 %v1331
    %v1520 = vunpack.c.h.b16 %v1331
    %v1521 = vunpack.c.l.b16 %v1332
    %v1522 = vunpack.c.h.b16 %v1332
    %v1523 = vunpack.c.l.b16 %v1333
    %v1524 = vunpack.c.h.b16 %v1333
    %v1525 = vunpack.c.l.b16 %v1334
    %v1526 = vunpack.c.h.b16 %v1334
    %v1527 = vunpack.c.l.b16 %v1335
    %v1528 = vunpack.c.h.b16 %v1335
    %v1529 = vunpack.c.l.b16 %v1336
    %v1530 = vunpack.c.h.b16 %v1336
    %v1531 = vunpack.c.l.b16 %v1337
    %v1532 = vunpack.c.h.b16 %v1337
    %v1533 = vunpack.c.l.b16 %v1338
    %v1534 = vunpack.c.h.b16 %v1338
    %v1535 = vunpack.c.l.b16 %v1339
    %v1536 = vunpack.c.h.b16 %v1339
    %v1537 = vunpack.c.l.b16 %v1340
    %v1538 = vunpack.c.h.b16 %v1340
    %v1539 = vunpack.c.l.b16 %v1341
    %v1540 = vunpack.c.h.b16 %v1341
    %v1541 = vunpack.c.l.b16 %v1342
    %v1542 = vunpack.c.h.b16 %v1342
    %v1543 = vunpack.c.l.b16 %v1343
    %v1544 = vunpack.c.h.b16 %v1343
    %v1545 = vunpack.c.l.b16 %v1344
    %v1546 = vunpack.c.h.b16 %v1344
    %v1547 = vunpack.c.l.b16 %v1345
    %v1548 = vunpack.c.h.b16 %v1345
    %v1549 = vpack.c.b16 %v1423, %v1421
    %v1550 = vpack.c.b16 %v1424, %v1422
    %v1551 = vpack.c.b16 %v1427, %v1425
    %v1552 = vpack.c.b16 %v1428, %v1426
    %v1553 = vpack.c.b16 %v1431, %v1429
    %v1554 = vpack.c.b16 %v1432, %v1430
    %v1555 = vpack.c.b16 %v1435, %v1433
    %v1556 = vpack.c.b16 %v1436, %v1434
    %v1557 = vpack.c.b16 %v1439, %v1437
    %v1558 = vpack.c.b16 %v1440, %v1438
    %v1559 = vpack.c.b16 %v1443, %v1441
    %v1560 = vpack.c.b16 %v1444, %v1442
    %v1561 = vpack.c.b16 %v1447, %v1445
    %v1562 = vpack.c.b16 %v1448, %v1446
    %v1563 = vpack.c.b16 %v1451, %v1449
    %v1564 = vpack.c.b16 %v1452, %v1450
    %v1565 = vpack.c.b16 %v1455, %v1453
    %v1566 = vpack.c.b16 %v1456, %v1454
    %v1567 = vpack.c.b16 %v1459, %v1457
    %v1568 = vpack.c.b16 %v1460, %v1458
    %v1569 = vpack.c.b16 %v1463, %v1461
    %v1570 = vpack.c.b16 %v1464, %v1462
    %v1571 = vpack.c.b16 %v1467, %v1465
    %v1572 = vpack.c.b16 %v1468, %v1466
    %v1573 = vpack.c.b16 %v1471, %v1469
    %v1574 = vpack.c.b16 %v1472, %v1470
    %v1575 = vpack.c.b16 %v1475, %v1473
    %v1576 = vpack.c.b16 %v1476, %v1474
    %v1577 = vpack.c.b16 %v1479, %v1477
    %v1578 = vpack.c.b16 %v1480, %v1478
    %v1579 = vpack.c.b16 %v1483, %v1481
    %v1580 = vpack.c.b16 %v1484, %v1482
    %v1581 = vpack.c.b16 %v1487, %v1485
    %v1582 = vpack.c.b16 %v1488, %v1486
    %v1583 = vpack.c.b16 %v1491, %v1489
    %v1584 = vpack.c.b16 %v1492, %v1490
    %v1585 = vpack.c.b16 %v1495, %v1493
    %v1586 = vpack.c.b16 %v1496, %v1494
    %v1587 = vpack.c.b16 %v1499, %v1497
    %v1588 = vpack.c.b16 %v1500, %v1498
    %v1589 = vpack.c.b16 %v1503, %v1501
    %v1590 = vpack.c.b16 %v1504, %v1502
    %v1591 = vpack.c.b16 %v1507, %v1505
    %v1592 = vpack.c.b16 %v1508, %v1506
    %v1593 = vpack.c.b16 %v1511, %v1509
    %v1594 = vpack.c.b16 %v1512, %v1510
    %v1595 = vpack.c.b16 %v1515, %v1513
    %v1596 = vpack.c.b16 %v1516, %v1514
    %v1597 = vpack.c.b16 %v1519, %v1517
    %v1598 = vpack.c.b16 %v1520, %v1518
    %v1599 = vpack.c.b16 %v1523, %v1521
    %v1600 = vpack.c.b16 %v1524, %v1522
    %v1601 = vpack.c.b16 %v1527, %v1525
    %v1602 = vpack.c.b16 %v1528, %v1526
    %v1603 = vpack.c.b16 %v1531, %v1529
    %v1604 = vpack.c.b16 %v1532, %v1530
    %v1605 = vpack.c.b16 %v1535, %v1533
    %v1606 = vpack.c.b16 %v1536, %v1534
    %v1607 = vpack.c.b16 %v1539, %v1537
    %v1608 = vpack.c.b16 %v1540, %v1538
    %v1609 = vpack.c.b16 %v1543, %v1541
    %v1610 = vpack.c.b16 %v1544, %v1542
    %v1611 = vpack.c.b16 %v1547, %v1545
    %v1612 = vpack.c.b16 %v1548, %v1546
    %1677 = vmatprep.subr.bf16.mxu0 %v1550
    %1678 = vmatpush1.bf16.msra.mxu0 %v1549
    %1679 = vmatprep.subr.bf16.mxu0 %v1552
    %1680 = vmatpush1.bf16.msra.mxu0 %v1551
    %1681 = vmatprep.subr.bf16.mxu0 %v1554
    %1682 = vmatpush1.bf16.msra.mxu0 %v1553
    %1683 = vmatprep.subr.bf16.mxu0 %v1556
    %1684 = vmatpush1.bf16.msra.mxu0 %v1555
    %1685 = vmatprep.subr.bf16.mxu0 %v1558
    %1686 = vmatpush1.bf16.msra.mxu0 %v1557
    %1687 = vmatprep.subr.bf16.mxu0 %v1560
    %1688 = vmatpush1.bf16.msra.mxu0 %v1559
    %1689 = vmatprep.subr.bf16.mxu0 %v1562
    %1690 = vmatpush1.bf16.msra.mxu0 %v1561
    %1691 = vmatprep.subr.bf16.mxu0 %v1564
    %1692 = vmatpush1.bf16.msra.mxu0 %v1563
    %1693 = vmatprep.subr.bf16.mxu0 %v1566
    %1694 = vmatpush1.bf16.msra.mxu0 %v1565
    %1695 = vmatprep.subr.bf16.mxu0 %v1568
    %1696 = vmatpush1.bf16.msra.mxu0 %v1567
    %1697 = vmatprep.subr.bf16.mxu0 %v1570
    %1698 = vmatpush1.bf16.msra.mxu0 %v1569
    %1699 = vmatprep.subr.bf16.mxu0 %v1572
    %1700 = vmatpush1.bf16.msra.mxu0 %v1571
    %1701 = vmatprep.subr.bf16.mxu0 %v1574
    %1702 = vmatpush1.bf16.msra.mxu0 %v1573
    %1703 = vmatprep.subr.bf16.mxu0 %v1576
    %1704 = vmatpush1.bf16.msra.mxu0 %v1575
    %1705 = vmatprep.subr.bf16.mxu0 %v1578
    %1706 = vmatpush1.bf16.msra.mxu0 %v1577
    %1707 = vmatprep.subr.bf16.mxu0 %v1580
    %1708 = vmatpush1.bf16.msra.mxu0 %v1579
    %1709 = vmatprep.mubr.bf16.mxu0 %v1267
    %1710 = vmatmul.mubr.bf16.gmra.mrb[0].mxu0 %v1266
    %v1711 = vpop.f32.mrb[0].mxu0
    %v1712 = vadd.f32 %v1350, %v1711
    %v1713 = vpop.f32.mrb[0].mxu0
    %v1714 = vadd.f32 %v1354, %v1713
    %v1715 = vpop.f32.mrb[0].mxu0
    %v1716 = vadd.f32 %v1350, %v1715
    %v1717 = vpop.f32.mrb[0].mxu0
    %v1718 = vadd.f32 %v1354, %v1717
    %1719 = vmatprep.mubr.bf16.mxu0 %v1271
    %1720 = vmatmul.mubr.bf16.gmra.mrb[0].mxu0 %v1270
    %v1721 = vpop.f32.mrb[0].mxu0
    %v1722 = vadd.f32 %v1350, %v1721
    %v1723 = vpop.f32.mrb[0].mxu0
    %v1724 = vadd.f32 %v1354, %v1723
    %v1725 = vpop.f32.mrb[0].mxu0
    %v1726 = vadd.f32 %v1350, %v1725
    %v1727 = vpop.f32.mrb[0].mxu0
    %v1728 = vadd.f32 %v1354, %v1727
    %1729 = vmatprep.mubr.bf16.mxu0 %v1275
    %1730 = vmatmul.mubr.bf16.gmra.mrb[0].mxu0 %v1274
    %v1731 = vpop.f32.mrb[0].mxu0
    %v1732 = vadd.f32 %v1350, %v1731
    %v1733 = vpop.f32.mrb[0].mxu0
    %v1734 = vadd.f32 %v1354, %v1733
    %v1735 = vpop.f32.mrb[0].mxu0
    %v1736 = vadd.f32 %v1350, %v1735
    %v1737 = vpop.f32.mrb[0].mxu0
    %v1738 = vadd.f32 %v1354, %v1737
    %1739 = vmatprep.mubr.bf16.mxu0 %v1279
    %1740 = vmatmul.mubr.bf16.gmra.mrb[0].mxu0 %v1278
    %v1741 = vpop.f32.mrb[0].mxu0
    %v1742 = vadd.f32 %v1350, %v1741
    %v1743 = vpop.f32.mrb[0].mxu0
    %v1744 = vadd.f32 %v1354, %v1743
    %v1745 = vpop.f32.mrb[0].mxu0
    %v1746 = vadd.f32 %v1350, %v1745
    %v1747 = vpop.f32.mrb[0].mxu0
    %v1748 = vadd.f32 %v1354, %v1747
    %1749 = vdwg.mxu0
    %1750 = vmatprep.subr.bf16.mxu0 %v1582
    %1751 = vmatpush1.bf16.msra.mxu0 %v1581
    %1752 = vmatprep.subr.bf16.mxu0 %v1584
    %1753 = vmatpush1.bf16.msra.mxu0 %v1583
    %1754 = vmatprep.subr.bf16.mxu0 %v1586
    %1755 = vmatpush1.bf16.msra.mxu0 %v1585
    %1756 = vmatprep.subr.bf16.mxu0 %v1588
    %1757 = vmatpush1.bf16.msra.mxu0 %v1587
    %1758 = vmatprep.subr.bf16.mxu0 %v1590
    %1759 = vmatpush1.bf16.msra.mxu0 %v1589
    %1760 = vmatprep.subr.bf16.mxu0 %v1592
    %1761 = vmatpush1.bf16.msra.mxu0 %v1591
    %1762 = vmatprep.subr.bf16.mxu0 %v1594
    %1763 = vmatpush1.bf16.msra.mxu0 %v1593
    %1764 = vmatprep.subr.bf16.mxu0 %v1596
    %1765 = vmatpush1.bf16.msra.mxu0 %v1595
    %1766 = vmatprep.subr.bf16.mxu0 %v1598
    %1767 = vmatpush1.bf16.msra.mxu0 %v1597
    %1768 = vmatprep.subr.bf16.mxu0 %v1600
    %1769 = vmatpush1.bf16.msra.mxu0 %v1599
    %1770 = vmatprep.subr.bf16.mxu0 %v1602
    %1771 = vmatpush1.bf16.msra.mxu0 %v1601
    %1772 = vmatprep.subr.bf16.mxu0 %v1604
    %1773 = vmatpush1.bf16.msra.mxu0 %v1603
    %1774 = vmatprep.subr.bf16.mxu0 %v1606
    %1775 = vmatpush1.bf16.msra.mxu0 %v1605
    %1776 = vmatprep.subr.bf16.mxu0 %v1608
    %1777 = vmatpush1.bf16.msra.mxu0 %v1607
    %1778 = vmatprep.subr.bf16.mxu0 %v1610
    %1779 = vmatpush1.bf16.msra.mxu0 %v1609
    %1780 = vmatprep.subr.bf16.mxu0 %v1612
    %1781 = vmatpush1.bf16.msra.mxu0 %v1611
    %1782 = vmatprep.mubr.bf16.mxu0 %v1269
    %1783 = vmatmul.mubr.bf16.gmra.mrb[0].mxu0 %v1268
    %v1784 = vpop.f32.mrb[0].mxu0
    %v1785 = vadd.f32 %v1712, %v1784
    %v1786 = vpop.f32.mrb[0].mxu0
    %v1787 = vadd.f32 %v1714, %v1786
    %v1788 = vpop.f32.mrb[0].mxu0
    %v1789 = vadd.f32 %v1716, %v1788
    %v1790 = vpop.f32.mrb[0].mxu0
    %v1791 = vadd.f32 %v1718, %v1790
    %1792 = vmatprep.mubr.bf16.mxu0 %v1273
    %1793 = vmatmul.mubr.bf16.gmra.mrb[0].mxu0 %v1272
    %v1794 = vpop.f32.mrb[0].mxu0
    %v1795 = vadd.f32 %v1722, %v1794
    %v1796 = vpop.f32.mrb[0].mxu0
    %v1797 = vadd.f32 %v1724, %v1796
    %v1798 = vpop.f32.mrb[0].mxu0
    %v1799 = vadd.f32 %v1726, %v1798
    %v1800 = vpop.f32.mrb[0].mxu0
    %v1801 = vadd.f32 %v1728, %v1800
    %1802 = vmatprep.mubr.bf16.mxu0 %v1277
    %1803 = vmatmul.mubr.bf16.gmra.mrb[0].mxu0 %v1276
    %v1804 = vpop.f32.mrb[0].mxu0
    %v1805 = vadd.f32 %v1732, %v1804
    %v1806 = vpop.f32.mrb[0].mxu0
    %v1807 = vadd.f32 %v1734, %v1806
    %v1808 = vpop.f32.mrb[0].mxu0
    %v1809 = vadd.f32 %v1736, %v1808
    %v1810 = vpop.f32.mrb[0].mxu0
    %v1811 = vadd.f32 %v1738, %v1810
    %1812 = vmatprep.mubr.bf16.mxu0 %v1281
    %1813 = vmatmul.mubr.bf16.gmra.mrb[0].mxu0 %v1280
    %v1814 = vpop.f32.mrb[0].mxu0
    %v1815 = vadd.f32 %v1742, %v1814
    %v1816 = vpop.f32.mrb[0].mxu0
    %v1817 = vadd.f32 %v1744, %v1816
    %v1818 = vpop.f32.mrb[0].mxu0
    %v1819 = vadd.f32 %v1746, %v1818
    %v1820 = vpop.f32.mrb[0].mxu0
    %v1821 = vadd.f32 %v1748, %v1820
    %1822 = vdwg.mxu0
    %v1823 = vmax.f32 %v1785, 0.0
    %v1824 = vmax.f32 %v1787, 0.0
    %v1825 = vmax.f32 %v1789, 0.0
    %v1826 = vmax.f32 %v1791, 0.0
    %v1827 = vmax.f32 %v1795, 0.0
    %v1828 = vmax.f32 %v1797, 0.0
    %v1829 = vmax.f32 %v1799, 0.0
    %v1830 = vmax.f32 %v1801, 0.0
    %v1831 = vmax.f32 %v1805, 0.0
    %v1832 = vmax.f32 %v1807, 0.0
    %v1833 = vmax.f32 %v1809, 0.0
    %v1834 = vmax.f32 %v1811, 0.0
    %v1835 = vmax.f32 %v1815, 0.0
    %v1836 = vmax.f32 %v1817, 0.0
    %v1837 = vmax.f32 %v1819, 0.0
    %v1838 = vmax.f32 %v1821, 0.0
    %v1839 = vpack.c.bf16 %v1825, %v1823
    %v1840 = vpack.c.bf16 %v1826, %v1824
    %v1841 = vpack.c.bf16 %v1829, %v1827
    %v1842 = vpack.c.bf16 %v1830, %v1828
    %v1843 = vpack.c.bf16 %v1833, %v1831
    %v1844 = vpack.c.bf16 %v1834, %v1832
    %v1845 = vpack.c.bf16 %v1837, %v1835
    %v1846 = vpack.c.bf16 %v1838, %v1836
    %v1847 = vld [vmem:[#allocation10] sm:$0xf]
    %v1848 = vld [vmem:[#allocation10 + $0x4] sm:$0xf]
    %v1849 = vld [vmem:[#allocation10 + $0x8] sm:$0xf]
    %v1850 = vld [vmem:[#allocation10 + $0xc] sm:$0xf]
    %v1851 = vld [vmem:[#allocation10 + $0x10] sm:$0xf]
    %v1852 = vld [vmem:[#allocation10 + $0x14] sm:$0xf]
    %v1853 = vld [vmem:[#allocation10 + $0x18] sm:$0xf]
    %v1854 = vld [vmem:[#allocation10 + $0x1c] sm:$0xf]
    %v1855 = vld [vmem:[#allocation10 + $0x20] sm:$0xf]
    %v1856 = vld [vmem:[#allocation10 + $0x24] sm:$0xf]
    %v1857 = vld [vmem:[#allocation10 + $0x28] sm:$0xf]
    %v1858 = vld [vmem:[#allocation10 + $0x2c] sm:$0xf]
    %v1859 = vld [vmem:[#allocation10 + $0x30] sm:$0xf]
    %v1860 = vld [vmem:[#allocation10 + $0x34] sm:$0xf]
    %v1861 = vld [vmem:[#allocation10 + $0x38] sm:$0xf]
    %v1862 = vld [vmem:[#allocation10 + $0x3c] sm:$0xf]
    %v1863 = vld [vmem:[#allocation10 + $0x40] sm:$0xf]
    %v1864 = vld [vmem:[#allocation10 + $0x44] sm:$0xf]
    %v1865 = vld [vmem:[#allocation10 + $0x48] sm:$0xf]
    %v1866 = vld [vmem:[#allocation10 + $0x4c] sm:$0xf]
    %v1867 = vld [vmem:[#allocation10 + $0x50] sm:$0xf]
    %v1868 = vld [vmem:[#allocation10 + $0x54] sm:$0xf]
    %v1869 = vld [vmem:[#allocation10 + $0x58] sm:$0xf]
    %v1870 = vld [vmem:[#allocation10 + $0x5c] sm:$0xf]
    %v1871 = vld [vmem:[#allocation10 + $0x60] sm:$0xf]
    %v1872 = vld [vmem:[#allocation10 + $0x64] sm:$0xf]
    %v1873 = vld [vmem:[#allocation10 + $0x68] sm:$0xf]
    %v1874 = vld [vmem:[#allocation10 + $0x6c] sm:$0xf]
    %v1875 = vld [vmem:[#allocation10 + $0x70] sm:$0xf]
    %v1876 = vld [vmem:[#allocation10 + $0x74] sm:$0xf]
    %v1877 = vld [vmem:[#allocation10 + $0x78] sm:$0xf]
    %v1878 = vld [vmem:[#allocation10 + $0x7c] sm:$0xf]
    %v1880 = vlaneseq
    %v1881 = vshrl.u32 %v1880, 7
    %v1882 = vsub.s32 0, %v1881
    %v1883 = vrot.slane %v104, %v1882
    %v1917 = vunpack.c.l.b16 %v1847
    %v1918 = vunpack.c.l.b16 %v1848
    %v1919 = vunpack.c.l.b16 %v1849
    %v1920 = vunpack.c.l.b16 %v1850
    %v1921 = vunpack.c.l.b16 %v1851
    %v1922 = vunpack.c.l.b16 %v1852
    %v1923 = vunpack.c.l.b16 %v1853
    %v1924 = vunpack.c.l.b16 %v1854
    %v1925 = vunpack.c.l.b16 %v1855
    %v1926 = vunpack.c.l.b16 %v1856
    %v1927 = vunpack.c.l.b16 %v1857
    %v1928 = vunpack.c.l.b16 %v1858
    %v1929 = vunpack.c.l.b16 %v1859
    %v1930 = vunpack.c.l.b16 %v1860
    %v1931 = vunpack.c.l.b16 %v1861
    %v1932 = vunpack.c.l.b16 %v1862
    %v1933 = vunpack.c.l.b16 %v1863
    %v1934 = vunpack.c.l.b16 %v1864
    %v1935 = vunpack.c.l.b16 %v1865
    %v1936 = vunpack.c.l.b16 %v1866
    %v1937 = vunpack.c.l.b16 %v1867
    %v1938 = vunpack.c.l.b16 %v1868
    %v1939 = vunpack.c.l.b16 %v1869
    %v1940 = vunpack.c.l.b16 %v1870
    %v1941 = vunpack.c.l.b16 %v1871
    %v1942 = vunpack.c.l.b16 %v1872
    %v1943 = vunpack.c.l.b16 %v1873
    %v1944 = vunpack.c.l.b16 %v1874
    %v1945 = vunpack.c.l.b16 %v1875
    %v1946 = vunpack.c.l.b16 %v1876
    %v1947 = vunpack.c.l.b16 %v1877
    %v1948 = vunpack.c.l.b16 %v1878
    %v1949 = vpack.c.b16 %v1918, %v1917
    %v1950 = vpack.c.b16 %v1920, %v1919
    %v1951 = vpack.c.b16 %v1922, %v1921
    %v1952 = vpack.c.b16 %v1924, %v1923
    %v1953 = vpack.c.b16 %v1926, %v1925
    %v1954 = vpack.c.b16 %v1928, %v1927
    %v1955 = vpack.c.b16 %v1930, %v1929
    %v1956 = vpack.c.b16 %v1932, %v1931
    %v1957 = vpack.c.b16 %v1934, %v1933
    %v1958 = vpack.c.b16 %v1936, %v1935
    %v1959 = vpack.c.b16 %v1938, %v1937
    %v1960 = vpack.c.b16 %v1940, %v1939
    %v1961 = vpack.c.b16 %v1942, %v1941
    %v1962 = vpack.c.b16 %v1944, %v1943
    %v1963 = vpack.c.b16 %v1946, %v1945
    %v1964 = vpack.c.b16 %v1948, %v1947
    %1981 = vmatprep.subr.bf16.mxu0 0
    %1982 = vmatpush1.bf16.msra.mxu0 %v1949
    %1983 = vmatprep.subr.bf16.mxu0 0
    %1984 = vmatpush1.bf16.msra.mxu0 %v1950
    %1985 = vmatprep.subr.bf16.mxu0 0
    %1986 = vmatpush1.bf16.msra.mxu0 %v1951
    %1987 = vmatprep.subr.bf16.mxu0 0
    %1988 = vmatpush1.bf16.msra.mxu0 %v1952
    %1989 = vmatprep.subr.bf16.mxu0 0
    %1990 = vmatpush1.bf16.msra.mxu0 %v1953
    %1991 = vmatprep.subr.bf16.mxu0 0
    %1992 = vmatpush1.bf16.msra.mxu0 %v1954
    %1993 = vmatprep.subr.bf16.mxu0 0
    %1994 = vmatpush1.bf16.msra.mxu0 %v1955
    %1995 = vmatprep.subr.bf16.mxu0 0
    %1996 = vmatpush1.bf16.msra.mxu0 %v1956
    %1997 = vmatprep.subr.bf16.mxu0 0
    %1998 = vmatpush1.bf16.msra.mxu0 %v1957
    %1999 = vmatprep.subr.bf16.mxu0 0
    %2000 = vmatpush1.bf16.msra.mxu0 %v1958
    %2001 = vmatprep.subr.bf16.mxu0 0
    %2002 = vmatpush1.bf16.msra.mxu0 %v1959
    %2003 = vmatprep.subr.bf16.mxu0 0
    %2004 = vmatpush1.bf16.msra.mxu0 %v1960
    %2005 = vmatprep.subr.bf16.mxu0 0
    %2006 = vmatpush1.bf16.msra.mxu0 %v1961
    %2007 = vmatprep.subr.bf16.mxu0 0
    %2008 = vmatpush1.bf16.msra.mxu0 %v1962
    %2009 = vmatprep.subr.bf16.mxu0 0
    %2010 = vmatpush1.bf16.msra.mxu0 %v1963
    %2011 = vmatprep.subr.bf16.mxu0 0
    %2012 = vmatpush1.bf16.msra.mxu0 %v1964
    %2013 = vmatprep.mubr.bf16.mxu0 %v1840
    %2014 = vmatmul.mubr.bf16.gmra.mrb[0].mxu0 %v1839
    %v2015 = vpop.f32.mrb[0].mxu0
    %v2016 = vadd.f32 %v1883, %v2015
    %v2017 = vpop.f32.mrb[0].mxu0
    %v2018 = vpop.f32.mrb[0].mxu0
    %v2019 = vadd.f32 %v1883, %v2018
    %v2020 = vpop.f32.mrb[0].mxu0
    %2021 = vmatprep.mubr.bf16.mxu0 %v1842
    %2022 = vmatmul.mubr.bf16.gmra.mrb[0].mxu0 %v1841
    %v2023 = vpop.f32.mrb[0].mxu0
    %v2024 = vadd.f32 %v1883, %v2023
    %v2025 = vpop.f32.mrb[0].mxu0
    %v2026 = vpop.f32.mrb[0].mxu0
    %v2027 = vadd.f32 %v1883, %v2026
    %v2028 = vpop.f32.mrb[0].mxu0
    %2029 = vmatprep.mubr.bf16.mxu0 %v1844
    %2030 = vmatmul.mubr.bf16.gmra.mrb[0].mxu0 %v1843
    %v2031 = vpop.f32.mrb[0].mxu0
    %v2032 = vadd.f32 %v1883, %v2031
    %v2033 = vpop.f32.mrb[0].mxu0
    %v2034 = vpop.f32.mrb[0].mxu0
    %v2035 = vadd.f32 %v1883, %v2034
    %v2036 = vpop.f32.mrb[0].mxu0
    %2037 = vmatprep.mubr.bf16.mxu0 %v1846
    %2038 = vmatmul.mubr.bf16.gmra.mrb[0].mxu0 %v1845
    %v2039 = vpop.f32.mrb[0].mxu0
    %v2040 = vadd.f32 %v1883, %v2039
    %v2041 = vpop.f32.mrb[0].mxu0
    %v2042 = vpop.f32.mrb[0].mxu0
    %v2043 = vadd.f32 %v1883, %v2042
    %v2044 = vpop.f32.mrb[0].mxu0
    %2045 = vdwg.mxu0
    %v2046 = vmul.f32 %v2016, %v2016
    %v2047 = vmul.f32 %v2019, %v2019
    %v2048 = vmul.f32 %v2024, %v2024
    %v2049 = vmul.f32 %v2027, %v2027
    %v2050 = vmul.f32 %v2032, %v2032
    %v2051 = vmul.f32 %v2035, %v2035
    %v2052 = vmul.f32 %v2040, %v2040
    %v2053 = vmul.f32 %v2043, %v2043
    %2054 = vadd.xlane.f32.xlu0 %v2046
    %v2055 = vpop.xlane.xlu0 %2054
    %2056 = vadd.xlane.f32.xlu0 %v2047
    %v2057 = vpop.xlane.xlu0 %2056
    %2058 = vadd.xlane.f32.xlu0 %v2048
    %v2059 = vpop.xlane.xlu0 %2058
    %2060 = vadd.xlane.f32.xlu0 %v2049
    %v2061 = vpop.xlane.xlu0 %2060
    %2062 = vadd.xlane.f32.xlu0 %v2050
    %v2063 = vpop.xlane.xlu0 %2062
    %2064 = vadd.xlane.f32.xlu0 %v2051
    %v2065 = vpop.xlane.xlu0 %2064
    %2066 = vadd.xlane.f32.xlu0 %v2052
    %v2067 = vpop.xlane.xlu0 %2066
    %2068 = vadd.xlane.f32.xlu0 %v2053
    %v2069 = vpop.xlane.xlu0 %2068
    %v2070 = vmax.f32 %v2055, 1e-24
    %v2071 = vmax.f32 %v2057, 1e-24
    %v2072 = vmax.f32 %v2059, 1e-24
    %v2073 = vmax.f32 %v2061, 1e-24
    %v2074 = vmax.f32 %v2063, 1e-24
    %v2075 = vmax.f32 %v2065, 1e-24
    %v2076 = vmax.f32 %v2067, 1e-24
    %v2077 = vmax.f32 %v2069, 1e-24
    %v2078 = vrsqrt.pop %v2070
    %v2079 = vrsqrt.pop %v2071
    %v2080 = vrsqrt.pop %v2072
    %v2081 = vrsqrt.pop %v2073
    %v2082 = vrsqrt.pop %v2074
    %v2083 = vrsqrt.pop %v2075
    %v2084 = vrsqrt.pop %v2076
    %v2085 = vrsqrt.pop %v2077
    %v2086 = vmul.f32 %v2016, %v2078
    %v2087 = vmul.f32 %v2019, %v2079
    %v2088 = vmul.f32 %v2024, %v2080
    %v2089 = vmul.f32 %v2027, %v2081
    %v2090 = vmul.f32 %v2032, %v2082
    %v2091 = vmul.f32 %v2035, %v2083
    %v2092 = vmul.f32 %v2040, %v2084
    %v2093 = vmul.f32 %v2043, %v2085
    %2094 = vst [vmem:[#allocation11] sm:$0xff] %v2086
    %2095 = vst [vmem:[#allocation11 + $0x8] sm:$0xff] %v2087
    %2096 = vst [vmem:[#allocation11 + $0x10] sm:$0xff] %v2088
    %2097 = vst [vmem:[#allocation11 + $0x18] sm:$0xff] %v2089
    %2098 = vst [vmem:[#allocation11 + $0x20] sm:$0xff] %v2090
    %2099 = vst [vmem:[#allocation11 + $0x28] sm:$0xff] %v2091
    %2100 = vst [vmem:[#allocation11 + $0x30] sm:$0xff] %v2092
    %2101 = vst [vmem:[#allocation11 + $0x38] sm:$0xff] %v2093
    %v2102 = vld [vmem:[#allocation5] sm:$0xff]
    %v2103 = vld [vmem:[#allocation5 + $0x8] sm:$0xff]
    %v2104 = vld [vmem:[#allocation5 + $0x10] sm:$0xff]
    %v2105 = vld [vmem:[#allocation5 + $0x18] sm:$0xff]
    %v2106 = vld [vmem:[#allocation5 + $0x20] sm:$0xff]
    %v2107 = vld [vmem:[#allocation5 + $0x28] sm:$0xff]
    %v2108 = vld [vmem:[#allocation5 + $0x30] sm:$0xff]
    %v2109 = vld [vmem:[#allocation5 + $0x38] sm:$0xff]
    %v2110 = vld [vmem:[#allocation5 + $0x40] sm:$0xff]
    %v2111 = vld [vmem:[#allocation5 + $0x48] sm:$0xff]
    %v2112 = vld [vmem:[#allocation5 + $0x50] sm:$0xff]
    %v2113 = vld [vmem:[#allocation5 + $0x58] sm:$0xff]
    %v2114 = vld [vmem:[#allocation5 + $0x60] sm:$0xff]
    %v2115 = vld [vmem:[#allocation5 + $0x68] sm:$0xff]
    %v2116 = vld [vmem:[#allocation5 + $0x70] sm:$0xff]
    %v2117 = vld [vmem:[#allocation5 + $0x78] sm:$0xff]
    %v2118 = vld [vmem:[#allocation5 + $0x80] sm:$0xff]
    %v2119 = vld [vmem:[#allocation5 + $0x88] sm:$0xff]
    %v2120 = vld [vmem:[#allocation5 + $0x90] sm:$0xff]
    %v2121 = vld [vmem:[#allocation5 + $0x98] sm:$0xff]
    %v2122 = vld [vmem:[#allocation5 + $0xa0] sm:$0xff]
    %v2123 = vld [vmem:[#allocation5 + $0xa8] sm:$0xff]
    %v2124 = vld [vmem:[#allocation5 + $0xb0] sm:$0xff]
    %v2125 = vld [vmem:[#allocation5 + $0xb8] sm:$0xff]
    %v2126 = vld [vmem:[#allocation5 + $0xc0] sm:$0xff]
    %v2127 = vld [vmem:[#allocation5 + $0xc8] sm:$0xff]
    %v2128 = vld [vmem:[#allocation5 + $0xd0] sm:$0xff]
    %v2129 = vld [vmem:[#allocation5 + $0xd8] sm:$0xff]
    %v2130 = vld [vmem:[#allocation5 + $0xe0] sm:$0xff]
    %v2131 = vld [vmem:[#allocation5 + $0xe8] sm:$0xff]
    %v2132 = vld [vmem:[#allocation5 + $0xf0] sm:$0xff]
    %v2133 = vld [vmem:[#allocation5 + $0xf8] sm:$0xff]
    %v2134 = vpack.c.bf16 %v2106, %v2102
    %v2135 = vpack.c.bf16 %v2107, %v2103
    %v2136 = vpack.c.bf16 %v2108, %v2104
    %v2137 = vpack.c.bf16 %v2109, %v2105
    %v2138 = vpack.c.bf16 %v2114, %v2110
    %v2139 = vpack.c.bf16 %v2115, %v2111
    %v2140 = vpack.c.bf16 %v2116, %v2112
    %v2141 = vpack.c.bf16 %v2117, %v2113
    %v2142 = vpack.c.bf16 %v2122, %v2118
    %v2143 = vpack.c.bf16 %v2123, %v2119
    %v2144 = vpack.c.bf16 %v2124, %v2120
    %v2145 = vpack.c.bf16 %v2125, %v2121
    %v2146 = vpack.c.bf16 %v2130, %v2126
    %v2147 = vpack.c.bf16 %v2131, %v2127
    %v2148 = vpack.c.bf16 %v2132, %v2128
    %v2149 = vpack.c.bf16 %v2133, %v2129
    %v2150 = vld [vmem:[#allocation7] sm:$0xff]
    %v2151 = vld [vmem:[#allocation7 + $0x8] sm:$0xff]
    %v2152 = vld [vmem:[#allocation7 + $0x10] sm:$0xff]
    %v2153 = vld [vmem:[#allocation7 + $0x18] sm:$0xff]
    %v2154 = vld [vmem:[#allocation7 + $0x20] sm:$0xff]
    %v2155 = vld [vmem:[#allocation7 + $0x28] sm:$0xff]
    %v2156 = vld [vmem:[#allocation7 + $0x30] sm:$0xff]
    %v2157 = vld [vmem:[#allocation7 + $0x38] sm:$0xff]
    %v2158 = vld [vmem:[#allocation7 + $0x40] sm:$0xff]
    %v2159 = vld [vmem:[#allocation7 + $0x48] sm:$0xff]
    %v2160 = vld [vmem:[#allocation7 + $0x50] sm:$0xff]
    %v2161 = vld [vmem:[#allocation7 + $0x58] sm:$0xff]
    %v2162 = vld [vmem:[#allocation7 + $0x60] sm:$0xff]
    %v2163 = vld [vmem:[#allocation7 + $0x68] sm:$0xff]
    %v2164 = vld [vmem:[#allocation7 + $0x70] sm:$0xff]
    %v2165 = vld [vmem:[#allocation7 + $0x78] sm:$0xff]
    %v2166 = vld [vmem:[#allocation7 + $0x80] sm:$0xff]
    %v2167 = vld [vmem:[#allocation7 + $0x88] sm:$0xff]
    %v2168 = vld [vmem:[#allocation7 + $0x90] sm:$0xff]
    %v2169 = vld [vmem:[#allocation7 + $0x98] sm:$0xff]
    %v2170 = vld [vmem:[#allocation7 + $0xa0] sm:$0xff]
    %v2171 = vld [vmem:[#allocation7 + $0xa8] sm:$0xff]
    %v2172 = vld [vmem:[#allocation7 + $0xb0] sm:$0xff]
    %v2173 = vld [vmem:[#allocation7 + $0xb8] sm:$0xff]
    %v2174 = vld [vmem:[#allocation7 + $0xc0] sm:$0xff]
    %v2175 = vld [vmem:[#allocation7 + $0xc8] sm:$0xff]
    %v2176 = vld [vmem:[#allocation7 + $0xd0] sm:$0xff]
    %v2177 = vld [vmem:[#allocation7 + $0xd8] sm:$0xff]
    %v2178 = vld [vmem:[#allocation7 + $0xe0] sm:$0xff]
    %v2179 = vld [vmem:[#allocation7 + $0xe8] sm:$0xff]
    %v2180 = vld [vmem:[#allocation7 + $0xf0] sm:$0xff]
    %v2181 = vld [vmem:[#allocation7 + $0xf8] sm:$0xff]
    %v2182 = vld [vmem:[#allocation7 + $0x100] sm:$0xff]
    %v2183 = vld [vmem:[#allocation7 + $0x108] sm:$0xff]
    %v2184 = vld [vmem:[#allocation7 + $0x110] sm:$0xff]
    %v2185 = vld [vmem:[#allocation7 + $0x118] sm:$0xff]
    %v2186 = vld [vmem:[#allocation7 + $0x120] sm:$0xff]
    %v2187 = vld [vmem:[#allocation7 + $0x128] sm:$0xff]
    %v2188 = vld [vmem:[#allocation7 + $0x130] sm:$0xff]
    %v2189 = vld [vmem:[#allocation7 + $0x138] sm:$0xff]
    %v2190 = vld [vmem:[#allocation7 + $0x140] sm:$0xff]
    %v2191 = vld [vmem:[#allocation7 + $0x148] sm:$0xff]
    %v2192 = vld [vmem:[#allocation7 + $0x150] sm:$0xff]
    %v2193 = vld [vmem:[#allocation7 + $0x158] sm:$0xff]
    %v2194 = vld [vmem:[#allocation7 + $0x160] sm:$0xff]
    %v2195 = vld [vmem:[#allocation7 + $0x168] sm:$0xff]
    %v2196 = vld [vmem:[#allocation7 + $0x170] sm:$0xff]
    %v2197 = vld [vmem:[#allocation7 + $0x178] sm:$0xff]
    %v2198 = vld [vmem:[#allocation7 + $0x180] sm:$0xff]
    %v2199 = vld [vmem:[#allocation7 + $0x188] sm:$0xff]
    %v2200 = vld [vmem:[#allocation7 + $0x190] sm:$0xff]
    %v2201 = vld [vmem:[#allocation7 + $0x198] sm:$0xff]
    %v2202 = vld [vmem:[#allocation7 + $0x1a0] sm:$0xff]
    %v2203 = vld [vmem:[#allocation7 + $0x1a8] sm:$0xff]
    %v2204 = vld [vmem:[#allocation7 + $0x1b0] sm:$0xff]
    %v2205 = vld [vmem:[#allocation7 + $0x1b8] sm:$0xff]
    %v2206 = vld [vmem:[#allocation7 + $0x1c0] sm:$0xff]
    %v2207 = vld [vmem:[#allocation7 + $0x1c8] sm:$0xff]
    %v2208 = vld [vmem:[#allocation7 + $0x1d0] sm:$0xff]
    %v2209 = vld [vmem:[#allocation7 + $0x1d8] sm:$0xff]
    %v2210 = vld [vmem:[#allocation7 + $0x1e0] sm:$0xff]
    %v2211 = vld [vmem:[#allocation7 + $0x1e8] sm:$0xff]
    %v2212 = vld [vmem:[#allocation7 + $0x1f0] sm:$0xff]
    %v2213 = vld [vmem:[#allocation7 + $0x1f8] sm:$0xff]
    %v2214 = vld [vmem:[#allocation7 + $0x200] sm:$0xff]
    %v2215 = vld [vmem:[#allocation7 + $0x208] sm:$0xff]
    %v2216 = vld [vmem:[#allocation7 + $0x210] sm:$0xff]
    %v2217 = vld [vmem:[#allocation7 + $0x218] sm:$0xff]
    %v2218 = vld [vmem:[#allocation7 + $0x220] sm:$0xff]
    %v2219 = vld [vmem:[#allocation7 + $0x228] sm:$0xff]
    %v2220 = vld [vmem:[#allocation7 + $0x230] sm:$0xff]
    %v2221 = vld [vmem:[#allocation7 + $0x238] sm:$0xff]
    %v2222 = vld [vmem:[#allocation7 + $0x240] sm:$0xff]
    %v2223 = vld [vmem:[#allocation7 + $0x248] sm:$0xff]
    %v2224 = vld [vmem:[#allocation7 + $0x250] sm:$0xff]
    %v2225 = vld [vmem:[#allocation7 + $0x258] sm:$0xff]
    %v2226 = vld [vmem:[#allocation7 + $0x260] sm:$0xff]
    %v2227 = vld [vmem:[#allocation7 + $0x268] sm:$0xff]
    %v2228 = vld [vmem:[#allocation7 + $0x270] sm:$0xff]
    %v2229 = vld [vmem:[#allocation7 + $0x278] sm:$0xff]
    %v2230 = vld [vmem:[#allocation7 + $0x280] sm:$0xff]
    %v2231 = vld [vmem:[#allocation7 + $0x288] sm:$0xff]
    %v2232 = vld [vmem:[#allocation7 + $0x290] sm:$0xff]
    %v2233 = vld [vmem:[#allocation7 + $0x298] sm:$0xff]
    %v2234 = vld [vmem:[#allocation7 + $0x2a0] sm:$0xff]
    %v2235 = vld [vmem:[#allocation7 + $0x2a8] sm:$0xff]
    %v2236 = vld [vmem:[#allocation7 + $0x2b0] sm:$0xff]
    %v2237 = vld [vmem:[#allocation7 + $0x2b8] sm:$0xff]
    %v2238 = vld [vmem:[#allocation7 + $0x2c0] sm:$0xff]
    %v2239 = vld [vmem:[#allocation7 + $0x2c8] sm:$0xff]
    %v2240 = vld [vmem:[#allocation7 + $0x2d0] sm:$0xff]
    %v2241 = vld [vmem:[#allocation7 + $0x2d8] sm:$0xff]
    %v2242 = vld [vmem:[#allocation7 + $0x2e0] sm:$0xff]
    %v2243 = vld [vmem:[#allocation7 + $0x2e8] sm:$0xff]
    %v2244 = vld [vmem:[#allocation7 + $0x2f0] sm:$0xff]
    %v2245 = vld [vmem:[#allocation7 + $0x2f8] sm:$0xff]
    %v2246 = vld [vmem:[#allocation7 + $0x300] sm:$0xff]
    %v2247 = vld [vmem:[#allocation7 + $0x308] sm:$0xff]
    %v2248 = vld [vmem:[#allocation7 + $0x310] sm:$0xff]
    %v2249 = vld [vmem:[#allocation7 + $0x318] sm:$0xff]
    %v2250 = vld [vmem:[#allocation7 + $0x320] sm:$0xff]
    %v2251 = vld [vmem:[#allocation7 + $0x328] sm:$0xff]
    %v2252 = vld [vmem:[#allocation7 + $0x330] sm:$0xff]
    %v2253 = vld [vmem:[#allocation7 + $0x338] sm:$0xff]
    %v2254 = vld [vmem:[#allocation7 + $0x340] sm:$0xff]
    %v2255 = vld [vmem:[#allocation7 + $0x348] sm:$0xff]
    %v2256 = vld [vmem:[#allocation7 + $0x350] sm:$0xff]
    %v2257 = vld [vmem:[#allocation7 + $0x358] sm:$0xff]
    %v2258 = vld [vmem:[#allocation7 + $0x360] sm:$0xff]
    %v2259 = vld [vmem:[#allocation7 + $0x368] sm:$0xff]
    %v2260 = vld [vmem:[#allocation7 + $0x370] sm:$0xff]
    %v2261 = vld [vmem:[#allocation7 + $0x378] sm:$0xff]
    %v2262 = vld [vmem:[#allocation7 + $0x380] sm:$0xff]
    %v2263 = vld [vmem:[#allocation7 + $0x388] sm:$0xff]
    %v2264 = vld [vmem:[#allocation7 + $0x390] sm:$0xff]
    %v2265 = vld [vmem:[#allocation7 + $0x398] sm:$0xff]
    %v2266 = vld [vmem:[#allocation7 + $0x3a0] sm:$0xff]
    %v2267 = vld [vmem:[#allocation7 + $0x3a8] sm:$0xff]
    %v2268 = vld [vmem:[#allocation7 + $0x3b0] sm:$0xff]
    %v2269 = vld [vmem:[#allocation7 + $0x3b8] sm:$0xff]
    %v2270 = vld [vmem:[#allocation7 + $0x3c0] sm:$0xff]
    %v2271 = vld [vmem:[#allocation7 + $0x3c8] sm:$0xff]
    %v2272 = vld [vmem:[#allocation7 + $0x3d0] sm:$0xff]
    %v2273 = vld [vmem:[#allocation7 + $0x3d8] sm:$0xff]
    %v2274 = vld [vmem:[#allocation7 + $0x3e0] sm:$0xff]
    %v2275 = vld [vmem:[#allocation7 + $0x3e8] sm:$0xff]
    %v2276 = vld [vmem:[#allocation7 + $0x3f0] sm:$0xff]
    %v2277 = vld [vmem:[#allocation7 + $0x3f8] sm:$0xff]
    %v2406 = vunpack.c.l.b16 %v2150
    %v2407 = vunpack.c.h.b16 %v2150
    %v2408 = vunpack.c.l.b16 %v2151
    %v2409 = vunpack.c.h.b16 %v2151
    %v2410 = vunpack.c.l.b16 %v2152
    %v2411 = vunpack.c.h.b16 %v2152
    %v2412 = vunpack.c.l.b16 %v2153
    %v2413 = vunpack.c.h.b16 %v2153
    %v2414 = vunpack.c.l.b16 %v2154
    %v2415 = vunpack.c.h.b16 %v2154
    %v2416 = vunpack.c.l.b16 %v2155
    %v2417 = vunpack.c.h.b16 %v2155
    %v2418 = vunpack.c.l.b16 %v2156
    %v2419 = vunpack.c.h.b16 %v2156
    %v2420 = vunpack.c.l.b16 %v2157
    %v2421 = vunpack.c.h.b16 %v2157
    %v2422 = vunpack.c.l.b16 %v2158
    %v2423 = vunpack.c.h.b16 %v2158
    %v2424 = vunpack.c.l.b16 %v2159
    %v2425 = vunpack.c.h.b16 %v2159
    %v2426 = vunpack.c.l.b16 %v2160
    %v2427 = vunpack.c.h.b16 %v2160
    %v2428 = vunpack.c.l.b16 %v2161
    %v2429 = vunpack.c.h.b16 %v2161
    %v2430 = vunpack.c.l.b16 %v2162
    %v2431 = vunpack.c.h.b16 %v2162
    %v2432 = vunpack.c.l.b16 %v2163
    %v2433 = vunpack.c.h.b16 %v2163
    %v2434 = vunpack.c.l.b16 %v2164
    %v2435 = vunpack.c.h.b16 %v2164
    %v2436 = vunpack.c.l.b16 %v2165
    %v2437 = vunpack.c.h.b16 %v2165
    %v2438 = vunpack.c.l.b16 %v2166
    %v2439 = vunpack.c.h.b16 %v2166
    %v2440 = vunpack.c.l.b16 %v2167
    %v2441 = vunpack.c.h.b16 %v2167
    %v2442 = vunpack.c.l.b16 %v2168
    %v2443 = vunpack.c.h.b16 %v2168
    %v2444 = vunpack.c.l.b16 %v2169
    %v2445 = vunpack.c.h.b16 %v2169
    %v2446 = vunpack.c.l.b16 %v2170
    %v2447 = vunpack.c.h.b16 %v2170
    %v2448 = vunpack.c.l.b16 %v2171
    %v2449 = vunpack.c.h.b16 %v2171
    %v2450 = vunpack.c.l.b16 %v2172
    %v2451 = vunpack.c.h.b16 %v2172
    %v2452 = vunpack.c.l.b16 %v2173
    %v2453 = vunpack.c.h.b16 %v2173
    %v2454 = vunpack.c.l.b16 %v2174
    %v2455 = vunpack.c.h.b16 %v2174
    %v2456 = vunpack.c.l.b16 %v2175
    %v2457 = vunpack.c.h.b16 %v2175
    %v2458 = vunpack.c.l.b16 %v2176
    %v2459 = vunpack.c.h.b16 %v2176
    %v2460 = vunpack.c.l.b16 %v2177
    %v2461 = vunpack.c.h.b16 %v2177
    %v2462 = vunpack.c.l.b16 %v2178
    %v2463 = vunpack.c.h.b16 %v2178
    %v2464 = vunpack.c.l.b16 %v2179
    %v2465 = vunpack.c.h.b16 %v2179
    %v2466 = vunpack.c.l.b16 %v2180
    %v2467 = vunpack.c.h.b16 %v2180
    %v2468 = vunpack.c.l.b16 %v2181
    %v2469 = vunpack.c.h.b16 %v2181
    %v2470 = vunpack.c.l.b16 %v2182
    %v2471 = vunpack.c.h.b16 %v2182
    %v2472 = vunpack.c.l.b16 %v2183
    %v2473 = vunpack.c.h.b16 %v2183
    %v2474 = vunpack.c.l.b16 %v2184
    %v2475 = vunpack.c.h.b16 %v2184
    %v2476 = vunpack.c.l.b16 %v2185
    %v2477 = vunpack.c.h.b16 %v2185
    %v2478 = vunpack.c.l.b16 %v2186
    %v2479 = vunpack.c.h.b16 %v2186
    %v2480 = vunpack.c.l.b16 %v2187
    %v2481 = vunpack.c.h.b16 %v2187
    %v2482 = vunpack.c.l.b16 %v2188
    %v2483 = vunpack.c.h.b16 %v2188
    %v2484 = vunpack.c.l.b16 %v2189
    %v2485 = vunpack.c.h.b16 %v2189
    %v2486 = vunpack.c.l.b16 %v2190
    %v2487 = vunpack.c.h.b16 %v2190
    %v2488 = vunpack.c.l.b16 %v2191
    %v2489 = vunpack.c.h.b16 %v2191
    %v2490 = vunpack.c.l.b16 %v2192
    %v2491 = vunpack.c.h.b16 %v2192
    %v2492 = vunpack.c.l.b16 %v2193
    %v2493 = vunpack.c.h.b16 %v2193
    %v2494 = vunpack.c.l.b16 %v2194
    %v2495 = vunpack.c.h.b16 %v2194
    %v2496 = vunpack.c.l.b16 %v2195
    %v2497 = vunpack.c.h.b16 %v2195
    %v2498 = vunpack.c.l.b16 %v2196
    %v2499 = vunpack.c.h.b16 %v2196
    %v2500 = vunpack.c.l.b16 %v2197
    %v2501 = vunpack.c.h.b16 %v2197
    %v2502 = vunpack.c.l.b16 %v2198
    %v2503 = vunpack.c.h.b16 %v2198
    %v2504 = vunpack.c.l.b16 %v2199
    %v2505 = vunpack.c.h.b16 %v2199
    %v2506 = vunpack.c.l.b16 %v2200
    %v2507 = vunpack.c.h.b16 %v2200
    %v2508 = vunpack.c.l.b16 %v2201
    %v2509 = vunpack.c.h.b16 %v2201
    %v2510 = vunpack.c.l.b16 %v2202
    %v2511 = vunpack.c.h.b16 %v2202
    %v2512 = vunpack.c.l.b16 %v2203
    %v2513 = vunpack.c.h.b16 %v2203
    %v2514 = vunpack.c.l.b16 %v2204
    %v2515 = vunpack.c.h.b16 %v2204
    %v2516 = vunpack.c.l.b16 %v2205
    %v2517 = vunpack.c.h.b16 %v2205
    %v2518 = vunpack.c.l.b16 %v2206
    %v2519 = vunpack.c.h.b16 %v2206
    %v2520 = vunpack.c.l.b16 %v2207
    %v2521 = vunpack.c.h.b16 %v2207
    %v2522 = vunpack.c.l.b16 %v2208
    %v2523 = vunpack.c.h.b16 %v2208
    %v2524 = vunpack.c.l.b16 %v2209
    %v2525 = vunpack.c.h.b16 %v2209
    %v2526 = vunpack.c.l.b16 %v2210
    %v2527 = vunpack.c.h.b16 %v2210
    %v2528 = vunpack.c.l.b16 %v2211
    %v2529 = vunpack.c.h.b16 %v2211
    %v2530 = vunpack.c.l.b16 %v2212
    %v2531 = vunpack.c.h.b16 %v2212
    %v2532 = vunpack.c.l.b16 %v2213
    %v2533 = vunpack.c.h.b16 %v2213
    %v2534 = vunpack.c.l.b16 %v2214
    %v2535 = vunpack.c.h.b16 %v2214
    %v2536 = vunpack.c.l.b16 %v2215
    %v2537 = vunpack.c.h.b16 %v2215
    %v2538 = vunpack.c.l.b16 %v2216
    %v2539 = vunpack.c.h.b16 %v2216
    %v2540 = vunpack.c.l.b16 %v2217
    %v2541 = vunpack.c.h.b16 %v2217
    %v2542 = vunpack.c.l.b16 %v2218
    %v2543 = vunpack.c.h.b16 %v2218
    %v2544 = vunpack.c.l.b16 %v2219
    %v2545 = vunpack.c.h.b16 %v2219
    %v2546 = vunpack.c.l.b16 %v2220
    %v2547 = vunpack.c.h.b16 %v2220
    %v2548 = vunpack.c.l.b16 %v2221
    %v2549 = vunpack.c.h.b16 %v2221
    %v2550 = vunpack.c.l.b16 %v2222
    %v2551 = vunpack.c.h.b16 %v2222
    %v2552 = vunpack.c.l.b16 %v2223
    %v2553 = vunpack.c.h.b16 %v2223
    %v2554 = vunpack.c.l.b16 %v2224
    %v2555 = vunpack.c.h.b16 %v2224
    %v2556 = vunpack.c.l.b16 %v2225
    %v2557 = vunpack.c.h.b16 %v2225
    %v2558 = vunpack.c.l.b16 %v2226
    %v2559 = vunpack.c.h.b16 %v2226
    %v2560 = vunpack.c.l.b16 %v2227
    %v2561 = vunpack.c.h.b16 %v2227
    %v2562 = vunpack.c.l.b16 %v2228
    %v2563 = vunpack.c.h.b16 %v2228
    %v2564 = vunpack.c.l.b16 %v2229
    %v2565 = vunpack.c.h.b16 %v2229
    %v2566 = vunpack.c.l.b16 %v2230
    %v2567 = vunpack.c.h.b16 %v2230
    %v2568 = vunpack.c.l.b16 %v2231
    %v2569 = vunpack.c.h.b16 %v2231
    %v2570 = vunpack.c.l.b16 %v2232
    %v2571 = vunpack.c.h.b16 %v2232
    %v2572 = vunpack.c.l.b16 %v2233
    %v2573 = vunpack.c.h.b16 %v2233
    %v2574 = vunpack.c.l.b16 %v2234
    %v2575 = vunpack.c.h.b16 %v2234
    %v2576 = vunpack.c.l.b16 %v2235
    %v2577 = vunpack.c.h.b16 %v2235
    %v2578 = vunpack.c.l.b16 %v2236
    %v2579 = vunpack.c.h.b16 %v2236
    %v2580 = vunpack.c.l.b16 %v2237
    %v2581 = vunpack.c.h.b16 %v2237
    %v2582 = vunpack.c.l.b16 %v2238
    %v2583 = vunpack.c.h.b16 %v2238
    %v2584 = vunpack.c.l.b16 %v2239
    %v2585 = vunpack.c.h.b16 %v2239
    %v2586 = vunpack.c.l.b16 %v2240
    %v2587 = vunpack.c.h.b16 %v2240
    %v2588 = vunpack.c.l.b16 %v2241
    %v2589 = vunpack.c.h.b16 %v2241
    %v2590 = vunpack.c.l.b16 %v2242
    %v2591 = vunpack.c.h.b16 %v2242
    %v2592 = vunpack.c.l.b16 %v2243
    %v2593 = vunpack.c.h.b16 %v2243
    %v2594 = vunpack.c.l.b16 %v2244
    %v2595 = vunpack.c.h.b16 %v2244
    %v2596 = vunpack.c.l.b16 %v2245
    %v2597 = vunpack.c.h.b16 %v2245
    %v2598 = vunpack.c.l.b16 %v2246
    %v2599 = vunpack.c.h.b16 %v2246
    %v2600 = vunpack.c.l.b16 %v2247
    %v2601 = vunpack.c.h.b16 %v2247
    %v2602 = vunpack.c.l.b16 %v2248
    %v2603 = vunpack.c.h.b16 %v2248
    %v2604 = vunpack.c.l.b16 %v2249
    %v2605 = vunpack.c.h.b16 %v2249
    %v2606 = vunpack.c.l.b16 %v2250
    %v2607 = vunpack.c.h.b16 %v2250
    %v2608 = vunpack.c.l.b16 %v2251
    %v2609 = vunpack.c.h.b16 %v2251
    %v2610 = vunpack.c.l.b16 %v2252
    %v2611 = vunpack.c.h.b16 %v2252
    %v2612 = vunpack.c.l.b16 %v2253
    %v2613 = vunpack.c.h.b16 %v2253
    %v2614 = vunpack.c.l.b16 %v2254
    %v2615 = vunpack.c.h.b16 %v2254
    %v2616 = vunpack.c.l.b16 %v2255
    %v2617 = vunpack.c.h.b16 %v2255
    %v2618 = vunpack.c.l.b16 %v2256
    %v2619 = vunpack.c.h.b16 %v2256
    %v2620 = vunpack.c.l.b16 %v2257
    %v2621 = vunpack.c.h.b16 %v2257
    %v2622 = vunpack.c.l.b16 %v2258
    %v2623 = vunpack.c.h.b16 %v2258
    %v2624 = vunpack.c.l.b16 %v2259
    %v2625 = vunpack.c.h.b16 %v2259
    %v2626 = vunpack.c.l.b16 %v2260
    %v2627 = vunpack.c.h.b16 %v2260
    %v2628 = vunpack.c.l.b16 %v2261
    %v2629 = vunpack.c.h.b16 %v2261
    %v2630 = vunpack.c.l.b16 %v2262
    %v2631 = vunpack.c.h.b16 %v2262
    %v2632 = vunpack.c.l.b16 %v2263
    %v2633 = vunpack.c.h.b16 %v2263
    %v2634 = vunpack.c.l.b16 %v2264
    %v2635 = vunpack.c.h.b16 %v2264
    %v2636 = vunpack.c.l.b16 %v2265
    %v2637 = vunpack.c.h.b16 %v2265
    %v2638 = vunpack.c.l.b16 %v2266
    %v2639 = vunpack.c.h.b16 %v2266
    %v2640 = vunpack.c.l.b16 %v2267
    %v2641 = vunpack.c.h.b16 %v2267
    %v2642 = vunpack.c.l.b16 %v2268
    %v2643 = vunpack.c.h.b16 %v2268
    %v2644 = vunpack.c.l.b16 %v2269
    %v2645 = vunpack.c.h.b16 %v2269
    %v2646 = vunpack.c.l.b16 %v2270
    %v2647 = vunpack.c.h.b16 %v2270
    %v2648 = vunpack.c.l.b16 %v2271
    %v2649 = vunpack.c.h.b16 %v2271
    %v2650 = vunpack.c.l.b16 %v2272
    %v2651 = vunpack.c.h.b16 %v2272
    %v2652 = vunpack.c.l.b16 %v2273
    %v2653 = vunpack.c.h.b16 %v2273
    %v2654 = vunpack.c.l.b16 %v2274
    %v2655 = vunpack.c.h.b16 %v2274
    %v2656 = vunpack.c.l.b16 %v2275
    %v2657 = vunpack.c.h.b16 %v2275
    %v2658 = vunpack.c.l.b16 %v2276
    %v2659 = vunpack.c.h.b16 %v2276
    %v2660 = vunpack.c.l.b16 %v2277
    %v2661 = vunpack.c.h.b16 %v2277
    %v2662 = vpack.c.b16 %v2410, %v2406
    %v2663 = vpack.c.b16 %v2411, %v2407
    %v2664 = vpack.c.b16 %v2412, %v2408
    %v2665 = vpack.c.b16 %v2413, %v2409
    %v2666 = vpack.c.b16 %v2418, %v2414
    %v2667 = vpack.c.b16 %v2419, %v2415
    %v2668 = vpack.c.b16 %v2420, %v2416
    %v2669 = vpack.c.b16 %v2421, %v2417
    %v2670 = vpack.c.b16 %v2426, %v2422
    %v2671 = vpack.c.b16 %v2427, %v2423
    %v2672 = vpack.c.b16 %v2428, %v2424
    %v2673 = vpack.c.b16 %v2429, %v2425
    %v2674 = vpack.c.b16 %v2434, %v2430
    %v2675 = vpack.c.b16 %v2435, %v2431
    %v2676 = vpack.c.b16 %v2436, %v2432
    %v2677 = vpack.c.b16 %v2437, %v2433
    %v2678 = vpack.c.b16 %v2442, %v2438
    %v2679 = vpack.c.b16 %v2443, %v2439
    %v2680 = vpack.c.b16 %v2444, %v2440
    %v2681 = vpack.c.b16 %v2445, %v2441
    %v2682 = vpack.c.b16 %v2450, %v2446
    %v2683 = vpack.c.b16 %v2451, %v2447
    %v2684 = vpack.c.b16 %v2452, %v2448
    %v2685 = vpack.c.b16 %v2453, %v2449
    %v2686 = vpack.c.b16 %v2458, %v2454
    %v2687 = vpack.c.b16 %v2459, %v2455
    %v2688 = vpack.c.b16 %v2460, %v2456
    %v2689 = vpack.c.b16 %v2461, %v2457
    %v2690 = vpack.c.b16 %v2466, %v2462
    %v2691 = vpack.c.b16 %v2467, %v2463
    %v2692 = vpack.c.b16 %v2468, %v2464
    %v2693 = vpack.c.b16 %v2469, %v2465
    %v2694 = vpack.c.b16 %v2474, %v2470
    %v2695 = vpack.c.b16 %v2475, %v2471
    %v2696 = vpack.c.b16 %v2476, %v2472
    %v2697 = vpack.c.b16 %v2477, %v2473
    %v2698 = vpack.c.b16 %v2482, %v2478
    %v2699 = vpack.c.b16 %v2483, %v2479
    %v2700 = vpack.c.b16 %v2484, %v2480
    %v2701 = vpack.c.b16 %v2485, %v2481
    %v2702 = vpack.c.b16 %v2490, %v2486
    %v2703 = vpack.c.b16 %v2491, %v2487
    %v2704 = vpack.c.b16 %v2492, %v2488
    %v2705 = vpack.c.b16 %v2493, %v2489
    %v2706 = vpack.c.b16 %v2498, %v2494
    %v2707 = vpack.c.b16 %v2499, %v2495
    %v2708 = vpack.c.b16 %v2500, %v2496
    %v2709 = vpack.c.b16 %v2501, %v2497
    %v2710 = vpack.c.b16 %v2506, %v2502
    %v2711 = vpack.c.b16 %v2507, %v2503
    %v2712 = vpack.c.b16 %v2508, %v2504
    %v2713 = vpack.c.b16 %v2509, %v2505
    %v2714 = vpack.c.b16 %v2514, %v2510
    %v2715 = vpack.c.b16 %v2515, %v2511
    %v2716 = vpack.c.b16 %v2516, %v2512
    %v2717 = vpack.c.b16 %v2517, %v2513
    %v2718 = vpack.c.b16 %v2522, %v2518
    %v2719 = vpack.c.b16 %v2523, %v2519
    %v2720 = vpack.c.b16 %v2524, %v2520
    %v2721 = vpack.c.b16 %v2525, %v2521
    %v2722 = vpack.c.b16 %v2530, %v2526
    %v2723 = vpack.c.b16 %v2531, %v2527
    %v2724 = vpack.c.b16 %v2532, %v2528
    %v2725 = vpack.c.b16 %v2533, %v2529
    %v2726 = vpack.c.b16 %v2538, %v2534
    %v2727 = vpack.c.b16 %v2539, %v2535
    %v2728 = vpack.c.b16 %v2540, %v2536
    %v2729 = vpack.c.b16 %v2541, %v2537
    %v2730 = vpack.c.b16 %v2546, %v2542
    %v2731 = vpack.c.b16 %v2547, %v2543
    %v2732 = vpack.c.b16 %v2548, %v2544
    %v2733 = vpack.c.b16 %v2549, %v2545
    %v2734 = vpack.c.b16 %v2554, %v2550
    %v2735 = vpack.c.b16 %v2555, %v2551
    %v2736 = vpack.c.b16 %v2556, %v2552
    %v2737 = vpack.c.b16 %v2557, %v2553
    %v2738 = vpack.c.b16 %v2562, %v2558
    %v2739 = vpack.c.b16 %v2563, %v2559
    %v2740 = vpack.c.b16 %v2564, %v2560
    %v2741 = vpack.c.b16 %v2565, %v2561
    %v2742 = vpack.c.b16 %v2570, %v2566
    %v2743 = vpack.c.b16 %v2571, %v2567
    %v2744 = vpack.c.b16 %v2572, %v2568
    %v2745 = vpack.c.b16 %v2573, %v2569
    %v2746 = vpack.c.b16 %v2578, %v2574
    %v2747 = vpack.c.b16 %v2579, %v2575
    %v2748 = vpack.c.b16 %v2580, %v2576
    %v2749 = vpack.c.b16 %v2581, %v2577
    %v2750 = vpack.c.b16 %v2586, %v2582
    %v2751 = vpack.c.b16 %v2587, %v2583
    %v2752 = vpack.c.b16 %v2588, %v2584
    %v2753 = vpack.c.b16 %v2589, %v2585
    %v2754 = vpack.c.b16 %v2594, %v2590
    %v2755 = vpack.c.b16 %v2595, %v2591
    %v2756 = vpack.c.b16 %v2596, %v2592
    %v2757 = vpack.c.b16 %v2597, %v2593
    %v2758 = vpack.c.b16 %v2602, %v2598
    %v2759 = vpack.c.b16 %v2603, %v2599
    %v2760 = vpack.c.b16 %v2604, %v2600
    %v2761 = vpack.c.b16 %v2605, %v2601
    %v2762 = vpack.c.b16 %v2610, %v2606
    %v2763 = vpack.c.b16 %v2611, %v2607
    %v2764 = vpack.c.b16 %v2612, %v2608
    %v2765 = vpack.c.b16 %v2613, %v2609
    %v2766 = vpack.c.b16 %v2618, %v2614
    %v2767 = vpack.c.b16 %v2619, %v2615
    %v2768 = vpack.c.b16 %v2620, %v2616
    %v2769 = vpack.c.b16 %v2621, %v2617
    %v2770 = vpack.c.b16 %v2626, %v2622
    %v2771 = vpack.c.b16 %v2627, %v2623
    %v2772 = vpack.c.b16 %v2628, %v2624
    %v2773 = vpack.c.b16 %v2629, %v2625
    %v2774 = vpack.c.b16 %v2634, %v2630
    %v2775 = vpack.c.b16 %v2635, %v2631
    %v2776 = vpack.c.b16 %v2636, %v2632
    %v2777 = vpack.c.b16 %v2637, %v2633
    %v2778 = vpack.c.b16 %v2642, %v2638
    %v2779 = vpack.c.b16 %v2643, %v2639
    %v2780 = vpack.c.b16 %v2644, %v2640
    %v2781 = vpack.c.b16 %v2645, %v2641
    %v2782 = vpack.c.b16 %v2650, %v2646
    %v2783 = vpack.c.b16 %v2651, %v2647
    %v2784 = vpack.c.b16 %v2652, %v2648
    %v2785 = vpack.c.b16 %v2653, %v2649
    %v2786 = vpack.c.b16 %v2658, %v2654
    %v2787 = vpack.c.b16 %v2659, %v2655
    %v2788 = vpack.c.b16 %v2660, %v2656
    %v2789 = vpack.c.b16 %v2661, %v2657
    %2918 = vmatprep.subr.bf16.mxu0 %v2663
    %2919 = vmatpush1.bf16.msra.mxu0 %v2662
    %2920 = vmatprep.subr.bf16.mxu0 %v2667
    %2921 = vmatpush1.bf16.msra.mxu0 %v2666
    %2922 = vmatprep.subr.bf16.mxu0 %v2671
    %2923 = vmatpush1.bf16.msra.mxu0 %v2670
    %2924 = vmatprep.subr.bf16.mxu0 %v2675
    %2925 = vmatpush1.bf16.msra.mxu0 %v2674
    %2926 = vmatprep.subr.bf16.mxu0 %v2679
    %2927 = vmatpush1.bf16.msra.mxu0 %v2678
    %2928 = vmatprep.subr.bf16.mxu0 %v2683
    %2929 = vmatpush1.bf16.msra.mxu0 %v2682
    %2930 = vmatprep.subr.bf16.mxu0 %v2687
    %2931 = vmatpush1.bf16.msra.mxu0 %v2686
    %2932 = vmatprep.subr.bf16.mxu0 %v2691
    %2933 = vmatpush1.bf16.msra.mxu0 %v2690
    %2934 = vmatprep.subr.bf16.mxu0 %v2695
    %2935 = vmatpush1.bf16.msra.mxu0 %v2694
    %2936 = vmatprep.subr.bf16.mxu0 %v2699
    %2937 = vmatpush1.bf16.msra.mxu0 %v2698
    %2938 = vmatprep.subr.bf16.mxu0 %v2703
    %2939 = vmatpush1.bf16.msra.mxu0 %v2702
    %2940 = vmatprep.subr.bf16.mxu0 %v2707
    %2941 = vmatpush1.bf16.msra.mxu0 %v2706
    %2942 = vmatprep.subr.bf16.mxu0 %v2711
    %2943 = vmatpush1.bf16.msra.mxu0 %v2710
    %2944 = vmatprep.subr.bf16.mxu0 %v2715
    %2945 = vmatpush1.bf16.msra.mxu0 %v2714
    %2946 = vmatprep.subr.bf16.mxu0 %v2719
    %2947 = vmatpush1.bf16.msra.mxu0 %v2718
    %2948 = vmatprep.subr.bf16.mxu0 %v2723
    %2949 = vmatpush1.bf16.msra.mxu0 %v2722
    %2950 = vmatprep.mubr.bf16.mxu0 %v2135
    %2951 = vmatmul.mubr.bf16.gmra.mrb[0].mxu0 %v2134
    %v2952 = vpop.f32.mrb[0].mxu0
    %v2953 = vadd.f32 %v285, %v2952
    %v2954 = vpop.f32.mrb[0].mxu0
    %v2955 = vadd.f32 %v289, %v2954
    %v2956 = vpop.f32.mrb[0].mxu0
    %v2957 = vadd.f32 %v285, %v2956
    %v2958 = vpop.f32.mrb[0].mxu0
    %v2959 = vadd.f32 %v289, %v2958
    %2960 = vmatprep.mubr.bf16.mxu0 %v2139
    %2961 = vmatmul.mubr.bf16.gmra.mrb[0].mxu0 %v2138
    %v2962 = vpop.f32.mrb[0].mxu0
    %v2963 = vadd.f32 %v285, %v2962
    %v2964 = vpop.f32.mrb[0].mxu0
    %v2965 = vadd.f32 %v289, %v2964
    %v2966 = vpop.f32.mrb[0].mxu0
    %v2967 = vadd.f32 %v285, %v2966
    %v2968 = vpop.f32.mrb[0].mxu0
    %v2969 = vadd.f32 %v289, %v2968
    %2970 = vmatprep.mubr.bf16.mxu0 %v2143
    %2971 = vmatmul.mubr.bf16.gmra.mrb[0].mxu0 %v2142
    %v2972 = vpop.f32.mrb[0].mxu0
    %v2973 = vadd.f32 %v285, %v2972
    %v2974 = vpop.f32.mrb[0].mxu0
    %v2975 = vadd.f32 %v289, %v2974
    %v2976 = vpop.f32.mrb[0].mxu0
    %v2977 = vadd.f32 %v285, %v2976
    %v2978 = vpop.f32.mrb[0].mxu0
    %v2979 = vadd.f32 %v289, %v2978
    %2980 = vmatprep.mubr.bf16.mxu0 %v2147
    %2981 = vmatmul.mubr.bf16.gmra.mrb[0].mxu0 %v2146
    %v2982 = vpop.f32.mrb[0].mxu0
    %v2983 = vadd.f32 %v285, %v2982
    %v2984 = vpop.f32.mrb[0].mxu0
    %v2985 = vadd.f32 %v289, %v2984
    %v2986 = vpop.f32.mrb[0].mxu0
    %v2987 = vadd.f32 %v285, %v2986
    %v2988 = vpop.f32.mrb[0].mxu0
    %v2989 = vadd.f32 %v289, %v2988
    %2990 = vdwg.mxu0
    %2991 = vmatprep.subr.bf16.mxu0 %v2727
    %2992 = vmatpush1.bf16.msra.mxu0 %v2726
    %2993 = vmatprep.subr.bf16.mxu0 %v2731
    %2994 = vmatpush1.bf16.msra.mxu0 %v2730
    %2995 = vmatprep.subr.bf16.mxu0 %v2735
    %2996 = vmatpush1.bf16.msra.mxu0 %v2734
    %2997 = vmatprep.subr.bf16.mxu0 %v2739
    %2998 = vmatpush1.bf16.msra.mxu0 %v2738
    %2999 = vmatprep.subr.bf16.mxu0 %v2743
    %3000 = vmatpush1.bf16.msra.mxu0 %v2742
    %3001 = vmatprep.subr.bf16.mxu0 %v2747
    %3002 = vmatpush1.bf16.msra.mxu0 %v2746
    %3003 = vmatprep.subr.bf16.mxu0 %v2751
    %3004 = vmatpush1.bf16.msra.mxu0 %v2750
    %3005 = vmatprep.subr.bf16.mxu0 %v2755
    %3006 = vmatpush1.bf16.msra.mxu0 %v2754
    %3007 = vmatprep.subr.bf16.mxu0 %v2759
    %3008 = vmatpush1.bf16.msra.mxu0 %v2758
    %3009 = vmatprep.subr.bf16.mxu0 %v2763
    %3010 = vmatpush1.bf16.msra.mxu0 %v2762
    %3011 = vmatprep.subr.bf16.mxu0 %v2767
    %3012 = vmatpush1.bf16.msra.mxu0 %v2766
    %3013 = vmatprep.subr.bf16.mxu0 %v2771
    %3014 = vmatpush1.bf16.msra.mxu0 %v2770
    %3015 = vmatprep.subr.bf16.mxu0 %v2775
    %3016 = vmatpush1.bf16.msra.mxu0 %v2774
    %3017 = vmatprep.subr.bf16.mxu0 %v2779
    %3018 = vmatpush1.bf16.msra.mxu0 %v2778
    %3019 = vmatprep.subr.bf16.mxu0 %v2783
    %3020 = vmatpush1.bf16.msra.mxu0 %v2782
    %3021 = vmatprep.subr.bf16.mxu0 %v2787
    %3022 = vmatpush1.bf16.msra.mxu0 %v2786
    %3023 = vmatprep.mubr.bf16.mxu0 %v2137
    %3024 = vmatmul.mubr.bf16.gmra.mrb[0].mxu0 %v2136
    %v3025 = vpop.f32.mrb[0].mxu0
    %v3026 = vadd.f32 %v2953, %v3025
    %v3027 = vpop.f32.mrb[0].mxu0
    %v3028 = vadd.f32 %v2955, %v3027
    %v3029 = vpop.f32.mrb[0].mxu0
    %v3030 = vadd.f32 %v2957, %v3029
    %v3031 = vpop.f32.mrb[0].mxu0
    %v3032 = vadd.f32 %v2959, %v3031
    %3033 = vmatprep.mubr.bf16.mxu0 %v2141
    %3034 = vmatmul.mubr.bf16.gmra.mrb[0].mxu0 %v2140
    %v3035 = vpop.f32.mrb[0].mxu0
    %v3036 = vadd.f32 %v2963, %v3035
    %v3037 = vpop.f32.mrb[0].mxu0
    %v3038 = vadd.f32 %v2965, %v3037
    %v3039 = vpop.f32.mrb[0].mxu0
    %v3040 = vadd.f32 %v2967, %v3039
    %v3041 = vpop.f32.mrb[0].mxu0
    %v3042 = vadd.f32 %v2969, %v3041
    %3043 = vmatprep.mubr.bf16.mxu0 %v2145
    %3044 = vmatmul.mubr.bf16.gmra.mrb[0].mxu0 %v2144
    %v3045 = vpop.f32.mrb[0].mxu0
    %v3046 = vadd.f32 %v2973, %v3045
    %v3047 = vpop.f32.mrb[0].mxu0
    %v3048 = vadd.f32 %v2975, %v3047
    %v3049 = vpop.f32.mrb[0].mxu0
    %v3050 = vadd.f32 %v2977, %v3049
    %v3051 = vpop.f32.mrb[0].mxu0
    %v3052 = vadd.f32 %v2979, %v3051
    %3053 = vmatprep.mubr.bf16.mxu0 %v2149
    %3054 = vmatmul.mubr.bf16.gmra.mrb[0].mxu0 %v2148
    %v3055 = vpop.f32.mrb[0].mxu0
    %v3056 = vadd.f32 %v2983, %v3055
    %v3057 = vpop.f32.mrb[0].mxu0
    %v3058 = vadd.f32 %v2985, %v3057
    %v3059 = vpop.f32.mrb[0].mxu0
    %v3060 = vadd.f32 %v2987, %v3059
    %v3061 = vpop.f32.mrb[0].mxu0
    %v3062 = vadd.f32 %v2989, %v3061
    %3063 = vdwg.mxu0
    %3064 = vmatprep.subr.bf16.mxu0 %v2665
    %3065 = vmatpush1.bf16.msra.mxu0 %v2664
    %3066 = vmatprep.subr.bf16.mxu0 %v2669
    %3067 = vmatpush1.bf16.msra.mxu0 %v2668
    %3068 = vmatprep.subr.bf16.mxu0 %v2673
    %3069 = vmatpush1.bf16.msra.mxu0 %v2672
    %3070 = vmatprep.subr.bf16.mxu0 %v2677
    %3071 = vmatpush1.bf16.msra.mxu0 %v2676
    %3072 = vmatprep.subr.bf16.mxu0 %v2681
    %3073 = vmatpush1.bf16.msra.mxu0 %v2680
    %3074 = vmatprep.subr.bf16.mxu0 %v2685
    %3075 = vmatpush1.bf16.msra.mxu0 %v2684
    %3076 = vmatprep.subr.bf16.mxu0 %v2689
    %3077 = vmatpush1.bf16.msra.mxu0 %v2688
    %3078 = vmatprep.subr.bf16.mxu0 %v2693
    %3079 = vmatpush1.bf16.msra.mxu0 %v2692
    %3080 = vmatprep.subr.bf16.mxu0 %v2697
    %3081 = vmatpush1.bf16.msra.mxu0 %v2696
    %3082 = vmatprep.subr.bf16.mxu0 %v2701
    %3083 = vmatpush1.bf16.msra.mxu0 %v2700
    %3084 = vmatprep.subr.bf16.mxu0 %v2705
    %3085 = vmatpush1.bf16.msra.mxu0 %v2704
    %3086 = vmatprep.subr.bf16.mxu0 %v2709
    %3087 = vmatpush1.bf16.msra.mxu0 %v2708
    %3088 = vmatprep.subr.bf16.mxu0 %v2713
    %3089 = vmatpush1.bf16.msra.mxu0 %v2712
    %3090 = vmatprep.subr.bf16.mxu0 %v2717
    %3091 = vmatpush1.bf16.msra.mxu0 %v2716
    %3092 = vmatprep.subr.bf16.mxu0 %v2721
    %3093 = vmatpush1.bf16.msra.mxu0 %v2720
    %3094 = vmatprep.subr.bf16.mxu0 %v2725
    %3095 = vmatpush1.bf16.msra.mxu0 %v2724
    %3096 = vmatprep.mubr.bf16.mxu0 %v2135
    %3097 = vmatmul.mubr.bf16.gmra.mrb[0].mxu0 %v2134
    %v3098 = vpop.f32.mrb[0].mxu0
    %v3099 = vadd.f32 %v293, %v3098
    %v3100 = vpop.f32.mrb[0].mxu0
    %v3101 = vadd.f32 %v297, %v3100
    %v3102 = vpop.f32.mrb[0].mxu0
    %v3103 = vadd.f32 %v293, %v3102
    %v3104 = vpop.f32.mrb[0].mxu0
    %v3105 = vadd.f32 %v297, %v3104
    %3106 = vmatprep.mubr.bf16.mxu0 %v2139
    %3107 = vmatmul.mubr.bf16.gmra.mrb[0].mxu0 %v2138
    %v3108 = vpop.f32.mrb[0].mxu0
    %v3109 = vadd.f32 %v293, %v3108
    %v3110 = vpop.f32.mrb[0].mxu0
    %v3111 = vadd.f32 %v297, %v3110
    %v3112 = vpop.f32.mrb[0].mxu0
    %v3113 = vadd.f32 %v293, %v3112
    %v3114 = vpop.f32.mrb[0].mxu0
    %v3115 = vadd.f32 %v297, %v3114
    %3116 = vmatprep.mubr.bf16.mxu0 %v2143
    %3117 = vmatmul.mubr.bf16.gmra.mrb[0].mxu0 %v2142
    %v3118 = vpop.f32.mrb[0].mxu0
    %v3119 = vadd.f32 %v293, %v3118
    %v3120 = vpop.f32.mrb[0].mxu0
    %v3121 = vadd.f32 %v297, %v3120
    %v3122 = vpop.f32.mrb[0].mxu0
    %v3123 = vadd.f32 %v293, %v3122
    %v3124 = vpop.f32.mrb[0].mxu0
    %v3125 = vadd.f32 %v297, %v3124
    %3126 = vmatprep.mubr.bf16.mxu0 %v2147
    %3127 = vmatmul.mubr.bf16.gmra.mrb[0].mxu0 %v2146
    %v3128 = vpop.f32.mrb[0].mxu0
    %v3129 = vadd.f32 %v293, %v3128
    %v3130 = vpop.f32.mrb[0].mxu0
    %v3131 = vadd.f32 %v297, %v3130
    %v3132 = vpop.f32.mrb[0].mxu0
    %v3133 = vadd.f32 %v293, %v3132
    %v3134 = vpop.f32.mrb[0].mxu0
    %v3135 = vadd.f32 %v297, %v3134
    %3136 = vdwg.mxu0
    %3137 = vmatprep.subr.bf16.mxu0 %v2729
    %3138 = vmatpush1.bf16.msra.mxu0 %v2728
    %3139 = vmatprep.subr.bf16.mxu0 %v2733
    %3140 = vmatpush1.bf16.msra.mxu0 %v2732
    %3141 = vmatprep.subr.bf16.mxu0 %v2737
    %3142 = vmatpush1.bf16.msra.mxu0 %v2736
    %3143 = vmatprep.subr.bf16.mxu0 %v2741
    %3144 = vmatpush1.bf16.msra.mxu0 %v2740
    %3145 = vmatprep.subr.bf16.mxu0 %v2745
    %3146 = vmatpush1.bf16.msra.mxu0 %v2744
    %3147 = vmatprep.subr.bf16.mxu0 %v2749
    %3148 = vmatpush1.bf16.msra.mxu0 %v2748
    %3149 = vmatprep.subr.bf16.mxu0 %v2753
    %3150 = vmatpush1.bf16.msra.mxu0 %v2752
    %3151 = vmatprep.subr.bf16.mxu0 %v2757
    %3152 = vmatpush1.bf16.msra.mxu0 %v2756
    %3153 = vmatprep.subr.bf16.mxu0 %v2761
    %3154 = vmatpush1.bf16.msra.mxu0 %v2760
    %3155 = vmatprep.subr.bf16.mxu0 %v2765
    %3156 = vmatpush1.bf16.msra.mxu0 %v2764
    %3157 = vmatprep.subr.bf16.mxu0 %v2769
    %3158 = vmatpush1.bf16.msra.mxu0 %v2768
    %3159 = vmatprep.subr.bf16.mxu0 %v2773
    %3160 = vmatpush1.bf16.msra.mxu0 %v2772
    %3161 = vmatprep.subr.bf16.mxu0 %v2777
    %3162 = vmatpush1.bf16.msra.mxu0 %v2776
    %3163 = vmatprep.subr.bf16.mxu0 %v2781
    %3164 = vmatpush1.bf16.msra.mxu0 %v2780
    %3165 = vmatprep.subr.bf16.mxu0 %v2785
    %3166 = vmatpush1.bf16.msra.mxu0 %v2784
    %3167 = vmatprep.subr.bf16.mxu0 %v2789
    %3168 = vmatpush1.bf16.msra.mxu0 %v2788
    %3169 = vmatprep.mubr.bf16.mxu0 %v2137
    %3170 = vmatmul.mubr.bf16.gmra.mrb[0].mxu0 %v2136
    %v3171 = vpop.f32.mrb[0].mxu0
    %v3172 = vadd.f32 %v3099, %v3171
    %v3173 = vpop.f32.mrb[0].mxu0
    %v3174 = vadd.f32 %v3101, %v3173
    %v3175 = vpop.f32.mrb[0].mxu0
    %v3176 = vadd.f32 %v3103, %v3175
    %v3177 = vpop.f32.mrb[0].mxu0
    %v3178 = vadd.f32 %v3105, %v3177
    %3179 = vmatprep.mubr.bf16.mxu0 %v2141
    %3180 = vmatmul.mubr.bf16.gmra.mrb[0].mxu0 %v2140
    %v3181 = vpop.f32.mrb[0].mxu0
    %v3182 = vadd.f32 %v3109, %v3181
    %v3183 = vpop.f32.mrb[0].mxu0
    %v3184 = vadd.f32 %v3111, %v3183
    %v3185 = vpop.f32.mrb[0].mxu0
    %v3186 = vadd.f32 %v3113, %v3185
    %v3187 = vpop.f32.mrb[0].mxu0
    %v3188 = vadd.f32 %v3115, %v3187
    %3189 = vmatprep.mubr.bf16.mxu0 %v2145
    %3190 = vmatmul.mubr.bf16.gmra.mrb[0].mxu0 %v2144
    %v3191 = vpop.f32.mrb[0].mxu0
    %v3192 = vadd.f32 %v3119, %v3191
    %v3193 = vpop.f32.mrb[0].mxu0
    %v3194 = vadd.f32 %v3121, %v3193
    %v3195 = vpop.f32.mrb[0].mxu0
    %v3196 = vadd.f32 %v3123, %v3195
    %v3197 = vpop.f32.mrb[0].mxu0
    %v3198 = vadd.f32 %v3125, %v3197
    %3199 = vmatprep.mubr.bf16.mxu0 %v2149
    %3200 = vmatmul.mubr.bf16.gmra.mrb[0].mxu0 %v2148
    %v3201 = vpop.f32.mrb[0].mxu0
    %v3202 = vadd.f32 %v3129, %v3201
    %v3203 = vpop.f32.mrb[0].mxu0
    %v3204 = vadd.f32 %v3131, %v3203
    %v3205 = vpop.f32.mrb[0].mxu0
    %v3206 = vadd.f32 %v3133, %v3205
    %v3207 = vpop.f32.mrb[0].mxu0
    %v3208 = vadd.f32 %v3135, %v3207
    %3209 = vdwg.mxu0
    %v3210 = vmax.f32 %v3026, 0.0
    %v3211 = vmax.f32 %v3028, 0.0
    %v3212 = vmax.f32 %v3172, 0.0
    %v3213 = vmax.f32 %v3174, 0.0
    %v3214 = vmax.f32 %v3030, 0.0
    %v3215 = vmax.f32 %v3032, 0.0
    %v3216 = vmax.f32 %v3176, 0.0
    %v3217 = vmax.f32 %v3178, 0.0
    %v3218 = vmax.f32 %v3036, 0.0
    %v3219 = vmax.f32 %v3038, 0.0
    %v3220 = vmax.f32 %v3182, 0.0
    %v3221 = vmax.f32 %v3184, 0.0
    %v3222 = vmax.f32 %v3040, 0.0
    %v3223 = vmax.f32 %v3042, 0.0
    %v3224 = vmax.f32 %v3186, 0.0
    %v3225 = vmax.f32 %v3188, 0.0
    %v3226 = vmax.f32 %v3046, 0.0
    %v3227 = vmax.f32 %v3048, 0.0
    %v3228 = vmax.f32 %v3192, 0.0
    %v3229 = vmax.f32 %v3194, 0.0
    %v3230 = vmax.f32 %v3050, 0.0
    %v3231 = vmax.f32 %v3052, 0.0
    %v3232 = vmax.f32 %v3196, 0.0
    %v3233 = vmax.f32 %v3198, 0.0
    %v3234 = vmax.f32 %v3056, 0.0
    %v3235 = vmax.f32 %v3058, 0.0
    %v3236 = vmax.f32 %v3202, 0.0
    %v3237 = vmax.f32 %v3204, 0.0
    %v3238 = vmax.f32 %v3060, 0.0
    %v3239 = vmax.f32 %v3062, 0.0
    %v3240 = vmax.f32 %v3206, 0.0
    %v3241 = vmax.f32 %v3208, 0.0
    %v3242 = vpack.c.bf16 %v3214, %v3210
    %v3243 = vpack.c.bf16 %v3215, %v3211
    %v3244 = vpack.c.bf16 %v3216, %v3212
    %v3245 = vpack.c.bf16 %v3217, %v3213
    %v3246 = vpack.c.bf16 %v3222, %v3218
    %v3247 = vpack.c.bf16 %v3223, %v3219
    %v3248 = vpack.c.bf16 %v3224, %v3220
    %v3249 = vpack.c.bf16 %v3225, %v3221
    %v3250 = vpack.c.bf16 %v3230, %v3226
    %v3251 = vpack.c.bf16 %v3231, %v3227
    %v3252 = vpack.c.bf16 %v3232, %v3228
    %v3253 = vpack.c.bf16 %v3233, %v3229
    %v3254 = vpack.c.bf16 %v3238, %v3234
    %v3255 = vpack.c.bf16 %v3239, %v3235
    %v3256 = vpack.c.bf16 %v3240, %v3236
    %v3257 = vpack.c.bf16 %v3241, %v3237
    %v3258 = vld [vmem:[#allocation8] sm:$0xff]
    %v3259 = vld [vmem:[#allocation8 + $0x8] sm:$0xff]
    %v3260 = vld [vmem:[#allocation8 + $0x10] sm:$0xff]
    %v3261 = vld [vmem:[#allocation8 + $0x18] sm:$0xff]
    %v3262 = vld [vmem:[#allocation8 + $0x20] sm:$0xff]
    %v3263 = vld [vmem:[#allocation8 + $0x28] sm:$0xff]
    %v3264 = vld [vmem:[#allocation8 + $0x30] sm:$0xff]
    %v3265 = vld [vmem:[#allocation8 + $0x38] sm:$0xff]
    %v3266 = vld [vmem:[#allocation8 + $0x40] sm:$0xff]
    %v3267 = vld [vmem:[#allocation8 + $0x48] sm:$0xff]
    %v3268 = vld [vmem:[#allocation8 + $0x50] sm:$0xff]
    %v3269 = vld [vmem:[#allocation8 + $0x58] sm:$0xff]
    %v3270 = vld [vmem:[#allocation8 + $0x60] sm:$0xff]
    %v3271 = vld [vmem:[#allocation8 + $0x68] sm:$0xff]
    %v3272 = vld [vmem:[#allocation8 + $0x70] sm:$0xff]
    %v3273 = vld [vmem:[#allocation8 + $0x78] sm:$0xff]
    %v3274 = vld [vmem:[#allocation8 + $0x80] sm:$0xff]
    %v3275 = vld [vmem:[#allocation8 + $0x88] sm:$0xff]
    %v3276 = vld [vmem:[#allocation8 + $0x90] sm:$0xff]
    %v3277 = vld [vmem:[#allocation8 + $0x98] sm:$0xff]
    %v3278 = vld [vmem:[#allocation8 + $0xa0] sm:$0xff]
    %v3279 = vld [vmem:[#allocation8 + $0xa8] sm:$0xff]
    %v3280 = vld [vmem:[#allocation8 + $0xb0] sm:$0xff]
    %v3281 = vld [vmem:[#allocation8 + $0xb8] sm:$0xff]
    %v3282 = vld [vmem:[#allocation8 + $0xc0] sm:$0xff]
    %v3283 = vld [vmem:[#allocation8 + $0xc8] sm:$0xff]
    %v3284 = vld [vmem:[#allocation8 + $0xd0] sm:$0xff]
    %v3285 = vld [vmem:[#allocation8 + $0xd8] sm:$0xff]
    %v3286 = vld [vmem:[#allocation8 + $0xe0] sm:$0xff]
    %v3287 = vld [vmem:[#allocation8 + $0xe8] sm:$0xff]
    %v3288 = vld [vmem:[#allocation8 + $0xf0] sm:$0xff]
    %v3289 = vld [vmem:[#allocation8 + $0xf8] sm:$0xff]
    %v3290 = vld [vmem:[#allocation8 + $0x100] sm:$0xff]
    %v3291 = vld [vmem:[#allocation8 + $0x108] sm:$0xff]
    %v3292 = vld [vmem:[#allocation8 + $0x110] sm:$0xff]
    %v3293 = vld [vmem:[#allocation8 + $0x118] sm:$0xff]
    %v3294 = vld [vmem:[#allocation8 + $0x120] sm:$0xff]
    %v3295 = vld [vmem:[#allocation8 + $0x128] sm:$0xff]
    %v3296 = vld [vmem:[#allocation8 + $0x130] sm:$0xff]
    %v3297 = vld [vmem:[#allocation8 + $0x138] sm:$0xff]
    %v3298 = vld [vmem:[#allocation8 + $0x140] sm:$0xff]
    %v3299 = vld [vmem:[#allocation8 + $0x148] sm:$0xff]
    %v3300 = vld [vmem:[#allocation8 + $0x150] sm:$0xff]
    %v3301 = vld [vmem:[#allocation8 + $0x158] sm:$0xff]
    %v3302 = vld [vmem:[#allocation8 + $0x160] sm:$0xff]
    %v3303 = vld [vmem:[#allocation8 + $0x168] sm:$0xff]
    %v3304 = vld [vmem:[#allocation8 + $0x170] sm:$0xff]
    %v3305 = vld [vmem:[#allocation8 + $0x178] sm:$0xff]
    %v3306 = vld [vmem:[#allocation8 + $0x180] sm:$0xff]
    %v3307 = vld [vmem:[#allocation8 + $0x188] sm:$0xff]
    %v3308 = vld [vmem:[#allocation8 + $0x190] sm:$0xff]
    %v3309 = vld [vmem:[#allocation8 + $0x198] sm:$0xff]
    %v3310 = vld [vmem:[#allocation8 + $0x1a0] sm:$0xff]
    %v3311 = vld [vmem:[#allocation8 + $0x1a8] sm:$0xff]
    %v3312 = vld [vmem:[#allocation8 + $0x1b0] sm:$0xff]
    %v3313 = vld [vmem:[#allocation8 + $0x1b8] sm:$0xff]
    %v3314 = vld [vmem:[#allocation8 + $0x1c0] sm:$0xff]
    %v3315 = vld [vmem:[#allocation8 + $0x1c8] sm:$0xff]
    %v3316 = vld [vmem:[#allocation8 + $0x1d0] sm:$0xff]
    %v3317 = vld [vmem:[#allocation8 + $0x1d8] sm:$0xff]
    %v3318 = vld [vmem:[#allocation8 + $0x1e0] sm:$0xff]
    %v3319 = vld [vmem:[#allocation8 + $0x1e8] sm:$0xff]
    %v3320 = vld [vmem:[#allocation8 + $0x1f0] sm:$0xff]
    %v3321 = vld [vmem:[#allocation8 + $0x1f8] sm:$0xff]
    %v3386 = vunpack.c.l.b16 %v3258
    %v3387 = vunpack.c.h.b16 %v3258
    %v3388 = vunpack.c.l.b16 %v3259
    %v3389 = vunpack.c.h.b16 %v3259
    %v3390 = vunpack.c.l.b16 %v3260
    %v3391 = vunpack.c.h.b16 %v3260
    %v3392 = vunpack.c.l.b16 %v3261
    %v3393 = vunpack.c.h.b16 %v3261
    %v3394 = vunpack.c.l.b16 %v3262
    %v3395 = vunpack.c.h.b16 %v3262
    %v3396 = vunpack.c.l.b16 %v3263
    %v3397 = vunpack.c.h.b16 %v3263
    %v3398 = vunpack.c.l.b16 %v3264
    %v3399 = vunpack.c.h.b16 %v3264
    %v3400 = vunpack.c.l.b16 %v3265
    %v3401 = vunpack.c.h.b16 %v3265
    %v3402 = vunpack.c.l.b16 %v3266
    %v3403 = vunpack.c.h.b16 %v3266
    %v3404 = vunpack.c.l.b16 %v3267
    %v3405 = vunpack.c.h.b16 %v3267
    %v3406 = vunpack.c.l.b16 %v3268
    %v3407 = vunpack.c.h.b16 %v3268
    %v3408 = vunpack.c.l.b16 %v3269
    %v3409 = vunpack.c.h.b16 %v3269
    %v3410 = vunpack.c.l.b16 %v3270
    %v3411 = vunpack.c.h.b16 %v3270
    %v3412 = vunpack.c.l.b16 %v3271
    %v3413 = vunpack.c.h.b16 %v3271
    %v3414 = vunpack.c.l.b16 %v3272
    %v3415 = vunpack.c.h.b16 %v3272
    %v3416 = vunpack.c.l.b16 %v3273
    %v3417 = vunpack.c.h.b16 %v3273
    %v3418 = vunpack.c.l.b16 %v3274
    %v3419 = vunpack.c.h.b16 %v3274
    %v3420 = vunpack.c.l.b16 %v3275
    %v3421 = vunpack.c.h.b16 %v3275
    %v3422 = vunpack.c.l.b16 %v3276
    %v3423 = vunpack.c.h.b16 %v3276
    %v3424 = vunpack.c.l.b16 %v3277
    %v3425 = vunpack.c.h.b16 %v3277
    %v3426 = vunpack.c.l.b16 %v3278
    %v3427 = vunpack.c.h.b16 %v3278
    %v3428 = vunpack.c.l.b16 %v3279
    %v3429 = vunpack.c.h.b16 %v3279
    %v3430 = vunpack.c.l.b16 %v3280
    %v3431 = vunpack.c.h.b16 %v3280
    %v3432 = vunpack.c.l.b16 %v3281
    %v3433 = vunpack.c.h.b16 %v3281
    %v3434 = vunpack.c.l.b16 %v3282
    %v3435 = vunpack.c.h.b16 %v3282
    %v3436 = vunpack.c.l.b16 %v3283
    %v3437 = vunpack.c.h.b16 %v3283
    %v3438 = vunpack.c.l.b16 %v3284
    %v3439 = vunpack.c.h.b16 %v3284
    %v3440 = vunpack.c.l.b16 %v3285
    %v3441 = vunpack.c.h.b16 %v3285
    %v3442 = vunpack.c.l.b16 %v3286
    %v3443 = vunpack.c.h.b16 %v3286
    %v3444 = vunpack.c.l.b16 %v3287
    %v3445 = vunpack.c.h.b16 %v3287
    %v3446 = vunpack.c.l.b16 %v3288
    %v3447 = vunpack.c.h.b16 %v3288
    %v3448 = vunpack.c.l.b16 %v3289
    %v3449 = vunpack.c.h.b16 %v3289
    %v3450 = vunpack.c.l.b16 %v3290
    %v3451 = vunpack.c.h.b16 %v3290
    %v3452 = vunpack.c.l.b16 %v3291
    %v3453 = vunpack.c.h.b16 %v3291
    %v3454 = vunpack.c.l.b16 %v3292
    %v3455 = vunpack.c.h.b16 %v3292
    %v3456 = vunpack.c.l.b16 %v3293
    %v3457 = vunpack.c.h.b16 %v3293
    %v3458 = vunpack.c.l.b16 %v3294
    %v3459 = vunpack.c.h.b16 %v3294
    %v3460 = vunpack.c.l.b16 %v3295
    %v3461 = vunpack.c.h.b16 %v3295
    %v3462 = vunpack.c.l.b16 %v3296
    %v3463 = vunpack.c.h.b16 %v3296
    %v3464 = vunpack.c.l.b16 %v3297
    %v3465 = vunpack.c.h.b16 %v3297
    %v3466 = vunpack.c.l.b16 %v3298
    %v3467 = vunpack.c.h.b16 %v3298
    %v3468 = vunpack.c.l.b16 %v3299
    %v3469 = vunpack.c.h.b16 %v3299
    %v3470 = vunpack.c.l.b16 %v3300
    %v3471 = vunpack.c.h.b16 %v3300
    %v3472 = vunpack.c.l.b16 %v3301
    %v3473 = vunpack.c.h.b16 %v3301
    %v3474 = vunpack.c.l.b16 %v3302
    %v3475 = vunpack.c.h.b16 %v3302
    %v3476 = vunpack.c.l.b16 %v3303
    %v3477 = vunpack.c.h.b16 %v3303
    %v3478 = vunpack.c.l.b16 %v3304
    %v3479 = vunpack.c.h.b16 %v3304
    %v3480 = vunpack.c.l.b16 %v3305
    %v3481 = vunpack.c.h.b16 %v3305
    %v3482 = vunpack.c.l.b16 %v3306
    %v3483 = vunpack.c.h.b16 %v3306
    %v3484 = vunpack.c.l.b16 %v3307
    %v3485 = vunpack.c.h.b16 %v3307
    %v3486 = vunpack.c.l.b16 %v3308
    %v3487 = vunpack.c.h.b16 %v3308
    %v3488 = vunpack.c.l.b16 %v3309
    %v3489 = vunpack.c.h.b16 %v3309
    %v3490 = vunpack.c.l.b16 %v3310
    %v3491 = vunpack.c.h.b16 %v3310
    %v3492 = vunpack.c.l.b16 %v3311
    %v3493 = vunpack.c.h.b16 %v3311
    %v3494 = vunpack.c.l.b16 %v3312
    %v3495 = vunpack.c.h.b16 %v3312
    %v3496 = vunpack.c.l.b16 %v3313
    %v3497 = vunpack.c.h.b16 %v3313
    %v3498 = vunpack.c.l.b16 %v3314
    %v3499 = vunpack.c.h.b16 %v3314
    %v3500 = vunpack.c.l.b16 %v3315
    %v3501 = vunpack.c.h.b16 %v3315
    %v3502 = vunpack.c.l.b16 %v3316
    %v3503 = vunpack.c.h.b16 %v3316
    %v3504 = vunpack.c.l.b16 %v3317
    %v3505 = vunpack.c.h.b16 %v3317
    %v3506 = vunpack.c.l.b16 %v3318
    %v3507 = vunpack.c.h.b16 %v3318
    %v3508 = vunpack.c.l.b16 %v3319
    %v3509 = vunpack.c.h.b16 %v3319
    %v3510 = vunpack.c.l.b16 %v3320
    %v3511 = vunpack.c.h.b16 %v3320
    %v3512 = vunpack.c.l.b16 %v3321
    %v3513 = vunpack.c.h.b16 %v3321
    %v3514 = vpack.c.b16 %v3388, %v3386
    %v3515 = vpack.c.b16 %v3389, %v3387
    %v3516 = vpack.c.b16 %v3392, %v3390
    %v3517 = vpack.c.b16 %v3393, %v3391
    %v3518 = vpack.c.b16 %v3396, %v3394
    %v3519 = vpack.c.b16 %v3397, %v3395
    %v3520 = vpack.c.b16 %v3400, %v3398
    %v3521 = vpack.c.b16 %v3401, %v3399
    %v3522 = vpack.c.b16 %v3404, %v3402
    %v3523 = vpack.c.b16 %v3405, %v3403
    %v3524 = vpack.c.b16 %v3408, %v3406
    %v3525 = vpack.c.b16 %v3409, %v3407
    %v3526 = vpack.c.b16 %v3412, %v3410
    %v3527 = vpack.c.b16 %v3413, %v3411
    %v3528 = vpack.c.b16 %v3416, %v3414
    %v3529 = vpack.c.b16 %v3417, %v3415
    %v3530 = vpack.c.b16 %v3420, %v3418
    %v3531 = vpack.c.b16 %v3421, %v3419
    %v3532 = vpack.c.b16 %v3424, %v3422
    %v3533 = vpack.c.b16 %v3425, %v3423
    %v3534 = vpack.c.b16 %v3428, %v3426
    %v3535 = vpack.c.b16 %v3429, %v3427
    %v3536 = vpack.c.b16 %v3432, %v3430
    %v3537 = vpack.c.b16 %v3433, %v3431
    %v3538 = vpack.c.b16 %v3436, %v3434
    %v3539 = vpack.c.b16 %v3437, %v3435
    %v3540 = vpack.c.b16 %v3440, %v3438
    %v3541 = vpack.c.b16 %v3441, %v3439
    %v3542 = vpack.c.b16 %v3444, %v3442
    %v3543 = vpack.c.b16 %v3445, %v3443
    %v3544 = vpack.c.b16 %v3448, %v3446
    %v3545 = vpack.c.b16 %v3449, %v3447
    %v3546 = vpack.c.b16 %v3452, %v3450
    %v3547 = vpack.c.b16 %v3453, %v3451
    %v3548 = vpack.c.b16 %v3456, %v3454
    %v3549 = vpack.c.b16 %v3457, %v3455
    %v3550 = vpack.c.b16 %v3460, %v3458
    %v3551 = vpack.c.b16 %v3461, %v3459
    %v3552 = vpack.c.b16 %v3464, %v3462
    %v3553 = vpack.c.b16 %v3465, %v3463
    %v3554 = vpack.c.b16 %v3468, %v3466
    %v3555 = vpack.c.b16 %v3469, %v3467
    %v3556 = vpack.c.b16 %v3472, %v3470
    %v3557 = vpack.c.b16 %v3473, %v3471
    %v3558 = vpack.c.b16 %v3476, %v3474
    %v3559 = vpack.c.b16 %v3477, %v3475
    %v3560 = vpack.c.b16 %v3480, %v3478
    %v3561 = vpack.c.b16 %v3481, %v3479
    %v3562 = vpack.c.b16 %v3484, %v3482
    %v3563 = vpack.c.b16 %v3485, %v3483
    %v3564 = vpack.c.b16 %v3488, %v3486
    %v3565 = vpack.c.b16 %v3489, %v3487
    %v3566 = vpack.c.b16 %v3492, %v3490
    %v3567 = vpack.c.b16 %v3493, %v3491
    %v3568 = vpack.c.b16 %v3496, %v3494
    %v3569 = vpack.c.b16 %v3497, %v3495
    %v3570 = vpack.c.b16 %v3500, %v3498
    %v3571 = vpack.c.b16 %v3501, %v3499
    %v3572 = vpack.c.b16 %v3504, %v3502
    %v3573 = vpack.c.b16 %v3505, %v3503
    %v3574 = vpack.c.b16 %v3508, %v3506
    %v3575 = vpack.c.b16 %v3509, %v3507
    %v3576 = vpack.c.b16 %v3512, %v3510
    %v3577 = vpack.c.b16 %v3513, %v3511
    %3642 = vmatprep.subr.bf16.mxu0 %v3515
    %3643 = vmatpush1.bf16.msra.mxu0 %v3514
    %3644 = vmatprep.subr.bf16.mxu0 %v3517
    %3645 = vmatpush1.bf16.msra.mxu0 %v3516
    %3646 = vmatprep.subr.bf16.mxu0 %v3519
    %3647 = vmatpush1.bf16.msra.mxu0 %v3518
    %3648 = vmatprep.subr.bf16.mxu0 %v3521
    %3649 = vmatpush1.bf16.msra.mxu0 %v3520
    %3650 = vmatprep.subr.bf16.mxu0 %v3523
    %3651 = vmatpush1.bf16.msra.mxu0 %v3522
    %3652 = vmatprep.subr.bf16.mxu0 %v3525
    %3653 = vmatpush1.bf16.msra.mxu0 %v3524
    %3654 = vmatprep.subr.bf16.mxu0 %v3527
    %3655 = vmatpush1.bf16.msra.mxu0 %v3526
    %3656 = vmatprep.subr.bf16.mxu0 %v3529
    %3657 = vmatpush1.bf16.msra.mxu0 %v3528
    %3658 = vmatprep.subr.bf16.mxu0 %v3531
    %3659 = vmatpush1.bf16.msra.mxu0 %v3530
    %3660 = vmatprep.subr.bf16.mxu0 %v3533
    %3661 = vmatpush1.bf16.msra.mxu0 %v3532
    %3662 = vmatprep.subr.bf16.mxu0 %v3535
    %3663 = vmatpush1.bf16.msra.mxu0 %v3534
    %3664 = vmatprep.subr.bf16.mxu0 %v3537
    %3665 = vmatpush1.bf16.msra.mxu0 %v3536
    %3666 = vmatprep.subr.bf16.mxu0 %v3539
    %3667 = vmatpush1.bf16.msra.mxu0 %v3538
    %3668 = vmatprep.subr.bf16.mxu0 %v3541
    %3669 = vmatpush1.bf16.msra.mxu0 %v3540
    %3670 = vmatprep.subr.bf16.mxu0 %v3543
    %3671 = vmatpush1.bf16.msra.mxu0 %v3542
    %3672 = vmatprep.subr.bf16.mxu0 %v3545
    %3673 = vmatpush1.bf16.msra.mxu0 %v3544
    %3674 = vmatprep.mubr.bf16.mxu0 %v3243
    %3675 = vmatmul.mubr.bf16.gmra.mrb[0].mxu0 %v3242
    %v3676 = vpop.f32.mrb[0].mxu0
    %v3677 = vadd.f32 %v1350, %v3676
    %v3678 = vpop.f32.mrb[0].mxu0
    %v3679 = vadd.f32 %v1354, %v3678
    %v3680 = vpop.f32.mrb[0].mxu0
    %v3681 = vadd.f32 %v1350, %v3680
    %v3682 = vpop.f32.mrb[0].mxu0
    %v3683 = vadd.f32 %v1354, %v3682
    %3684 = vmatprep.mubr.bf16.mxu0 %v3247
    %3685 = vmatmul.mubr.bf16.gmra.mrb[0].mxu0 %v3246
    %v3686 = vpop.f32.mrb[0].mxu0
    %v3687 = vadd.f32 %v1350, %v3686
    %v3688 = vpop.f32.mrb[0].mxu0
    %v3689 = vadd.f32 %v1354, %v3688
    %v3690 = vpop.f32.mrb[0].mxu0
    %v3691 = vadd.f32 %v1350, %v3690
    %v3692 = vpop.f32.mrb[0].mxu0
    %v3693 = vadd.f32 %v1354, %v3692
    %3694 = vmatprep.mubr.bf16.mxu0 %v3251
    %3695 = vmatmul.mubr.bf16.gmra.mrb[0].mxu0 %v3250
    %v3696 = vpop.f32.mrb[0].mxu0
    %v3697 = vadd.f32 %v1350, %v3696
    %v3698 = vpop.f32.mrb[0].mxu0
    %v3699 = vadd.f32 %v1354, %v3698
    %v3700 = vpop.f32.mrb[0].mxu0
    %v3701 = vadd.f32 %v1350, %v3700
    %v3702 = vpop.f32.mrb[0].mxu0
    %v3703 = vadd.f32 %v1354, %v3702
    %3704 = vmatprep.mubr.bf16.mxu0 %v3255
    %3705 = vmatmul.mubr.bf16.gmra.mrb[0].mxu0 %v3254
    %v3706 = vpop.f32.mrb[0].mxu0
    %v3707 = vadd.f32 %v1350, %v3706
    %v3708 = vpop.f32.mrb[0].mxu0
    %v3709 = vadd.f32 %v1354, %v3708
    %v3710 = vpop.f32.mrb[0].mxu0
    %v3711 = vadd.f32 %v1350, %v3710
    %v3712 = vpop.f32.mrb[0].mxu0
    %v3713 = vadd.f32 %v1354, %v3712
    %3714 = vdwg.mxu0
    %3715 = vmatprep.subr.bf16.mxu0 %v3547
    %3716 = vmatpush1.bf16.msra.mxu0 %v3546
    %3717 = vmatprep.subr.bf16.mxu0 %v3549
    %3718 = vmatpush1.bf16.msra.mxu0 %v3548
    %3719 = vmatprep.subr.bf16.mxu0 %v3551
    %3720 = vmatpush1.bf16.msra.mxu0 %v3550
    %3721 = vmatprep.subr.bf16.mxu0 %v3553
    %3722 = vmatpush1.bf16.msra.mxu0 %v3552
    %3723 = vmatprep.subr.bf16.mxu0 %v3555
    %3724 = vmatpush1.bf16.msra.mxu0 %v3554
    %3725 = vmatprep.subr.bf16.mxu0 %v3557
    %3726 = vmatpush1.bf16.msra.mxu0 %v3556
    %3727 = vmatprep.subr.bf16.mxu0 %v3559
    %3728 = vmatpush1.bf16.msra.mxu0 %v3558
    %3729 = vmatprep.subr.bf16.mxu0 %v3561
    %3730 = vmatpush1.bf16.msra.mxu0 %v3560
    %3731 = vmatprep.subr.bf16.mxu0 %v3563
    %3732 = vmatpush1.bf16.msra.mxu0 %v3562
    %3733 = vmatprep.subr.bf16.mxu0 %v3565
    %3734 = vmatpush1.bf16.msra.mxu0 %v3564
    %3735 = vmatprep.subr.bf16.mxu0 %v3567
    %3736 = vmatpush1.bf16.msra.mxu0 %v3566
    %3737 = vmatprep.subr.bf16.mxu0 %v3569
    %3738 = vmatpush1.bf16.msra.mxu0 %v3568
    %3739 = vmatprep.subr.bf16.mxu0 %v3571
    %3740 = vmatpush1.bf16.msra.mxu0 %v3570
    %3741 = vmatprep.subr.bf16.mxu0 %v3573
    %3742 = vmatpush1.bf16.msra.mxu0 %v3572
    %3743 = vmatprep.subr.bf16.mxu0 %v3575
    %3744 = vmatpush1.bf16.msra.mxu0 %v3574
    %3745 = vmatprep.subr.bf16.mxu0 %v3577
    %3746 = vmatpush1.bf16.msra.mxu0 %v3576
    %3747 = vmatprep.mubr.bf16.mxu0 %v3245
    %3748 = vmatmul.mubr.bf16.gmra.mrb[0].mxu0 %v3244
    %v3749 = vpop.f32.mrb[0].mxu0
    %v3750 = vadd.f32 %v3677, %v3749
    %v3751 = vpop.f32.mrb[0].mxu0
    %v3752 = vadd.f32 %v3679, %v3751
    %v3753 = vpop.f32.mrb[0].mxu0
    %v3754 = vadd.f32 %v3681, %v3753
    %v3755 = vpop.f32.mrb[0].mxu0
    %v3756 = vadd.f32 %v3683, %v3755
    %3757 = vmatprep.mubr.bf16.mxu0 %v3249
    %3758 = vmatmul.mubr.bf16.gmra.mrb[0].mxu0 %v3248
    %v3759 = vpop.f32.mrb[0].mxu0
    %v3760 = vadd.f32 %v3687, %v3759
    %v3761 = vpop.f32.mrb[0].mxu0
    %v3762 = vadd.f32 %v3689, %v3761
    %v3763 = vpop.f32.mrb[0].mxu0
    %v3764 = vadd.f32 %v3691, %v3763
    %v3765 = vpop.f32.mrb[0].mxu0
    %v3766 = vadd.f32 %v3693, %v3765
    %3767 = vmatprep.mubr.bf16.mxu0 %v3253
    %3768 = vmatmul.mubr.bf16.gmra.mrb[0].mxu0 %v3252
    %v3769 = vpop.f32.mrb[0].mxu0
    %v3770 = vadd.f32 %v3697, %v3769
    %v3771 = vpop.f32.mrb[0].mxu0
    %v3772 = vadd.f32 %v3699, %v3771
    %v3773 = vpop.f32.mrb[0].mxu0
    %v3774 = vadd.f32 %v3701, %v3773
    %v3775 = vpop.f32.mrb[0].mxu0
    %v3776 = vadd.f32 %v3703, %v3775
    %3777 = vmatprep.mubr.bf16.mxu0 %v3257
    %3778 = vmatmul.mubr.bf16.gmra.mrb[0].mxu0 %v3256
    %v3779 = vpop.f32.mrb[0].mxu0
    %v3780 = vadd.f32 %v3707, %v3779
    %v3781 = vpop.f32.mrb[0].mxu0
    %v3782 = vadd.f32 %v3709, %v3781
    %v3783 = vpop.f32.mrb[0].mxu0
    %v3784 = vadd.f32 %v3711, %v3783
    %v3785 = vpop.f32.mrb[0].mxu0
    %v3786 = vadd.f32 %v3713, %v3785
    %3787 = vdwg.mxu0
    %v3788 = vmax.f32 %v3750, 0.0
    %v3789 = vmax.f32 %v3752, 0.0
    %v3790 = vmax.f32 %v3754, 0.0
    %v3791 = vmax.f32 %v3756, 0.0
    %v3792 = vmax.f32 %v3760, 0.0
    %v3793 = vmax.f32 %v3762, 0.0
    %v3794 = vmax.f32 %v3764, 0.0
    %v3795 = vmax.f32 %v3766, 0.0
    %v3796 = vmax.f32 %v3770, 0.0
    %v3797 = vmax.f32 %v3772, 0.0
    %v3798 = vmax.f32 %v3774, 0.0
    %v3799 = vmax.f32 %v3776, 0.0
    %v3800 = vmax.f32 %v3780, 0.0
    %v3801 = vmax.f32 %v3782, 0.0
    %v3802 = vmax.f32 %v3784, 0.0
    %v3803 = vmax.f32 %v3786, 0.0
    %v3804 = vpack.c.bf16 %v3790, %v3788
    %v3805 = vpack.c.bf16 %v3791, %v3789
    %v3806 = vpack.c.bf16 %v3794, %v3792
    %v3807 = vpack.c.bf16 %v3795, %v3793
    %v3808 = vpack.c.bf16 %v3798, %v3796
    %v3809 = vpack.c.bf16 %v3799, %v3797
    %v3810 = vpack.c.bf16 %v3802, %v3800
    %v3811 = vpack.c.bf16 %v3803, %v3801
    %v3812 = vld [vmem:[#allocation10] sm:$0xf]
    %v3813 = vld [vmem:[#allocation10 + $0x4] sm:$0xf]
    %v3814 = vld [vmem:[#allocation10 + $0x8] sm:$0xf]
    %v3815 = vld [vmem:[#allocation10 + $0xc] sm:$0xf]
    %v3816 = vld [vmem:[#allocation10 + $0x10] sm:$0xf]
    %v3817 = vld [vmem:[#allocation10 + $0x14] sm:$0xf]
    %v3818 = vld [vmem:[#allocation10 + $0x18] sm:$0xf]
    %v3819 = vld [vmem:[#allocation10 + $0x1c] sm:$0xf]
    %v3820 = vld [vmem:[#allocation10 + $0x20] sm:$0xf]
    %v3821 = vld [vmem:[#allocation10 + $0x24] sm:$0xf]
    %v3822 = vld [vmem:[#allocation10 + $0x28] sm:$0xf]
    %v3823 = vld [vmem:[#allocation10 + $0x2c] sm:$0xf]
    %v3824 = vld [vmem:[#allocation10 + $0x30] sm:$0xf]
    %v3825 = vld [vmem:[#allocation10 + $0x34] sm:$0xf]
    %v3826 = vld [vmem:[#allocation10 + $0x38] sm:$0xf]
    %v3827 = vld [vmem:[#allocation10 + $0x3c] sm:$0xf]
    %v3828 = vld [vmem:[#allocation10 + $0x40] sm:$0xf]
    %v3829 = vld [vmem:[#allocation10 + $0x44] sm:$0xf]
    %v3830 = vld [vmem:[#allocation10 + $0x48] sm:$0xf]
    %v3831 = vld [vmem:[#allocation10 + $0x4c] sm:$0xf]
    %v3832 = vld [vmem:[#allocation10 + $0x50] sm:$0xf]
    %v3833 = vld [vmem:[#allocation10 + $0x54] sm:$0xf]
    %v3834 = vld [vmem:[#allocation10 + $0x58] sm:$0xf]
    %v3835 = vld [vmem:[#allocation10 + $0x5c] sm:$0xf]
    %v3836 = vld [vmem:[#allocation10 + $0x60] sm:$0xf]
    %v3837 = vld [vmem:[#allocation10 + $0x64] sm:$0xf]
    %v3838 = vld [vmem:[#allocation10 + $0x68] sm:$0xf]
    %v3839 = vld [vmem:[#allocation10 + $0x6c] sm:$0xf]
    %v3840 = vld [vmem:[#allocation10 + $0x70] sm:$0xf]
    %v3841 = vld [vmem:[#allocation10 + $0x74] sm:$0xf]
    %v3842 = vld [vmem:[#allocation10 + $0x78] sm:$0xf]
    %v3843 = vld [vmem:[#allocation10 + $0x7c] sm:$0xf]
    %v3876 = vunpack.c.l.b16 %v3812
    %v3877 = vunpack.c.l.b16 %v3813
    %v3878 = vunpack.c.l.b16 %v3814
    %v3879 = vunpack.c.l.b16 %v3815
    %v3880 = vunpack.c.l.b16 %v3816
    %v3881 = vunpack.c.l.b16 %v3817
    %v3882 = vunpack.c.l.b16 %v3818
    %v3883 = vunpack.c.l.b16 %v3819
    %v3884 = vunpack.c.l.b16 %v3820
    %v3885 = vunpack.c.l.b16 %v3821
    %v3886 = vunpack.c.l.b16 %v3822
    %v3887 = vunpack.c.l.b16 %v3823
    %v3888 = vunpack.c.l.b16 %v3824
    %v3889 = vunpack.c.l.b16 %v3825
    %v3890 = vunpack.c.l.b16 %v3826
    %v3891 = vunpack.c.l.b16 %v3827
    %v3892 = vunpack.c.l.b16 %v3828
    %v3893 = vunpack.c.l.b16 %v3829
    %v3894 = vunpack.c.l.b16 %v3830
    %v3895 = vunpack.c.l.b16 %v3831
    %v3896 = vunpack.c.l.b16 %v3832
    %v3897 = vunpack.c.l.b16 %v3833
    %v3898 = vunpack.c.l.b16 %v3834
    %v3899 = vunpack.c.l.b16 %v3835
    %v3900 = vunpack.c.l.b16 %v3836
    %v3901 = vunpack.c.l.b16 %v3837
    %v3902 = vunpack.c.l.b16 %v3838
    %v3903 = vunpack.c.l.b16 %v3839
    %v3904 = vunpack.c.l.b16 %v3840
    %v3905 = vunpack.c.l.b16 %v3841
    %v3906 = vunpack.c.l.b16 %v3842
    %v3907 = vunpack.c.l.b16 %v3843
    %v3908 = vpack.c.b16 %v3877, %v3876
    %v3909 = vpack.c.b16 %v3879, %v3878
    %v3910 = vpack.c.b16 %v3881, %v3880
    %v3911 = vpack.c.b16 %v3883, %v3882
    %v3912 = vpack.c.b16 %v3885, %v3884
    %v3913 = vpack.c.b16 %v3887, %v3886
    %v3914 = vpack.c.b16 %v3889, %v3888
    %v3915 = vpack.c.b16 %v3891, %v3890
    %v3916 = vpack.c.b16 %v3893, %v3892
    %v3917 = vpack.c.b16 %v3895, %v3894
    %v3918 = vpack.c.b16 %v3897, %v3896
    %v3919 = vpack.c.b16 %v3899, %v3898
    %v3920 = vpack.c.b16 %v3901, %v3900
    %v3921 = vpack.c.b16 %v3903, %v3902
    %v3922 = vpack.c.b16 %v3905, %v3904
    %v3923 = vpack.c.b16 %v3907, %v3906
    %3940 = vmatprep.subr.bf16.mxu0 0
    %3941 = vmatpush1.bf16.msra.mxu0 %v3908
    %3942 = vmatprep.subr.bf16.mxu0 0
    %3943 = vmatpush1.bf16.msra.mxu0 %v3909
    %3944 = vmatprep.subr.bf16.mxu0 0
    %3945 = vmatpush1.bf16.msra.mxu0 %v3910
    %3946 = vmatprep.subr.bf16.mxu0 0
    %3947 = vmatpush1.bf16.msra.mxu0 %v3911
    %3948 = vmatprep.subr.bf16.mxu0 0
    %3949 = vmatpush1.bf16.msra.mxu0 %v3912
    %3950 = vmatprep.subr.bf16.mxu0 0
    %3951 = vmatpush1.bf16.msra.mxu0 %v3913
    %3952 = vmatprep.subr.bf16.mxu0 0
    %3953 = vmatpush1.bf16.msra.mxu0 %v3914
    %3954 = vmatprep.subr.bf16.mxu0 0
    %3955 = vmatpush1.bf16.msra.mxu0 %v3915
    %3956 = vmatprep.subr.bf16.mxu0 0
    %3957 = vmatpush1.bf16.msra.mxu0 %v3916
    %3958 = vmatprep.subr.bf16.mxu0 0
    %3959 = vmatpush1.bf16.msra.mxu0 %v3917
    %3960 = vmatprep.subr.bf16.mxu0 0
    %3961 = vmatpush1.bf16.msra.mxu0 %v3918
    %3962 = vmatprep.subr.bf16.mxu0 0
    %3963 = vmatpush1.bf16.msra.mxu0 %v3919
    %3964 = vmatprep.subr.bf16.mxu0 0
    %3965 = vmatpush1.bf16.msra.mxu0 %v3920
    %3966 = vmatprep.subr.bf16.mxu0 0
    %3967 = vmatpush1.bf16.msra.mxu0 %v3921
    %3968 = vmatprep.subr.bf16.mxu0 0
    %3969 = vmatpush1.bf16.msra.mxu0 %v3922
    %3970 = vmatprep.subr.bf16.mxu0 0
    %3971 = vmatpush1.bf16.msra.mxu0 %v3923
    %3972 = vmatprep.mubr.bf16.mxu0 %v3805
    %3973 = vmatmul.mubr.bf16.gmra.mrb[0].mxu0 %v3804
    %v3974 = vpop.f32.mrb[0].mxu0
    %v3975 = vadd.f32 %v1883, %v3974
    %v3976 = vpop.f32.mrb[0].mxu0
    %v3977 = vpop.f32.mrb[0].mxu0
    %v3978 = vadd.f32 %v1883, %v3977
    %v3979 = vpop.f32.mrb[0].mxu0
    %3980 = vmatprep.mubr.bf16.mxu0 %v3807
    %3981 = vmatmul.mubr.bf16.gmra.mrb[0].mxu0 %v3806
    %v3982 = vpop.f32.mrb[0].mxu0
    %v3983 = vadd.f32 %v1883, %v3982
    %v3984 = vpop.f32.mrb[0].mxu0
    %v3985 = vpop.f32.mrb[0].mxu0
    %v3986 = vadd.f32 %v1883, %v3985
    %v3987 = vpop.f32.mrb[0].mxu0
    %3988 = vmatprep.mubr.bf16.mxu0 %v3809
    %3989 = vmatmul.mubr.bf16.gmra.mrb[0].mxu0 %v3808
    %v3990 = vpop.f32.mrb[0].mxu0
    %v3991 = vadd.f32 %v1883, %v3990
    %v3992 = vpop.f32.mrb[0].mxu0
    %v3993 = vpop.f32.mrb[0].mxu0
    %v3994 = vadd.f32 %v1883, %v3993
    %v3995 = vpop.f32.mrb[0].mxu0
    %3996 = vmatprep.mubr.bf16.mxu0 %v3811
    %3997 = vmatmul.mubr.bf16.gmra.mrb[0].mxu0 %v3810
    %v3998 = vpop.f32.mrb[0].mxu0
    %v3999 = vadd.f32 %v1883, %v3998
    %v4000 = vpop.f32.mrb[0].mxu0
    %v4001 = vpop.f32.mrb[0].mxu0
    %v4002 = vadd.f32 %v1883, %v4001
    %v4003 = vpop.f32.mrb[0].mxu0
    %4004 = vdwg.mxu0
    %v4005 = vmul.f32 %v3975, %v3975
    %v4006 = vmul.f32 %v3978, %v3978
    %v4007 = vmul.f32 %v3983, %v3983
    %v4008 = vmul.f32 %v3986, %v3986
    %v4009 = vmul.f32 %v3991, %v3991
    %v4010 = vmul.f32 %v3994, %v3994
    %v4011 = vmul.f32 %v3999, %v3999
    %v4012 = vmul.f32 %v4002, %v4002
    %4013 = vadd.xlane.f32.xlu0 %v4005
    %v4014 = vpop.xlane.xlu0 %4013
    %4015 = vadd.xlane.f32.xlu0 %v4006
    %v4016 = vpop.xlane.xlu0 %4015
    %4017 = vadd.xlane.f32.xlu0 %v4007
    %v4018 = vpop.xlane.xlu0 %4017
    %4019 = vadd.xlane.f32.xlu0 %v4008
    %v4020 = vpop.xlane.xlu0 %4019
    %4021 = vadd.xlane.f32.xlu0 %v4009
    %v4022 = vpop.xlane.xlu0 %4021
    %4023 = vadd.xlane.f32.xlu0 %v4010
    %v4024 = vpop.xlane.xlu0 %4023
    %4025 = vadd.xlane.f32.xlu0 %v4011
    %v4026 = vpop.xlane.xlu0 %4025
    %4027 = vadd.xlane.f32.xlu0 %v4012
    %v4028 = vpop.xlane.xlu0 %4027
    %v4029 = vmax.f32 %v4014, 1e-24
    %v4030 = vmax.f32 %v4016, 1e-24
    %v4031 = vmax.f32 %v4018, 1e-24
    %v4032 = vmax.f32 %v4020, 1e-24
    %v4033 = vmax.f32 %v4022, 1e-24
    %v4034 = vmax.f32 %v4024, 1e-24
    %v4035 = vmax.f32 %v4026, 1e-24
    %v4036 = vmax.f32 %v4028, 1e-24
    %v4037 = vrsqrt.pop %v4029
    %v4038 = vrsqrt.pop %v4030
    %v4039 = vrsqrt.pop %v4031
    %v4040 = vrsqrt.pop %v4032
    %v4041 = vrsqrt.pop %v4033
    %v4042 = vrsqrt.pop %v4034
    %v4043 = vrsqrt.pop %v4035
    %v4044 = vrsqrt.pop %v4036
    %v4045 = vmul.f32 %v3975, %v4037
    %v4046 = vmul.f32 %v3978, %v4038
    %v4047 = vmul.f32 %v3983, %v4039
    %v4048 = vmul.f32 %v3986, %v4040
    %v4049 = vmul.f32 %v3991, %v4041
    %v4050 = vmul.f32 %v3994, %v4042
    %v4051 = vmul.f32 %v3999, %v4043
    %v4052 = vmul.f32 %v4002, %v4044
    %4053 = vst [vmem:[#allocation12] sm:$0xff] %v4045
    %4054 = vst [vmem:[#allocation12 + $0x8] sm:$0xff] %v4046
    %4055 = vst [vmem:[#allocation12 + $0x10] sm:$0xff] %v4047
    %4056 = vst [vmem:[#allocation12 + $0x18] sm:$0xff] %v4048
    %4057 = vst [vmem:[#allocation12 + $0x20] sm:$0xff] %v4049
    %4058 = vst [vmem:[#allocation12 + $0x28] sm:$0xff] %v4050
    %4059 = vst [vmem:[#allocation12 + $0x30] sm:$0xff] %v4051
    %4060 = vst [vmem:[#allocation12 + $0x38] sm:$0xff] %v4052
    // Predicated region
    $region54: #{tpu_custom_call.1} parent=1 // pred_check
      _
    $region55: #{tpu_custom_call.1} parent=1 // pred_check_branch
      %4062 = sbr.rel (0) target = $region57
    $region56: #{tpu_custom_call.1} parent=1 // pred_region
      %s4064 = ssub.s32 1024, 1024
      %4065 = vsyncadd [#allocation4], %s4064
      %s4066 = sshll.u32 [#allocation11], 4
      %s4067 = int_to_ptr.vmem [resolvable:$true] %s4066
      %4072 = dma.vmem_to_hbm [thread:$0]  %s4067, 1024, %s8, [#allocation4], 128, 128, 8
    $region57: #{tpu_custom_call.1} parent=1 // pred_fallthru
      _
    // Predicated region
    $region58: #{tpu_custom_call.1} parent=1 // pred_check
      _
    $region59: #{tpu_custom_call.1} parent=1 // pred_check_branch
      %4074 = sbr.rel (0) target = $region61
    $region60: #{tpu_custom_call.1} parent=1 // pred_region
      %s4076 = ssub.s32 1024, 1024
      %4077 = vsyncadd [#allocation13], %s4076
      %s4078 = sshll.u32 [#allocation12], 4
      %s4079 = int_to_ptr.vmem [resolvable:$true] %s4078
      %4084 = dma.vmem_to_hbm [thread:$0]  %s4079, 1024, %s9, [#allocation13], 128, 128, 8
    $region61: #{tpu_custom_call.1} parent=1 // pred_fallthru
      _
    // Predicated region
    $region62: #{tpu_custom_call.1} parent=1 // pred_check
      _
    $region63: #{tpu_custom_call.1} parent=1 // pred_check_branch
      %4086 = sbr.rel (0) target = $region65
    $region64: #{tpu_custom_call.1} parent=1 // pred_region
      %4087 = dma.done [#allocation4], 1024
    $region65: #{tpu_custom_call.1} parent=1 // pred_fallthru
      _
    // Predicated region
    $region66: #{tpu_custom_call.1} parent=1 // pred_check
      _
    $region67: #{tpu_custom_call.1} parent=1 // pred_check_branch
      %4089 = sbr.rel (0) target = $region69
    $region68: #{tpu_custom_call.1} parent=1 // pred_region
      %4090 = dma.done [#allocation13], 1024
    $region69: #{tpu_custom_call.1} parent=1 // pred_fallthru
      _
    %4091 = vsyncpa [#allocation3], 1
    %4092 = vsyncpa [#allocation6], 1
    %4093 = vsyncpa [#allocation9], 1
    %4094 = vsyncpa [#allocation4], 1
    %4095 = vsyncpa [#allocation13], 1

</llo_original>
